<compile_context>
chip_gen: v7x
topology: tpu7x:2x2x1
jax: 0.10.0
libtpu: 0.0.40
codegen_flags: <defaults>
</compile_context>

<pallas_src>
import functools

import jax
import jax.numpy as jnp
from jax.experimental import pallas as pl
from jax.experimental.pallas import tpu as pltpu


_VMEM = pl.BlockSpec(memory_space=pltpu.MemorySpace.VMEM)
_VMEM_LIMIT = 32 * 1024 * 1024
_PARAMS_NOGRID = pltpu.CompilerParams(vmem_limit_bytes=_VMEM_LIMIT)


# ----------------------------------------------------------------------------
# Pallas kernels (all FLOPs of the model run inside these)
# ----------------------------------------------------------------------------

def _matmul_bias_act_kernel(x_ref, w_ref, b_ref, o_ref, *, act):
    """y = act(x @ w + b).  x/w are bf16; accumulation and epilogue in f32."""
    y = jnp.dot(x_ref[...], w_ref[...], preferred_element_type=jnp.float32)
    y = y + b_ref[...]
    if act == "relu":
        y = jnp.maximum(y, 0.0)
    elif act == "sigmoid":
        y = 1.0 / (1.0 + jnp.exp(-y))   # exp on the EUP; exact divide keeps [0,1]
    o_ref[...] = y


def _matmul_bias_bn_relu_kernel(x_ref, w_ref, b_ref, g_ref, beta_ref, o_ref):
    """Conv-as-matmul + BatchNorm2d (training-mode batch stats) + ReLU.

    NOTE: this kernel must see ALL rows (B*H*W) of the layer at once -- do not
    tile the row dimension across a grid or the batch statistics become
    per-tile (review correctness concern).
    """
    y = jnp.dot(x_ref[...], w_ref[...], preferred_element_type=jnp.float32)
    y = y + b_ref[...]
    inv_m = 1.0 / y.shape[0]
    mean = jnp.sum(y, axis=0, keepdims=True) * inv_m
    var = jnp.sum(jnp.square(y - mean), axis=0, keepdims=True) * inv_m
    y = g_ref[...] * ((y - mean) * jax.lax.rsqrt(var + 1e-5)) + beta_ref[...]
    o_ref[...] = jnp.maximum(y, 0.0)


def _mid_kernel(cols3_ref, w3_ref, b3_ref,           # conv3 (rows ordered (g, b))
                w1_ref, b1_ref,                       # linear1 (rows regrouped (g, c))
                wmu_ref, bmu_ref, wsg_ref, bsg_ref,   # linear2 / linear3
                eps_ref,                              # N(0, 1) sample
                wd1_ref, bd1_ref, wd2_ref, bd2_ref,   # decoder linears
                o_ref,                                # [B, 288], (h, w, c) order
                y3_s,                                 # VMEM scratch [9*B, 32]
                *, batch, n_pos, c3):
    """conv3 + flatten + linear1 + (mu, sigma) + reparam + decoder linears."""
    # conv3 (stride-2 valid conv lowered to one matmul) + bias + ReLU
    y3 = jnp.dot(cols3_ref[...], w3_ref[...], preferred_element_type=jnp.float32)
    y3_s[...] = jnp.maximum(y3 + b3_ref[...], 0.0)

    # linear1 over the (c, h, w)-flattened conv3 output, evaluated as one small
    # matmul per spatial position (weight rows were permuted outside) so no
    # in-kernel transpose / reshape is needed.
    h1 = jnp.zeros((batch, w1_ref.shape[1]), jnp.float32)
    for g in range(n_pos):
        blk = y3_s[pl.ds(batch * g, batch), :].astype(jnp.bfloat16)
        wg = w1_ref[pl.ds(c3 * g, c3), :]
        h1 = h1 + jnp.dot(blk, wg, preferred_element_type=jnp.float32)
    h1 = jnp.maximum(h1 + b1_ref[...], 0.0)
    h1b = h1.astype(jnp.bfloat16)

    # reparameterisation: z = mu + exp(s) * eps
    mu = jnp.dot(h1b, wmu_ref[...], preferred_element_type=jnp.float32) + bmu_ref[...]
    s = jnp.dot(h1b, wsg_ref[...], preferred_element_type=jnp.float32) + bsg_ref[...]
    z = mu + jnp.exp(s) * eps_ref[...]

    # decoder linear stack (ReLU after both)
    d1 = jnp.dot(z.astype(jnp.bfloat16), wd1_ref[...],
                 preferred_element_type=jnp.float32) + bd1_ref[...]
    d1 = jnp.maximum(d1, 0.0)
    d2 = jnp.dot(d1.astype(jnp.bfloat16), wd2_ref[...],
                 preferred_element_type=jnp.float32) + bd2_ref[...]
    o_ref[...] = jnp.maximum(d2, 0.0)


# ----------------------------------------------------------------------------
# pallas_call wrappers
# ----------------------------------------------------------------------------

def matmul_bias_act(x, w, b, act="none", m_tiles=1):
    M, K = x.shape
    N = w.shape[1]
    xb = x.astype(jnp.bfloat16)
    wb = w.astype(jnp.bfloat16)
    b2 = b.reshape(1, N).astype(jnp.float32)
    kern = functools.partial(_matmul_bias_act_kernel, act=act)
    cost = pl.CostEstimate(
        flops=2 * M * K * N,
        transcendentals=M * N if act == "sigmoid" else 0,
        bytes_accessed=2 * (M * K + K * N) + 4 * (M * N + N))

    if m_tiles > 1 and M % (8 * m_tiles) == 0:
        # Row-tiled, "parallel" grid: lets v7x spread the big matmul across both
        # TensorCores.  (Only used for activation-only layers -- never BN.)
        tm = M // m_tiles
        return pl.pallas_call(
            kern,
            out_shape=jax.ShapeDtypeStruct((M, N), jnp.float32),
            grid=(m_tiles,),
            in_specs=[pl.BlockSpec((tm, K), lambda i: (i, 0)),
                      pl.BlockSpec((K, N), lambda i: (0, 0)),
                      pl.BlockSpec((1, N), lambda i: (0, 0))],
            out_specs=pl.BlockSpec((tm, N), lambda i: (i, 0)),
            compiler_params=pltpu.CompilerParams(
                dimension_semantics=("parallel",),
                vmem_limit_bytes=_VMEM_LIMIT),
            cost_estimate=cost,
        )(xb, wb, b2)

    return pl.pallas_call(
        kern,
        out_shape=jax.ShapeDtypeStruct((M, N), jnp.float32),
        in_specs=[_VMEM, _VMEM, _VMEM],
        out_specs=_VMEM,
        compiler_params=_PARAMS_NOGRID,
        cost_estimate=cost,
    )(xb, wb, b2)


def matmul_bias_bn_relu(x, w, b, gamma, beta):
    M, K = x.shape
    N = w.shape[1]
    cost = pl.CostEstimate(
        flops=2 * M * K * N + 8 * M * N,
        transcendentals=N,
        bytes_accessed=2 * (M * K + K * N) + 4 * (M * N + 3 * N))
    return pl.pallas_call(
        _matmul_bias_bn_relu_kernel,
        out_shape=jax.ShapeDtypeStruct((M, N), jnp.float32),
        in_specs=[_VMEM] * 5,
        out_specs=_VMEM,
        compiler_params=_PARAMS_NOGRID,
        cost_estimate=cost,
    )(x.astype(jnp.bfloat16), w.astype(jnp.bfloat16),
      b.reshape(1, N).astype(jnp.float32),
      gamma.reshape(1, N).astype(jnp.float32),
      beta.reshape(1, N).astype(jnp.float32))


# ----------------------------------------------------------------------------
# Layout glue (plain JAX): patch extraction, scatter-free dilation, weight prep.
# Pure plumbing -- all FLOPs happen in the kernels above.
# ----------------------------------------------------------------------------

def _im2col_patches(x_nhwc, k, stride):
    B, H, W, C = x_nhwc.shape
    Ho = (H - k) // stride + 1
    Wo = (W - k) // stride + 1
    patches = []
    for i in range(k):
        for j in range(k):
            patches.append(
                x_nhwc[:, i:i + stride * Ho:stride, j:j + stride * Wo:stride, :])
    p = jnp.stack(patches, axis=3)                       # [B, Ho, Wo, k*k, C]
    return p, (B, Ho, Wo)


def _conv_weight_mat(w_oikk):
    # [Cout, Cin, k, k] -> [(i, j, cin), cout], matching the im2col column order
    Cout, Cin, k, _ = w_oikk.shape
    return jnp.transpose(w_oikk, (2, 3, 1, 0)).reshape(k * k * Cin, Cout)


def _dilate(x, stride):
    # Scatter-free zero-dilation (stack + reshape interleave).
    if stride == 1:
        return x
    B, H, W, C = x.shape
    z = jnp.zeros_like(x)
    xw = jnp.stack([x] + [z] * (stride - 1), axis=3).reshape(B, H, W * stride, C)
    zw = jnp.zeros_like(xw)
    xh = jnp.stack([xw] + [zw] * (stride - 1), axis=2).reshape(
        B, H * stride, W * stride, C)
    return xh[:, :H * stride - (stride - 1), :W * stride - (stride - 1), :]


def conv2d(x_nhwc, w_oikk, b, stride, padding, act="none", bn=None, m_tiles=1):
    k = w_oikk.shape[2]
    xp = jnp.pad(x_nhwc, ((0, 0), (padding, padding), (padding, padding), (0, 0)))
    p, (B, Ho, Wo) = _im2col_patches(xp, k, stride)
    cols = p.reshape(B * Ho * Wo, -1)
    wmat = _conv_weight_mat(w_oikk)
    if bn is not None:
        y = matmul_bias_bn_relu(cols, wmat, b, bn[0], bn[1])
    else:
        y = matmul_bias_act(cols, wmat, b, act=act, m_tiles=m_tiles)
    return y.reshape(B, Ho, Wo, -1)


def conv_transpose2d(x_nhwc, w_iokk, b, stride, padding, output_padding,
                     act="none", bn=None, m_tiles=1):
    # ConvTranspose2d as a stride-1 conv on a zero-dilated, padded input with a
    # spatially flipped, channel-transposed kernel.
    k = w_iokk.shape[2]
    xd = _dilate(x_nhwc, stride)
    lo = k - 1 - padding
    hi = k - 1 - padding + output_padding
    xp = jnp.pad(xd, ((0, 0), (lo, hi), (lo, hi), (0, 0)))
    w_conv = jnp.transpose(w_iokk[:, :, ::-1, ::-1], (1, 0, 2, 3))  # [Cout,Cin,k,k]
    p, (B, Ho, Wo) = _im2col_patches(xp, k, 1)
    cols = p.reshape(B * Ho * Wo, -1)
    wmat = _conv_weight_mat(w_conv)
    if bn is not None:
        y = matmul_bias_bn_relu(cols, wmat, b, bn[0], bn[1])
    else:
        y = matmul_bias_act(cols, wmat, b, act=act, m_tiles=m_tiles)
    return y.reshape(B, Ho, Wo, -1)


def encoder_tail_decoder_head(a2_nhwc, p, eps):
    """One fused kernel: conv3 + flatten + linear1 + mu/sigma + reparam +
    decoder linears.  All layout changes are folded into weight permutations."""
    B = a2_nhwc.shape[0]
    latent = p["lin2_w"].shape[1]
    c3 = p["conv3_w"].shape[0]                               # 32

    patches, (_, Ho, Wo) = _im2col_patches(a2_nhwc, 3, 2)    # [B, 3, 3, 9, 16]
    n_pos = Ho * Wo                                          # 9
    nf = c3 * n_pos                                          # 288
    # rows ordered (spatial position g, batch b): the per-position blocks the
    # kernel needs for linear1 are then contiguous row groups.
    cols3 = jnp.transpose(patches, (1, 2, 0, 3, 4)).reshape(n_pos * B, -1)
    w3 = _conv_weight_mat(p["conv3_w"])                      # [144, 32]

    # linear1 weight rows regrouped from PyTorch flatten order (c, h, w) to
    # (position g, channel c) blocks.
    w1p = p["lin1_w"].reshape(c3, n_pos, -1).transpose(1, 0, 2).reshape(nf, -1)
    # decoder linear2 output features reordered from (c, h, w) to (h, w, c) so
    # the kernel output reshapes directly to an NHWC image.
    wd2p = p["dlin2_w"].reshape(-1, c3, n_pos).transpose(0, 2, 1).reshape(-1, nf)
    bd2p = p["dlin2_b"].reshape(c3, n_pos).transpose(1, 0).reshape(nf)

    flops = 2 * (cols3.shape[0] * cols3.shape[1] * c3
                 + n_pos * B * c3 * 128
                 + 2 * B * 128 * latent + B * latent * 128 + B * 128 * nf)
    byts = 2 * (cols3.size + w3.size + w1p.size + p["lin2_w"].size
                + p["lin3_w"].size + p["dlin1_w"].size + wd2p.size) \
        + 4 * (B * nf + nf + 3 * 128 + c3 + 2 * latent + B * latent)
    cost = pl.CostEstimate(flops=int(flops), transcendentals=int(B * latent),
                           bytes_accessed=int(byts))

    kern = functools.partial(_mid_kernel, batch=B, n_pos=n_pos, c3=c3)
    return pl.pallas_call(
        kern,
        out_shape=jax.ShapeDtypeStruct((B, nf), jnp.float32),
        in_specs=[_VMEM] * 14,
        out_specs=_VMEM,
        scratch_shapes=[pltpu.VMEM((n_pos * B, c3), jnp.float32)],
        compiler_params=_PARAMS_NOGRID,
        cost_estimate=cost,
    )(
        cols3.astype(jnp.bfloat16), w3.astype(jnp.bfloat16),
        p["conv3_b"].reshape(1, c3).astype(jnp.float32),
        w1p.astype(jnp.bfloat16), p["lin1_b"].reshape(1, -1).astype(jnp.float32),
        p["lin2_w"].astype(jnp.bfloat16), p["lin2_b"].reshape(1, -1).astype(jnp.float32),
        p["lin3_w"].astype(jnp.bfloat16), p["lin3_b"].reshape(1, -1).astype(jnp.float32),
        eps.astype(jnp.float32),
        p["dlin1_w"].astype(jnp.bfloat16), p["dlin1_b"].reshape(1, -1).astype(jnp.float32),
        wd2p.astype(jnp.bfloat16), bd2p.reshape(1, -1).astype(jnp.float32),
    )


# ----------------------------------------------------------------------------
# Parameters (deterministic, PyTorch-default-style uniform init)
# ----------------------------------------------------------------------------

def _uniform(key, shape, fan_in):
    bound = 1.0 / float(fan_in) ** 0.5
    return jax.random.uniform(key, shape, jnp.float32, -bound, bound)


def init_params(key, latent_dims):
    ks = iter(jax.random.split(key, 40))
    p = {}
    # encoder convs [Cout, Cin, k, k]
    p["conv1_w"] = _uniform(next(ks), (8, 3, 3, 3), 3 * 9)
    p["conv1_b"] = _uniform(next(ks), (8,), 3 * 9)
    p["conv2_w"] = _uniform(next(ks), (16, 8, 3, 3), 8 * 9)
    p["conv2_b"] = _uniform(next(ks), (16,), 8 * 9)
    p["bn2_g"] = jnp.ones((16,), jnp.float32)
    p["bn2_b"] = jnp.zeros((16,), jnp.float32)
    p["conv3_w"] = _uniform(next(ks), (32, 16, 3, 3), 16 * 9)
    p["conv3_b"] = _uniform(next(ks), (32,), 16 * 9)
    # encoder linears stored as [in, out]
    p["lin1_w"] = _uniform(next(ks), (288, 128), 288)
    p["lin1_b"] = _uniform(next(ks), (128,), 288)
    p["lin2_w"] = _uniform(next(ks), (128, latent_dims), 128)
    p["lin2_b"] = _uniform(next(ks), (latent_dims,), 128)
    p["lin3_w"] = _uniform(next(ks), (128, latent_dims), 128)
    p["lin3_b"] = _uniform(next(ks), (latent_dims,), 128)
    # decoder linears [in, out]
    p["dlin1_w"] = _uniform(next(ks), (latent_dims, 128), latent_dims)
    p["dlin1_b"] = _uniform(next(ks), (128,), latent_dims)
    p["dlin2_w"] = _uniform(next(ks), (128, 288), 128)
    p["dlin2_b"] = _uniform(next(ks), (288,), 128)
    # decoder conv-transposes [Cin, Cout, k, k]
    p["dconv1_w"] = _uniform(next(ks), (32, 16, 3, 3), 32 * 9)
    p["dconv1_b"] = _uniform(next(ks), (16,), 32 * 9)
    p["dbn1_g"] = jnp.ones((16,), jnp.float32)
    p["dbn1_b"] = jnp.zeros((16,), jnp.float32)
    p["dconv2_w"] = _uniform(next(ks), (16, 8, 3, 3), 16 * 9)
    p["dconv2_b"] = _uniform(next(ks), (8,), 16 * 9)
    p["dbn2_g"] = jnp.ones((8,), jnp.float32)
    p["dbn2_b"] = jnp.zeros((8,), jnp.float32)
    p["dconv3_w"] = _uniform(next(ks), (8, 3, 3, 3), 8 * 9)
    p["dconv3_b"] = _uniform(next(ks), (3,), 8 * 9)
    return p


# ----------------------------------------------------------------------------
# Forward pass == VariationalAutoencoder.forward
# ----------------------------------------------------------------------------

def vae_forward(params, x_nchw, key):
    p = params
    x = jnp.transpose(x_nchw, (0, 2, 3, 1)).astype(jnp.float32)   # NCHW -> NHWC
    B = x.shape[0]
    latent = p["lin2_w"].shape[1]

    # --- VariationalEncoder convs ---
    h = conv2d(x, p["conv1_w"], p["conv1_b"], stride=2, padding=1, act="relu")
    h = conv2d(h, p["conv2_w"], p["conv2_b"], stride=2, padding=1,
               bn=(p["bn2_g"], p["bn2_b"]))                        # BN(16)+ReLU

    # --- fused middle: conv3 + flatten + linear1 + mu/sigma + reparam + decoder_lin
    eps = jax.random.normal(key, (B, latent), jnp.float32)
    # TODO(synk): encoder.kl is a training-time side effect, not part of the
    # module's returned output, so it is not computed here.
    d = encoder_tail_decoder_head(h, p, eps)
    d = d.reshape(B, 3, 3, 32)                                     # NHWC decoder input

    # --- Decoder deconvs ---
    d = conv_transpose2d(d, p["dconv1_w"], p["dconv1_b"], 2, 0, 0,
                         bn=(p["dbn1_g"], p["dbn1_b"]))            # -> [B,7,7,16]
    d = conv_transpose2d(d, p["dconv2_w"], p["dconv2_b"], 2, 1, 1,
                         bn=(p["dbn2_g"], p["dbn2_b"]))            # -> [B,14,14,8]
    d = conv_transpose2d(d, p["dconv3_w"], p["dconv3_b"], 2, 1, 1,
                         act="sigmoid", m_tiles=2)                 # -> [B,28,28,3]
    return jnp.transpose(d, (0, 3, 1, 2))                          # NCHW out


if __name__ == "__main__":
    key = jax.random.PRNGKey(0)
    pkey, xkey, ekey = jax.random.split(key, 3)
    latent_dims = 4
    params = init_params(pkey, latent_dims)
    # module structure (flatten to 3*3*32) implies a 28x28 RGB input
    x = jax.random.uniform(xkey, (2, 3, 28, 28), jnp.float32)

    out = jax.jit(vae_forward)(params, x, ekey)
    out = jax.block_until_ready(out)

    assert out.shape == (2, 3, 28, 28), out.shape
    assert bool(jnp.all(jnp.isfinite(out)))
    assert bool(jnp.all((out >= 0.0) & (out <= 1.0)))  # sigmoid output range
    print("KERNEL_OK")
</pallas_src>

<mosaic_0001>
module attributes {stable_mosaic.version = 11 : i64} {
  func.func @_matmul_bias_act_kernel(%arg0: memref<392x27xbf16, #tpu.memory_space<vmem>>, %arg1: memref<27x8xbf16, #tpu.memory_space<vmem>>, %arg2: memref<1x8xf32, #tpu.memory_space<vmem>>, %arg3: memref<392x8xf32, #tpu.memory_space<vmem>>) attributes {dimension_semantics = [], scalar_prefetch = 0 : i64, scratch_operands = 0 : i64, tpu.core_type = #tpu.core_type<tc>} {
    %c0 = arith.constant 0 : index
    %c0_0 = arith.constant 0 : index
    %0 = vector.load %arg0[%c0, %c0_0] : memref<392x27xbf16, #tpu.memory_space<vmem>>, vector<392x27xbf16>
    %c0_1 = arith.constant 0 : index
    %c0_2 = arith.constant 0 : index
    %1 = vector.load %arg1[%c0_1, %c0_2] : memref<27x8xbf16, #tpu.memory_space<vmem>>, vector<27x8xbf16>
    %cst = arith.constant dense<0.000000e+00> : vector<392x8xf32>
    %2 = tpu.matmul %0, %1, %cst {dimension_numbers = #tpu.dot_dimension_numbers<[1], [0], [0], [1], [0, 0, 1, 1], [], []>} : vector<392x27xbf16>, vector<27x8xbf16>, vector<392x8xf32> -> vector<392x8xf32>
    %c0_3 = arith.constant 0 : index
    %c0_4 = arith.constant 0 : index
    %3 = vector.load %arg2[%c0_3, %c0_4] : memref<1x8xf32, #tpu.memory_space<vmem>>, vector<1x8xf32>
    %4 = vector.broadcast %3 : vector<1x8xf32> to vector<392x8xf32>
    %5 = arith.addf %2, %4 : vector<392x8xf32>
    %cst_5 = arith.constant 0.000000e+00 : f32
    %6 = vector.broadcast %cst_5 : f32 to vector<392x8xf32>
    %7 = arith.maximumf %5, %6 : vector<392x8xf32>
    %c0_6 = arith.constant 0 : index
    %c0_7 = arith.constant 0 : index
    %8 = vector.load %arg3[%c0_6, %c0_7] : memref<392x8xf32, #tpu.memory_space<vmem>>, vector<392x8xf32>
    tpu.vector_store %arg3[%c0_6, %c0_7], %7 {strides = array<i32>} : memref<392x8xf32, #tpu.memory_space<vmem>>, vector<392x8xf32>,
    return
  }
}

module attributes {stable_mosaic.version = 11 : i64} {
  func.func @_matmul_bias_bn_relu_kernel(%arg0: memref<98x72xbf16, #tpu.memory_space<vmem>>, %arg1: memref<72x16xbf16, #tpu.memory_space<vmem>>, %arg2: memref<1x16xf32, #tpu.memory_space<vmem>>, %arg3: memref<1x16xf32, #tpu.memory_space<vmem>>, %arg4: memref<1x16xf32, #tpu.memory_space<vmem>>, %arg5: memref<98x16xf32, #tpu.memory_space<vmem>>) attributes {dimension_semantics = [], scalar_prefetch = 0 : i64, scratch_operands = 0 : i64, tpu.core_type = #tpu.core_type<tc>} {
    %c0 = arith.constant 0 : index
    %c0_0 = arith.constant 0 : index
    %0 = vector.load %arg0[%c0, %c0_0] : memref<98x72xbf16, #tpu.memory_space<vmem>>, vector<98x72xbf16>
    %c0_1 = arith.constant 0 : index
    %c0_2 = arith.constant 0 : index
    %1 = vector.load %arg1[%c0_1, %c0_2] : memref<72x16xbf16, #tpu.memory_space<vmem>>, vector<72x16xbf16>
    %cst = arith.constant dense<0.000000e+00> : vector<98x16xf32>
    %2 = tpu.matmul %0, %1, %cst {dimension_numbers = #tpu.dot_dimension_numbers<[1], [0], [0], [1], [0, 0, 1, 1], [], []>} : vector<98x72xbf16>, vector<72x16xbf16>, vector<98x16xf32> -> vector<98x16xf32>
    %c0_3 = arith.constant 0 : index
    %c0_4 = arith.constant 0 : index
    %3 = vector.load %arg2[%c0_3, %c0_4] : memref<1x16xf32, #tpu.memory_space<vmem>>, vector<1x16xf32>
    %4 = vector.broadcast %3 : vector<1x16xf32> to vector<98x16xf32>
    %5 = arith.addf %2, %4 : vector<98x16xf32>
    %cst_5 = arith.constant dense<0.000000e+00> : vector<16xf32>
    %6 = vector.multi_reduction <add>, %5, %cst_5 [0] : vector<98x16xf32> to vector<16xf32>
    %7 = vector.shape_cast %6 : vector<16xf32> to vector<1x16xf32>
    %cst_6 = arith.constant 0.0102040814 : f32
    %8 = vector.broadcast %cst_6 : f32 to vector<1x16xf32>
    %9 = arith.mulf %7, %8 : vector<1x16xf32>
    %10 = vector.broadcast %9 : vector<1x16xf32> to vector<98x16xf32>
    %11 = arith.subf %5, %10 : vector<98x16xf32>
    %12 = arith.mulf %11, %11 : vector<98x16xf32>
    %cst_7 = arith.constant dense<0.000000e+00> : vector<16xf32>
    %13 = vector.multi_reduction <add>, %12, %cst_7 [0] : vector<98x16xf32> to vector<16xf32>
    %14 = vector.shape_cast %13 : vector<16xf32> to vector<1x16xf32>
    %cst_8 = arith.constant 0.0102040814 : f32
    %15 = vector.broadcast %cst_8 : f32 to vector<1x16xf32>
    %16 = arith.mulf %14, %15 : vector<1x16xf32>
    %c0_9 = arith.constant 0 : index
    %c0_10 = arith.constant 0 : index
    %17 = vector.load %arg3[%c0_9, %c0_10] : memref<1x16xf32, #tpu.memory_space<vmem>>, vector<1x16xf32>
    %18 = vector.broadcast %9 : vector<1x16xf32> to vector<98x16xf32>
    %19 = arith.subf %5, %18 : vector<98x16xf32>
    %cst_11 = arith.constant 9.99999974E-6 : f32
    %20 = vector.broadcast %cst_11 : f32 to vector<1x16xf32>
    %21 = arith.addf %16, %20 : vector<1x16xf32>
    %22 = math.rsqrt %21 : vector<1x16xf32>
    %23 = vector.broadcast %22 : vector<1x16xf32> to vector<98x16xf32>
    %24 = arith.mulf %19, %23 : vector<98x16xf32>
    %25 = vector.broadcast %17 : vector<1x16xf32> to vector<98x16xf32>
    %26 = arith.mulf %25, %24 : vector<98x16xf32>
    %c0_12 = arith.constant 0 : index
    %c0_13 = arith.constant 0 : index
    %27 = vector.load %arg4[%c0_12, %c0_13] : memref<1x16xf32, #tpu.memory_space<vmem>>, vector<1x16xf32>
    %28 = vector.broadcast %27 : vector<1x16xf32> to vector<98x16xf32>
    %29 = arith.addf %26, %28 : vector<98x16xf32>
    %cst_14 = arith.constant 0.000000e+00 : f32
    %30 = vector.broadcast %cst_14 : f32 to vector<98x16xf32>
    %31 = arith.maximumf %29, %30 : vector<98x16xf32>
    %c0_15 = arith.constant 0 : index
    %c0_16 = arith.constant 0 : index
    %32 = vector.load %arg5[%c0_15, %c0_16] : memref<98x16xf32, #tpu.memory_space<vmem>>, vector<98x16xf32>
    tpu.vector_store %arg5[%c0_15, %c0_16], %31 {strides = array<i32>} : memref<98x16xf32, #tpu.memory_space<vmem>>, vector<98x16xf32>,
    return
  }
}

module attributes {stable_mosaic.version = 11 : i64} {
  func.func @_mid_kernel(%arg0: memref<18x144xbf16, #tpu.memory_space<vmem>>, %arg1: memref<144x32xbf16, #tpu.memory_space<vmem>>, %arg2: memref<1x32xf32, #tpu.memory_space<vmem>>, %arg3: memref<288x128xbf16, #tpu.memory_space<vmem>>, %arg4: memref<1x128xf32, #tpu.memory_space<vmem>>, %arg5: memref<128x4xbf16, #tpu.memory_space<vmem>>, %arg6: memref<1x4xf32, #tpu.memory_space<vmem>>, %arg7: memref<128x4xbf16, #tpu.memory_space<vmem>>, %arg8: memref<1x4xf32, #tpu.memory_space<vmem>>, %arg9: memref<2x4xf32, #tpu.memory_space<vmem>>, %arg10: memref<4x128xbf16, #tpu.memory_space<vmem>>, %arg11: memref<1x128xf32, #tpu.memory_space<vmem>>, %arg12: memref<128x288xbf16, #tpu.memory_space<vmem>>, %arg13: memref<1x288xf32, #tpu.memory_space<vmem>>, %arg14: memref<2x288xf32, #tpu.memory_space<vmem>>, %arg15: memref<18x32xf32, #tpu.memory_space<vmem>>) attributes {dimension_semantics = [], scalar_prefetch = 0 : i64, scratch_operands = 1 : i64, tpu.core_type = #tpu.core_type<tc>} {
    %c0 = arith.constant 0 : index
    %c0_0 = arith.constant 0 : index
    %0 = vector.load %arg0[%c0, %c0_0] : memref<18x144xbf16, #tpu.memory_space<vmem>>, vector<18x144xbf16>
    %c0_1 = arith.constant 0 : index
    %c0_2 = arith.constant 0 : index
    %1 = vector.load %arg1[%c0_1, %c0_2] : memref<144x32xbf16, #tpu.memory_space<vmem>>, vector<144x32xbf16>
    %cst = arith.constant dense<0.000000e+00> : vector<18x32xf32>
    %2 = tpu.matmul %0, %1, %cst {dimension_numbers = #tpu.dot_dimension_numbers<[1], [0], [0], [1], [0, 0, 1, 1], [], []>} : vector<18x144xbf16>, vector<144x32xbf16>, vector<18x32xf32> -> vector<18x32xf32>
    %c0_3 = arith.constant 0 : index
    %c0_4 = arith.constant 0 : index
    %3 = vector.load %arg2[%c0_3, %c0_4] : memref<1x32xf32, #tpu.memory_space<vmem>>, vector<1x32xf32>
    %4 = vector.broadcast %3 : vector<1x32xf32> to vector<18x32xf32>
    %5 = arith.addf %2, %4 : vector<18x32xf32>
    %cst_5 = arith.constant 0.000000e+00 : f32
    %6 = vector.broadcast %cst_5 : f32 to vector<18x32xf32>
    %7 = arith.maximumf %5, %6 : vector<18x32xf32>
    %c0_6 = arith.constant 0 : index
    %c0_7 = arith.constant 0 : index
    %8 = vector.load %arg15[%c0_6, %c0_7] : memref<18x32xf32, #tpu.memory_space<vmem>>, vector<18x32xf32>
    tpu.vector_store %arg15[%c0_6, %c0_7], %7 {strides = array<i32>} : memref<18x32xf32, #tpu.memory_space<vmem>>, vector<18x32xf32>,
    %cst_8 = arith.constant 0.000000e+00 : f32
    %9 = vector.broadcast %cst_8 : f32 to vector<2x128xf32>
    %c0_9 = arith.constant 0 : index
    %c0_10 = arith.constant 0 : index
    %10 = vector.load %arg15[%c0_9, %c0_10] : memref<18x32xf32, #tpu.memory_space<vmem>>, vector<2x32xf32>
    %11 = arith.truncf %10 : vector<2x32xf32> to vector<2x32xbf16>
    %c0_11 = arith.constant 0 : index
    %c0_12 = arith.constant 0 : index
    %12 = vector.load %arg3[%c0_11, %c0_12] : memref<288x128xbf16, #tpu.memory_space<vmem>>, vector<32x128xbf16>
    %cst_13 = arith.constant dense<0.000000e+00> : vector<2x128xf32>
    %13 = tpu.matmul %11, %12, %cst_13 {dimension_numbers = #tpu.dot_dimension_numbers<[1], [0], [0], [1], [0, 0, 1, 1], [], []>} : vector<2x32xbf16>, vector<32x128xbf16>, vector<2x128xf32> -> vector<2x128xf32>
    %14 = arith.addf %9, %13 : vector<2x128xf32>
    %c2 = arith.constant 2 : index
    %c0_14 = arith.constant 0 : index
    %15 = vector.load %arg15[%c2, %c0_14] : memref<18x32xf32, #tpu.memory_space<vmem>>, vector<2x32xf32>
    %16 = arith.truncf %15 : vector<2x32xf32> to vector<2x32xbf16>
    %c32 = arith.constant 32 : index
    %c0_15 = arith.constant 0 : index
    %17 = vector.load %arg3[%c32, %c0_15] : memref<288x128xbf16, #tpu.memory_space<vmem>>, vector<32x128xbf16>
    %cst_16 = arith.constant dense<0.000000e+00> : vector<2x128xf32>
    %18 = tpu.matmul %16, %17, %cst_16 {dimension_numbers = #tpu.dot_dimension_numbers<[1], [0], [0], [1], [0, 0, 1, 1], [], []>} : vector<2x32xbf16>, vector<32x128xbf16>, vector<2x128xf32> -> vector<2x128xf32>
    %19 = arith.addf %14, %18 : vector<2x128xf32>
    %c4 = arith.constant 4 : index
    %c0_17 = arith.constant 0 : index
    %20 = vector.load %arg15[%c4, %c0_17] : memref<18x32xf32, #tpu.memory_space<vmem>>, vector<2x32xf32>
    %21 = arith.truncf %20 : vector<2x32xf32> to vector<2x32xbf16>
    %c64 = arith.constant 64 : index
    %c0_18 = arith.constant 0 : index
    %22 = vector.load %arg3[%c64, %c0_18] : memref<288x128xbf16, #tpu.memory_space<vmem>>, vector<32x128xbf16>
    %cst_19 = arith.constant dense<0.000000e+00> : vector<2x128xf32>
    %23 = tpu.matmul %21, %22, %cst_19 {dimension_numbers = #tpu.dot_dimension_numbers<[1], [0], [0], [1], [0, 0, 1, 1], [], []>} : vector<2x32xbf16>, vector<32x128xbf16>, vector<2x128xf32> -> vector<2x128xf32>
    %24 = arith.addf %19, %23 : vector<2x128xf32>
    %c6 = arith.constant 6 : index
    %c0_20 = arith.constant 0 : index
    %25 = vector.load %arg15[%c6, %c0_20] : memref<18x32xf32, #tpu.memory_space<vmem>>, vector<2x32xf32>
    %26 = arith.truncf %25 : vector<2x32xf32> to vector<2x32xbf16>
    %c96 = arith.constant 96 : index
    %c0_21 = arith.constant 0 : index
    %27 = vector.load %arg3[%c96, %c0_21] : memref<288x128xbf16, #tpu.memory_space<vmem>>, vector<32x128xbf16>
    %cst_22 = arith.constant dense<0.000000e+00> : vector<2x128xf32>
    %28 = tpu.matmul %26, %27, %cst_22 {dimension_numbers = #tpu.dot_dimension_numbers<[1], [0], [0], [1], [0, 0, 1, 1], [], []>} : vector<2x32xbf16>, vector<32x128xbf16>, vector<2x128xf32> -> vector<2x128xf32>
    %29 = arith.addf %24, %28 : vector<2x128xf32>
    %c8 = arith.constant 8 : index
    %c0_23 = arith.constant 0 : index
    %30 = vector.load %arg15[%c8, %c0_23] : memref<18x32xf32, #tpu.memory_space<vmem>>, vector<2x32xf32>
    %31 = arith.truncf %30 : vector<2x32xf32> to vector<2x32xbf16>
    %c128 = arith.constant 128 : index
    %c0_24 = arith.constant 0 : index
    %32 = vector.load %arg3[%c128, %c0_24] : memref<288x128xbf16, #tpu.memory_space<vmem>>, vector<32x128xbf16>
    %cst_25 = arith.constant dense<0.000000e+00> : vector<2x128xf32>
    %33 = tpu.matmul %31, %32, %cst_25 {dimension_numbers = #tpu.dot_dimension_numbers<[1], [0], [0], [1], [0, 0, 1, 1], [], []>} : vector<2x32xbf16>, vector<32x128xbf16>, vector<2x128xf32> -> vector<2x128xf32>
    %34 = arith.addf %29, %33 : vector<2x128xf32>
    %c10 = arith.constant 10 : index
    %c0_26 = arith.constant 0 : index
    %35 = vector.load %arg15[%c10, %c0_26] : memref<18x32xf32, #tpu.memory_space<vmem>>, vector<2x32xf32>
    %36 = arith.truncf %35 : vector<2x32xf32> to vector<2x32xbf16>
    %c160 = arith.constant 160 : index
    %c0_27 = arith.constant 0 : index
    %37 = vector.load %arg3[%c160, %c0_27] : memref<288x128xbf16, #tpu.memory_space<vmem>>, vector<32x128xbf16>
    %cst_28 = arith.constant dense<0.000000e+00> : vector<2x128xf32>
    %38 = tpu.matmul %36, %37, %cst_28 {dimension_numbers = #tpu.dot_dimension_numbers<[1], [0], [0], [1], [0, 0, 1, 1], [], []>} : vector<2x32xbf16>, vector<32x128xbf16>, vector<2x128xf32> -> vector<2x128xf32>
    %39 = arith.addf %34, %38 : vector<2x128xf32>
    %c12 = arith.constant 12 : index
    %c0_29 = arith.constant 0 : index
    %40 = vector.load %arg15[%c12, %c0_29] : memref<18x32xf32, #tpu.memory_space<vmem>>, vector<2x32xf32>
    %41 = arith.truncf %40 : vector<2x32xf32> to vector<2x32xbf16>
    %c192 = arith.constant 192 : index
    %c0_30 = arith.constant 0 : index
    %42 = vector.load %arg3[%c192, %c0_30] : memref<288x128xbf16, #tpu.memory_space<vmem>>, vector<32x128xbf16>
    %cst_31 = arith.constant dense<0.000000e+00> : vector<2x128xf32>
    %43 = tpu.matmul %41, %42, %cst_31 {dimension_numbers = #tpu.dot_dimension_numbers<[1], [0], [0], [1], [0, 0, 1, 1], [], []>} : vector<2x32xbf16>, vector<32x128xbf16>, vector<2x128xf32> -> vector<2x128xf32>
    %44 = arith.addf %39, %43 : vector<2x128xf32>
    %c14 = arith.constant 14 : index
    %c0_32 = arith.constant 0 : index
    %45 = vector.load %arg15[%c14, %c0_32] : memref<18x32xf32, #tpu.memory_space<vmem>>, vector<2x32xf32>
    %46 = arith.truncf %45 : vector<2x32xf32> to vector<2x32xbf16>
    %c224 = arith.constant 224 : index
    %c0_33 = arith.constant 0 : index
    %47 = vector.load %arg3[%c224, %c0_33] : memref<288x128xbf16, #tpu.memory_space<vmem>>, vector<32x128xbf16>
    %cst_34 = arith.constant dense<0.000000e+00> : vector<2x128xf32>
    %48 = tpu.matmul %46, %47, %cst_34 {dimension_numbers = #tpu.dot_dimension_numbers<[1], [0], [0], [1], [0, 0, 1, 1], [], []>} : vector<2x32xbf16>, vector<32x128xbf16>, vector<2x128xf32> -> vector<2x128xf32>
    %49 = arith.addf %44, %48 : vector<2x128xf32>
    %c16 = arith.constant 16 : index
    %c0_35 = arith.constant 0 : index
    %50 = vector.load %arg15[%c16, %c0_35] : memref<18x32xf32, #tpu.memory_space<vmem>>, vector<2x32xf32>
    %51 = arith.truncf %50 : vector<2x32xf32> to vector<2x32xbf16>
    %c256 = arith.constant 256 : index
    %c0_36 = arith.constant 0 : index
    %52 = vector.load %arg3[%c256, %c0_36] : memref<288x128xbf16, #tpu.memory_space<vmem>>, vector<32x128xbf16>
    %cst_37 = arith.constant dense<0.000000e+00> : vector<2x128xf32>
    %53 = tpu.matmul %51, %52, %cst_37 {dimension_numbers = #tpu.dot_dimension_numbers<[1], [0], [0], [1], [0, 0, 1, 1], [], []>} : vector<2x32xbf16>, vector<32x128xbf16>, vector<2x128xf32> -> vector<2x128xf32>
    %54 = arith.addf %49, %53 : vector<2x128xf32>
    %c0_38 = arith.constant 0 : index
    %c0_39 = arith.constant 0 : index
    %55 = vector.load %arg4[%c0_38, %c0_39] : memref<1x128xf32, #tpu.memory_space<vmem>>, vector<1x128xf32>
    %56 = vector.broadcast %55 : vector<1x128xf32> to vector<2x128xf32>
    %57 = arith.addf %54, %56 : vector<2x128xf32>
    %cst_40 = arith.constant 0.000000e+00 : f32
    %58 = vector.broadcast %cst_40 : f32 to vector<2x128xf32>
    %59 = arith.maximumf %57, %58 : vector<2x128xf32>
    %60 = arith.truncf %59 : vector<2x128xf32> to vector<2x128xbf16>
    %c0_41 = arith.constant 0 : index
    %c0_42 = arith.constant 0 : index
    %61 = vector.load %arg5[%c0_41, %c0_42] : memref<128x4xbf16, #tpu.memory_space<vmem>>, vector<128x4xbf16>
    %cst_43 = arith.constant dense<0.000000e+00> : vector<2x4xf32>
    %62 = tpu.matmul %60, %61, %cst_43 {dimension_numbers = #tpu.dot_dimension_numbers<[1], [0], [0], [1], [0, 0, 1, 1], [], []>} : vector<2x128xbf16>, vector<128x4xbf16>, vector<2x4xf32> -> vector<2x4xf32>
    %c0_44 = arith.constant 0 : index
    %c0_45 = arith.constant 0 : index
    %63 = vector.load %arg6[%c0_44, %c0_45] : memref<1x4xf32, #tpu.memory_space<vmem>>, vector<1x4xf32>
    %64 = vector.broadcast %63 : vector<1x4xf32> to vector<2x4xf32>
    %65 = arith.addf %62, %64 : vector<2x4xf32>
    %c0_46 = arith.constant 0 : index
    %c0_47 = arith.constant 0 : index
    %66 = vector.load %arg7[%c0_46, %c0_47] : memref<128x4xbf16, #tpu.memory_space<vmem>>, vector<128x4xbf16>
    %cst_48 = arith.constant dense<0.000000e+00> : vector<2x4xf32>
    %67 = tpu.matmul %60, %66, %cst_48 {dimension_numbers = #tpu.dot_dimension_numbers<[1], [0], [0], [1], [0, 0, 1, 1], [], []>} : vector<2x128xbf16>, vector<128x4xbf16>, vector<2x4xf32> -> vector<2x4xf32>
    %c0_49 = arith.constant 0 : index
    %c0_50 = arith.constant 0 : index
    %68 = vector.load %arg8[%c0_49, %c0_50] : memref<1x4xf32, #tpu.memory_space<vmem>>, vector<1x4xf32>
    %69 = vector.broadcast %68 : vector<1x4xf32> to vector<2x4xf32>
    %70 = arith.addf %67, %69 : vector<2x4xf32>
    %71 = math.exp %70 : vector<2x4xf32>
    %c0_51 = arith.constant 0 : index
    %c0_52 = arith.constant 0 : index
    %72 = vector.load %arg9[%c0_51, %c0_52] : memref<2x4xf32, #tpu.memory_space<vmem>>, vector<2x4xf32>
    %73 = arith.mulf %71, %72 : vector<2x4xf32>
    %74 = arith.addf %65, %73 : vector<2x4xf32>
    %75 = arith.truncf %74 : vector<2x4xf32> to vector<2x4xbf16>
    %c0_53 = arith.constant 0 : index
    %c0_54 = arith.constant 0 : index
    %76 = vector.load %arg10[%c0_53, %c0_54] : memref<4x128xbf16, #tpu.memory_space<vmem>>, vector<4x128xbf16>
    %cst_55 = arith.constant dense<0.000000e+00> : vector<2x128xf32>
    %77 = tpu.matmul %75, %76, %cst_55 {dimension_numbers = #tpu.dot_dimension_numbers<[1], [0], [0], [1], [0, 0, 1, 1], [], []>} : vector<2x4xbf16>, vector<4x128xbf16>, vector<2x128xf32> -> vector<2x128xf32>
    %c0_56 = arith.constant 0 : index
    %c0_57 = arith.constant 0 : index
    %78 = vector.load %arg11[%c0_56, %c0_57] : memref<1x128xf32, #tpu.memory_space<vmem>>, vector<1x128xf32>
    %79 = vector.broadcast %78 : vector<1x128xf32> to vector<2x128xf32>
    %80 = arith.addf %77, %79 : vector<2x128xf32>
    %cst_58 = arith.constant 0.000000e+00 : f32
    %81 = vector.broadcast %cst_58 : f32 to vector<2x128xf32>
    %82 = arith.maximumf %80, %81 : vector<2x128xf32>
    %83 = arith.truncf %82 : vector<2x128xf32> to vector<2x128xbf16>
    %c0_59 = arith.constant 0 : index
    %c0_60 = arith.constant 0 : index
    %84 = vector.load %arg12[%c0_59, %c0_60] : memref<128x288xbf16, #tpu.memory_space<vmem>>, vector<128x288xbf16>
    %cst_61 = arith.constant dense<0.000000e+00> : vector<2x288xf32>
    %85 = tpu.matmul %83, %84, %cst_61 {dimension_numbers = #tpu.dot_dimension_numbers<[1], [0], [0], [1], [0, 0, 1, 1], [], []>} : vector<2x128xbf16>, vector<128x288xbf16>, vector<2x288xf32> -> vector<2x288xf32>
    %c0_62 = arith.constant 0 : index
    %c0_63 = arith.constant 0 : index
    %86 = vector.load %arg13[%c0_62, %c0_63] : memref<1x288xf32, #tpu.memory_space<vmem>>, vector<1x288xf32>
    %87 = vector.broadcast %86 : vector<1x288xf32> to vector<2x288xf32>
    %88 = arith.addf %85, %87 : vector<2x288xf32>
    %cst_64 = arith.constant 0.000000e+00 : f32
    %89 = vector.broadcast %cst_64 : f32 to vector<2x288xf32>
    %90 = arith.maximumf %88, %89 : vector<2x288xf32>
    %c0_65 = arith.constant 0 : index
    %c0_66 = arith.constant 0 : index
    %91 = vector.load %arg14[%c0_65, %c0_66] : memref<2x288xf32, #tpu.memory_space<vmem>>, vector<2x288xf32>
    tpu.vector_store %arg14[%c0_65, %c0_66], %90 {strides = array<i32>} : memref<2x288xf32, #tpu.memory_space<vmem>>, vector<2x288xf32>,
    return
  }
}

module attributes {stable_mosaic.version = 11 : i64} {
  func.func @_matmul_bias_bn_relu_kernel(%arg0: memref<98x288xbf16, #tpu.memory_space<vmem>>, %arg1: memref<288x16xbf16, #tpu.memory_space<vmem>>, %arg2: memref<1x16xf32, #tpu.memory_space<vmem>>, %arg3: memref<1x16xf32, #tpu.memory_space<vmem>>, %arg4: memref<1x16xf32, #tpu.memory_space<vmem>>, %arg5: memref<98x16xf32, #tpu.memory_space<vmem>>) attributes {dimension_semantics = [], scalar_prefetch = 0 : i64, scratch_operands = 0 : i64, tpu.core_type = #tpu.core_type<tc>} {
    %c0 = arith.constant 0 : index
    %c0_0 = arith.constant 0 : index
    %0 = vector.load %arg0[%c0, %c0_0] : memref<98x288xbf16, #tpu.memory_space<vmem>>, vector<98x288xbf16>
    %c0_1 = arith.constant 0 : index
    %c0_2 = arith.constant 0 : index
    %1 = vector.load %arg1[%c0_1, %c0_2] : memref<288x16xbf16, #tpu.memory_space<vmem>>, vector<288x16xbf16>
    %cst = arith.constant dense<0.000000e+00> : vector<98x16xf32>
    %2 = tpu.matmul %0, %1, %cst {dimension_numbers = #tpu.dot_dimension_numbers<[1], [0], [0], [1], [0, 0, 1, 1], [], []>} : vector<98x288xbf16>, vector<288x16xbf16>, vector<98x16xf32> -> vector<98x16xf32>
    %c0_3 = arith.constant 0 : index
    %c0_4 = arith.constant 0 : index
    %3 = vector.load %arg2[%c0_3, %c0_4] : memref<1x16xf32, #tpu.memory_space<vmem>>, vector<1x16xf32>
    %4 = vector.broadcast %3 : vector<1x16xf32> to vector<98x16xf32>
    %5 = arith.addf %2, %4 : vector<98x16xf32>
    %cst_5 = arith.constant dense<0.000000e+00> : vector<16xf32>
    %6 = vector.multi_reduction <add>, %5, %cst_5 [0] : vector<98x16xf32> to vector<16xf32>
    %7 = vector.shape_cast %6 : vector<16xf32> to vector<1x16xf32>
    %cst_6 = arith.constant 0.0102040814 : f32
    %8 = vector.broadcast %cst_6 : f32 to vector<1x16xf32>
    %9 = arith.mulf %7, %8 : vector<1x16xf32>
    %10 = vector.broadcast %9 : vector<1x16xf32> to vector<98x16xf32>
    %11 = arith.subf %5, %10 : vector<98x16xf32>
    %12 = arith.mulf %11, %11 : vector<98x16xf32>
    %cst_7 = arith.constant dense<0.000000e+00> : vector<16xf32>
    %13 = vector.multi_reduction <add>, %12, %cst_7 [0] : vector<98x16xf32> to vector<16xf32>
    %14 = vector.shape_cast %13 : vector<16xf32> to vector<1x16xf32>
    %cst_8 = arith.constant 0.0102040814 : f32
    %15 = vector.broadcast %cst_8 : f32 to vector<1x16xf32>
    %16 = arith.mulf %14, %15 : vector<1x16xf32>
    %c0_9 = arith.constant 0 : index
    %c0_10 = arith.constant 0 : index
    %17 = vector.load %arg3[%c0_9, %c0_10] : memref<1x16xf32, #tpu.memory_space<vmem>>, vector<1x16xf32>
    %18 = vector.broadcast %9 : vector<1x16xf32> to vector<98x16xf32>
    %19 = arith.subf %5, %18 : vector<98x16xf32>
    %cst_11 = arith.constant 9.99999974E-6 : f32
    %20 = vector.broadcast %cst_11 : f32 to vector<1x16xf32>
    %21 = arith.addf %16, %20 : vector<1x16xf32>
    %22 = math.rsqrt %21 : vector<1x16xf32>
    %23 = vector.broadcast %22 : vector<1x16xf32> to vector<98x16xf32>
    %24 = arith.mulf %19, %23 : vector<98x16xf32>
    %25 = vector.broadcast %17 : vector<1x16xf32> to vector<98x16xf32>
    %26 = arith.mulf %25, %24 : vector<98x16xf32>
    %c0_12 = arith.constant 0 : index
    %c0_13 = arith.constant 0 : index
    %27 = vector.load %arg4[%c0_12, %c0_13] : memref<1x16xf32, #tpu.memory_space<vmem>>, vector<1x16xf32>
    %28 = vector.broadcast %27 : vector<1x16xf32> to vector<98x16xf32>
    %29 = arith.addf %26, %28 : vector<98x16xf32>
    %cst_14 = arith.constant 0.000000e+00 : f32
    %30 = vector.broadcast %cst_14 : f32 to vector<98x16xf32>
    %31 = arith.maximumf %29, %30 : vector<98x16xf32>
    %c0_15 = arith.constant 0 : index
    %c0_16 = arith.constant 0 : index
    %32 = vector.load %arg5[%c0_15, %c0_16] : memref<98x16xf32, #tpu.memory_space<vmem>>, vector<98x16xf32>
    tpu.vector_store %arg5[%c0_15, %c0_16], %31 {strides = array<i32>} : memref<98x16xf32, #tpu.memory_space<vmem>>, vector<98x16xf32>,
    return
  }
}

module attributes {stable_mosaic.version = 11 : i64} {
  func.func @_matmul_bias_bn_relu_kernel(%arg0: memref<392x144xbf16, #tpu.memory_space<vmem>>, %arg1: memref<144x8xbf16, #tpu.memory_space<vmem>>, %arg2: memref<1x8xf32, #tpu.memory_space<vmem>>, %arg3: memref<1x8xf32, #tpu.memory_space<vmem>>, %arg4: memref<1x8xf32, #tpu.memory_space<vmem>>, %arg5: memref<392x8xf32, #tpu.memory_space<vmem>>) attributes {dimension_semantics = [], scalar_prefetch = 0 : i64, scratch_operands = 0 : i64, tpu.core_type = #tpu.core_type<tc>} {
    %c0 = arith.constant 0 : index
    %c0_0 = arith.constant 0 : index
    %0 = vector.load %arg0[%c0, %c0_0] : memref<392x144xbf16, #tpu.memory_space<vmem>>, vector<392x144xbf16>
    %c0_1 = arith.constant 0 : index
    %c0_2 = arith.constant 0 : index
    %1 = vector.load %arg1[%c0_1, %c0_2] : memref<144x8xbf16, #tpu.memory_space<vmem>>, vector<144x8xbf16>
    %cst = arith.constant dense<0.000000e+00> : vector<392x8xf32>
    %2 = tpu.matmul %0, %1, %cst {dimension_numbers = #tpu.dot_dimension_numbers<[1], [0], [0], [1], [0, 0, 1, 1], [], []>} : vector<392x144xbf16>, vector<144x8xbf16>, vector<392x8xf32> -> vector<392x8xf32>
    %c0_3 = arith.constant 0 : index
    %c0_4 = arith.constant 0 : index
    %3 = vector.load %arg2[%c0_3, %c0_4] : memref<1x8xf32, #tpu.memory_space<vmem>>, vector<1x8xf32>
    %4 = vector.broadcast %3 : vector<1x8xf32> to vector<392x8xf32>
    %5 = arith.addf %2, %4 : vector<392x8xf32>
    %cst_5 = arith.constant dense<0.000000e+00> : vector<8xf32>
    %6 = vector.multi_reduction <add>, %5, %cst_5 [0] : vector<392x8xf32> to vector<8xf32>
    %7 = vector.shape_cast %6 : vector<8xf32> to vector<1x8xf32>
    %cst_6 = arith.constant 0.00255102036 : f32
    %8 = vector.broadcast %cst_6 : f32 to vector<1x8xf32>
    %9 = arith.mulf %7, %8 : vector<1x8xf32>
    %10 = vector.broadcast %9 : vector<1x8xf32> to vector<392x8xf32>
    %11 = arith.subf %5, %10 : vector<392x8xf32>
    %12 = arith.mulf %11, %11 : vector<392x8xf32>
    %cst_7 = arith.constant dense<0.000000e+00> : vector<8xf32>
    %13 = vector.multi_reduction <add>, %12, %cst_7 [0] : vector<392x8xf32> to vector<8xf32>
    %14 = vector.shape_cast %13 : vector<8xf32> to vector<1x8xf32>
    %cst_8 = arith.constant 0.00255102036 : f32
    %15 = vector.broadcast %cst_8 : f32 to vector<1x8xf32>
    %16 = arith.mulf %14, %15 : vector<1x8xf32>
    %c0_9 = arith.constant 0 : index
    %c0_10 = arith.constant 0 : index
    %17 = vector.load %arg3[%c0_9, %c0_10] : memref<1x8xf32, #tpu.memory_space<vmem>>, vector<1x8xf32>
    %18 = vector.broadcast %9 : vector<1x8xf32> to vector<392x8xf32>
    %19 = arith.subf %5, %18 : vector<392x8xf32>
    %cst_11 = arith.constant 9.99999974E-6 : f32
    %20 = vector.broadcast %cst_11 : f32 to vector<1x8xf32>
    %21 = arith.addf %16, %20 : vector<1x8xf32>
    %22 = math.rsqrt %21 : vector<1x8xf32>
    %23 = vector.broadcast %22 : vector<1x8xf32> to vector<392x8xf32>
    %24 = arith.mulf %19, %23 : vector<392x8xf32>
    %25 = vector.broadcast %17 : vector<1x8xf32> to vector<392x8xf32>
    %26 = arith.mulf %25, %24 : vector<392x8xf32>
    %c0_12 = arith.constant 0 : index
    %c0_13 = arith.constant 0 : index
    %27 = vector.load %arg4[%c0_12, %c0_13] : memref<1x8xf32, #tpu.memory_space<vmem>>, vector<1x8xf32>
    %28 = vector.broadcast %27 : vector<1x8xf32> to vector<392x8xf32>
    %29 = arith.addf %26, %28 : vector<392x8xf32>
    %cst_14 = arith.constant 0.000000e+00 : f32
    %30 = vector.broadcast %cst_14 : f32 to vector<392x8xf32>
    %31 = arith.maximumf %29, %30 : vector<392x8xf32>
    %c0_15 = arith.constant 0 : index
    %c0_16 = arith.constant 0 : index
    %32 = vector.load %arg5[%c0_15, %c0_16] : memref<392x8xf32, #tpu.memory_space<vmem>>, vector<392x8xf32>
    tpu.vector_store %arg5[%c0_15, %c0_16], %31 {strides = array<i32>} : memref<392x8xf32, #tpu.memory_space<vmem>>, vector<392x8xf32>,
    return
  }
}

module attributes {stable_mosaic.version = 11 : i64} {
  func.func @_matmul_bias_act_kernel(%arg0: i32, %arg1: memref<784x72xbf16, #tpu.memory_space<vmem>>, %arg2: memref<72x3xbf16, #tpu.memory_space<vmem>>, %arg3: memref<1x3xf32, #tpu.memory_space<vmem>>, %arg4: memref<784x3xf32, #tpu.memory_space<vmem>>) attributes {dimension_semantics = [#tpu.dimension_semantics<parallel>], iteration_bounds = array<i64: 2>, scalar_prefetch = 0 : i64, scratch_operands = 0 : i64, tpu.core_type = #tpu.core_type<tc>, window_params = [{transform_indices = @transform_0, window_bounds = array<i64: 784, 72>}, {pipeline_mode = #tpu.pipeline_mode<synchronous>, transform_indices = @transform_1, window_bounds = array<i64: 72, 3>}, {pipeline_mode = #tpu.pipeline_mode<synchronous>, transform_indices = @transform_2, window_bounds = array<i64: 1, 3>}, {transform_indices = @transform_3, window_bounds = array<i64: 784, 3>}]} {
    %c0 = arith.constant 0 : index
    %c0_0 = arith.constant 0 : index
    %0 = vector.load %arg1[%c0, %c0_0] : memref<784x72xbf16, #tpu.memory_space<vmem>>, vector<784x72xbf16>
    %c0_1 = arith.constant 0 : index
    %c0_2 = arith.constant 0 : index
    %1 = vector.load %arg2[%c0_1, %c0_2] : memref<72x3xbf16, #tpu.memory_space<vmem>>, vector<72x3xbf16>
    %cst = arith.constant dense<0.000000e+00> : vector<784x3xf32>
    %2 = tpu.matmul %0, %1, %cst {dimension_numbers = #tpu.dot_dimension_numbers<[1], [0], [0], [1], [0, 0, 1, 1], [], []>} : vector<784x72xbf16>, vector<72x3xbf16>, vector<784x3xf32> -> vector<784x3xf32>
    %c0_3 = arith.constant 0 : index
    %c0_4 = arith.constant 0 : index
    %3 = vector.load %arg3[%c0_3, %c0_4] : memref<1x3xf32, #tpu.memory_space<vmem>>, vector<1x3xf32>
    %4 = vector.broadcast %3 : vector<1x3xf32> to vector<784x3xf32>
    %5 = arith.addf %2, %4 : vector<784x3xf32>
    %cst_5 = arith.constant 0.000000e+00 : f32
    %6 = vector.broadcast %cst_5 : f32 to vector<784x3xf32>
    %7 = arith.subf %6, %5 : vector<784x3xf32>
    %8 = math.exp %7 : vector<784x3xf32>
    %cst_6 = arith.constant 1.000000e+00 : f32
    %9 = vector.broadcast %cst_6 : f32 to vector<784x3xf32>
    %10 = arith.addf %9, %8 : vector<784x3xf32>
    %cst_7 = arith.constant 1.000000e+00 : f32
    %11 = vector.broadcast %cst_7 : f32 to vector<784x3xf32>
    %12 = arith.divf %11, %10 : vector<784x3xf32>
    %c0_8 = arith.constant 0 : index
    %c0_9 = arith.constant 0 : index
    %13 = vector.load %arg4[%c0_8, %c0_9] : memref<784x3xf32, #tpu.memory_space<vmem>>, vector<784x3xf32>
    tpu.vector_store %arg4[%c0_8, %c0_9], %12 {strides = array<i32>} : memref<784x3xf32, #tpu.memory_space<vmem>>, vector<784x3xf32>,
    return
  }
  func.func @transform_0(%arg0: i32) -> (i32, i32) {
    %c0_i32 = arith.constant 0 : i32
    %c0_i32_0 = arith.constant 0 : i32
    return %arg0, %c0_i32 : i32, i32
  }
  func.func @transform_1(%arg0: i32) -> (i32, i32) {
    %c0_i32 = arith.constant 0 : i32
    %c0_i32_0 = arith.constant 0 : i32
    %c0_i32_1 = arith.constant 0 : i32
    return %c0_i32, %c0_i32_0 : i32, i32
  }
  func.func @transform_2(%arg0: i32) -> (i32, i32) {
    %c0_i32 = arith.constant 0 : i32
    %c0_i32_0 = arith.constant 0 : i32
    %c0_i32_1 = arith.constant 0 : i32
    return %c0_i32, %c0_i32_0 : i32, i32
  }
  func.func @transform_3(%arg0: i32) -> (i32, i32) {
    %c0_i32 = arith.constant 0 : i32
    %c0_i32_0 = arith.constant 0 : i32
    return %arg0, %c0_i32 : i32, i32
  }
}

</mosaic_0001>

<llo_original>
// kernel: vae_forward.6
$region0: #{vae_forward.6}
  #allocation0 [shape = 'u32[]', space=smem, size = 0x4, offset = 0x4, fixed_abs, tag = 'smem constant byte address 0x4 - core index']
  #allocation1 [shape = 'u32[144,128]{1,0:T(1,128)}', space=vmem, size = 0x12000, scoped, tag = 'internal scratch']
  %s0 = inlined_call_operand.vmem [shape: bf16[392,27], index: 0, kind: input, shape index: {}]
  %s1 = inlined_call_operand.vmem [shape: bf16[27,8], index: 1, kind: input, shape index: {}]
  %s2 = inlined_call_operand.vmem [shape: f32[1,8], index: 2, kind: input, shape index: {}]
  %s3 = inlined_call_operand.vmem [shape: f32[392,8], index: 3, kind: output, shape index: {}]
  %s4 = sld [smem:[#allocation0]]
  $region22: #{vae_forward.6} parent=0
    _
  %s6 = ssub.s32 1, %s4
  %s7 = scalar_select 0, %s6, %s4
  // Predicated region
  $region2: #{vae_forward.6} parent=0 // pred_check
    _
  $region3: #{vae_forward.6} parent=0 // pred_check_branch
    %9 = sbr.rel (0) target = $region5
  $region4: #{vae_forward.6} parent=0 // pred_region
    _
  $region5: #{vae_forward.6} parent=0 // pred_fallthru
    _
  // Predicated region
  $region6: #{vae_forward.6} parent=0 // pred_check
    _
  $region7: #{vae_forward.6} parent=0 // pred_check_branch
    %11 = sbr.rel (0) target = $region9
  $region8: #{vae_forward.6} parent=0 // pred_region
    _
  $region9: #{vae_forward.6} parent=0 // pred_fallthru
    _
  // Predicated region
  $region10: #{vae_forward.6} parent=0 // pred_check
    _
  $region11: #{vae_forward.6} parent=0 // pred_check_branch
    %13 = sbr.rel (0) target = $region13
  $region12: #{vae_forward.6} parent=0 // pred_region
    _
  $region13: #{vae_forward.6} parent=0 // pred_fallthru
    _
  %v15 = vld [vmem:[%s0] sm:$0xf]
  %v16 = vld [vmem:[%s0 + $0x4] sm:$0xf]
  %v17 = vld [vmem:[%s0 + $0x8] sm:$0xf]
  %v18 = vld [vmem:[%s0 + $0xc] sm:$0xf]
  %v19 = vld [vmem:[%s0 + $0x10] sm:$0xf]
  %v20 = vld [vmem:[%s0 + $0x14] sm:$0xf]
  %v21 = vld [vmem:[%s0 + $0x18] sm:$0xf]
  %v22 = vld [vmem:[%s0 + $0x1c] sm:$0xf]
  %v23 = vld [vmem:[%s0 + $0x20] sm:$0xf]
  %v24 = vld [vmem:[%s0 + $0x24] sm:$0xf]
  %v25 = vld [vmem:[%s0 + $0x28] sm:$0xf]
  %v26 = vld [vmem:[%s0 + $0x2c] sm:$0xf]
  %v27 = vld [vmem:[%s0 + $0x30] sm:$0xf]
  %v28 = vld [vmem:[%s0 + $0x34] sm:$0xf]
  %v29 = vld [vmem:[%s0 + $0x38] sm:$0xf]
  %v30 = vld [vmem:[%s0 + $0x3c] sm:$0xf]
  %v31 = vld [vmem:[%s0 + $0x40] sm:$0xf]
  %v32 = vld [vmem:[%s0 + $0x44] sm:$0xf]
  %v33 = vld [vmem:[%s0 + $0x48] sm:$0xf]
  %v34 = vld [vmem:[%s0 + $0x4c] sm:$0xf]
  %v35 = vld [vmem:[%s0 + $0x50] sm:$0xf]
  %v36 = vld [vmem:[%s0 + $0x54] sm:$0xf]
  %v37 = vld [vmem:[%s0 + $0x58] sm:$0xf]
  %v38 = vld [vmem:[%s0 + $0x5c] sm:$0xf]
  %v39 = vld [vmem:[%s0 + $0x60] sm:$0xf]
  %v40 = vld [vmem:[%s0 + $0x64] sm:$0xf]
  %v41 = vld [vmem:[%s0 + $0x68] sm:$0xf]
  %v42 = vld [vmem:[%s0 + $0x6c] sm:$0xf]
  %v43 = vld [vmem:[%s0 + $0x70] sm:$0xf]
  %v44 = vld [vmem:[%s0 + $0x74] sm:$0xf]
  %v45 = vld [vmem:[%s0 + $0x78] sm:$0xf]
  %v46 = vld [vmem:[%s0 + $0x7c] sm:$0xf]
  %v47 = vld [vmem:[%s0 + $0x80] sm:$0xf]
  %v48 = vld [vmem:[%s0 + $0x84] sm:$0xf]
  %v49 = vld [vmem:[%s0 + $0x88] sm:$0xf]
  %v50 = vld [vmem:[%s0 + $0x8c] sm:$0xf]
  %v51 = vld [vmem:[%s0 + $0x90] sm:$0xf]
  %v52 = vld [vmem:[%s0 + $0x94] sm:$0xf]
  %v53 = vld [vmem:[%s0 + $0x98] sm:$0xf]
  %v54 = vld [vmem:[%s0 + $0x9c] sm:$0xf]
  %v55 = vld [vmem:[%s0 + $0xa0] sm:$0xf]
  %v56 = vld [vmem:[%s0 + $0xa4] sm:$0xf]
  %v57 = vld [vmem:[%s0 + $0xa8] sm:$0xf]
  %v58 = vld [vmem:[%s0 + $0xac] sm:$0xf]
  %v59 = vld [vmem:[%s0 + $0xb0] sm:$0xf]
  %v60 = vld [vmem:[%s0 + $0xb4] sm:$0xf]
  %v61 = vld [vmem:[%s0 + $0xb8] sm:$0xf]
  %v62 = vld [vmem:[%s0 + $0xbc] sm:$0xf]
  %v63 = vld [vmem:[%s0 + $0xc0] sm:$0xf]
  %v64 = vld [vmem:[%s1] sm:$0xf]
  %v65 = vld [vmem:[%s1 + $0x4] sm:$0xf]
  %v66 = vld [vmem:[%s1 + $0x8] sm:$0xf]
  %v67 = vld [vmem:[%s1 + $0xc] sm:$0x3]
  %v68 = vld [vmem:[%s2] sm:$0x1]
  %v70 = vlaneseq
  %v71 = vshrl.u32 %v70, 7
  %v72 = vsub.s32 0, %v71
  %v73 = vrot.slane %v68, %v72
  %v124 = vunpack.c.l.b16 %v15
  %v125 = vunpack.c.l.b16 %v16
  %v126 = vunpack.c.l.b16 %v17
  %v127 = vunpack.c.l.b16 %v18
  %v128 = vunpack.c.l.b16 %v19
  %v129 = vunpack.c.l.b16 %v20
  %v130 = vunpack.c.l.b16 %v21
  %v131 = vunpack.c.l.b16 %v22
  %v132 = vunpack.c.l.b16 %v23
  %v133 = vunpack.c.l.b16 %v24
  %v134 = vunpack.c.l.b16 %v25
  %v135 = vunpack.c.l.b16 %v26
  %v136 = vunpack.c.l.b16 %v27
  %v137 = vunpack.c.l.b16 %v28
  %v138 = vunpack.c.l.b16 %v29
  %v139 = vunpack.c.l.b16 %v30
  %v140 = vunpack.c.l.b16 %v31
  %v141 = vunpack.c.l.b16 %v32
  %v142 = vunpack.c.l.b16 %v33
  %v143 = vunpack.c.l.b16 %v34
  %v144 = vunpack.c.l.b16 %v35
  %v145 = vunpack.c.l.b16 %v36
  %v146 = vunpack.c.l.b16 %v37
  %v147 = vunpack.c.l.b16 %v38
  %v148 = vunpack.c.l.b16 %v39
  %v149 = vunpack.c.l.b16 %v40
  %v150 = vunpack.c.l.b16 %v41
  %v151 = vunpack.c.l.b16 %v42
  %v152 = vunpack.c.l.b16 %v43
  %v153 = vunpack.c.l.b16 %v44
  %v154 = vunpack.c.l.b16 %v45
  %v155 = vunpack.c.l.b16 %v46
  %v156 = vunpack.c.l.b16 %v47
  %v157 = vunpack.c.l.b16 %v48
  %v158 = vunpack.c.l.b16 %v49
  %v159 = vunpack.c.l.b16 %v50
  %v160 = vunpack.c.l.b16 %v51
  %v161 = vunpack.c.l.b16 %v52
  %v162 = vunpack.c.l.b16 %v53
  %v163 = vunpack.c.l.b16 %v54
  %v164 = vunpack.c.l.b16 %v55
  %v165 = vunpack.c.l.b16 %v56
  %v166 = vunpack.c.l.b16 %v57
  %v167 = vunpack.c.l.b16 %v58
  %v168 = vunpack.c.l.b16 %v59
  %v169 = vunpack.c.l.b16 %v60
  %v170 = vunpack.c.l.b16 %v61
  %v171 = vunpack.c.l.b16 %v62
  %v172 = vunpack.c.l.b16 %v63
  %v173 = vpack.c.b16 %v125, %v124
  %v174 = vpack.c.b16 %v127, %v126
  %v175 = vpack.c.b16 %v129, %v128
  %v176 = vpack.c.b16 %v131, %v130
  %v177 = vpack.c.b16 %v133, %v132
  %v178 = vpack.c.b16 %v135, %v134
  %v179 = vpack.c.b16 %v137, %v136
  %v180 = vpack.c.b16 %v139, %v138
  %v181 = vpack.c.b16 %v141, %v140
  %v182 = vpack.c.b16 %v143, %v142
  %v183 = vpack.c.b16 %v145, %v144
  %v184 = vpack.c.b16 %v147, %v146
  %v185 = vpack.c.b16 %v149, %v148
  %v186 = vpack.c.b16 %v151, %v150
  %v187 = vpack.c.b16 %v153, %v152
  %v188 = vpack.c.b16 %v155, %v154
  %v189 = vpack.c.b16 %v157, %v156
  %v190 = vpack.c.b16 %v159, %v158
  %v191 = vpack.c.b16 %v161, %v160
  %v192 = vpack.c.b16 %v163, %v162
  %v193 = vpack.c.b16 %v165, %v164
  %v194 = vpack.c.b16 %v167, %v166
  %v195 = vpack.c.b16 %v169, %v168
  %v196 = vpack.c.b16 %v171, %v170
  %v197 = vpack.c.b16 %v172, %v172
  %v202 = vunpack.c.l.b16 %v64
  %v203 = vunpack.c.l.b16 %v65
  %v204 = vunpack.c.l.b16 %v66
  %v205 = vunpack.c.l.b16 %v67
  %v206 = vpack.c.b16 %v203, %v202
  %v207 = vpack.c.b16 %v205, %v204
  %vm209 = vcmask 220160
  %v211 = vsel %vm209, %v173, 0
  %v214 = vsel %vm209, %v174, 0
  %v217 = vsel %vm209, %v175, 0
  %v220 = vsel %vm209, %v176, 0
  %v223 = vsel %vm209, %v177, 0
  %v226 = vsel %vm209, %v178, 0
  %v229 = vsel %vm209, %v179, 0
  %v232 = vsel %vm209, %v180, 0
  %v235 = vsel %vm209, %v181, 0
  %v238 = vsel %vm209, %v182, 0
  %v241 = vsel %vm209, %v183, 0
  %v244 = vsel %vm209, %v184, 0
  %v247 = vsel %vm209, %v185, 0
  %v250 = vsel %vm209, %v186, 0
  %v253 = vsel %vm209, %v187, 0
  %v256 = vsel %vm209, %v188, 0
  %v259 = vsel %vm209, %v189, 0
  %v262 = vsel %vm209, %v190, 0
  %v265 = vsel %vm209, %v191, 0
  %v268 = vsel %vm209, %v192, 0
  %v271 = vsel %vm209, %v193, 0
  %v274 = vsel %vm209, %v194, 0
  %v277 = vsel %vm209, %v195, 0
  %v280 = vsel %vm209, %v196, 0
  %v283 = vsel %vm209, %v197, 0
  %vm285 = vcmask 1044480
  %vm286 = vcmask 1045504
  %v287 = vsel %vm285, 4294967295, 65535
  %v288 = vsel %vm286, %v287, 0
  %v290 = vand.u32 %v207, %v288
  %292 = vmatprep.subr.bf16.mxu0 0
  %293 = vmatpush1.bf16.msra.mxu0 %v206
  %294 = vmatprep.subr.bf16.mxu0 0
  %295 = vmatpush1.bf16.msra.mxu0 %v290
  %296 = vmatprep.subr.bf16.mxu0 0
  %297 = vmatpush1.bf16.msra.mxu0 0
  %298 = vmatprep.subr.bf16.mxu0 0
  %299 = vmatpush1.bf16.msra.mxu0 0
  %300 = vmatprep.subr.bf16.mxu0 0
  %301 = vmatpush1.bf16.msra.mxu0 0
  %302 = vmatprep.subr.bf16.mxu0 0
  %303 = vmatpush1.bf16.msra.mxu0 0
  %304 = vmatprep.subr.bf16.mxu0 0
  %305 = vmatpush1.bf16.msra.mxu0 0
  %306 = vmatprep.subr.bf16.mxu0 0
  %307 = vmatpush1.bf16.msra.mxu0 0
  %308 = vmatprep.subr.bf16.mxu0 0
  %309 = vmatpush1.bf16.msra.mxu0 0
  %310 = vmatprep.subr.bf16.mxu0 0
  %311 = vmatpush1.bf16.msra.mxu0 0
  %312 = vmatprep.subr.bf16.mxu0 0
  %313 = vmatpush1.bf16.msra.mxu0 0
  %314 = vmatprep.subr.bf16.mxu0 0
  %315 = vmatpush1.bf16.msra.mxu0 0
  %316 = vmatprep.subr.bf16.mxu0 0
  %317 = vmatpush1.bf16.msra.mxu0 0
  %318 = vmatprep.subr.bf16.mxu0 0
  %319 = vmatpush1.bf16.msra.mxu0 0
  %320 = vmatprep.subr.bf16.mxu0 0
  %321 = vmatpush1.bf16.msra.mxu0 0
  %322 = vmatprep.subr.bf16.mxu0 0
  %323 = vmatpush1.bf16.msra.mxu0 0
  %324 = vmatprep.mubr.bf16.mxu0 0
  %325 = vmatmul.mubr.bf16.gmra.mrb[0].mxu0 %v211
  %v326 = vpop.f32.mrb[0].mxu0
  %v327 = vadd.f32 %v73, %v326
  %v328 = vpop.f32.mrb[0].mxu0
  %v329 = vpop.f32.mrb[0].mxu0
  %v330 = vadd.f32 %v73, %v329
  %v331 = vpop.f32.mrb[0].mxu0
  %332 = vmatprep.mubr.bf16.mxu0 0
  %333 = vmatmul.mubr.bf16.gmra.mrb[0].mxu0 %v214
  %v334 = vpop.f32.mrb[0].mxu0
  %v335 = vadd.f32 %v73, %v334
  %v336 = vpop.f32.mrb[0].mxu0
  %v337 = vpop.f32.mrb[0].mxu0
  %v338 = vadd.f32 %v73, %v337
  %v339 = vpop.f32.mrb[0].mxu0
  %340 = vmatprep.mubr.bf16.mxu0 0
  %341 = vmatmul.mubr.bf16.gmra.mrb[0].mxu0 %v217
  %v342 = vpop.f32.mrb[0].mxu0
  %v343 = vadd.f32 %v73, %v342
  %v344 = vpop.f32.mrb[0].mxu0
  %v345 = vpop.f32.mrb[0].mxu0
  %v346 = vadd.f32 %v73, %v345
  %v347 = vpop.f32.mrb[0].mxu0
  %348 = vmatprep.mubr.bf16.mxu0 0
  %349 = vmatmul.mubr.bf16.gmra.mrb[0].mxu0 %v220
  %v350 = vpop.f32.mrb[0].mxu0
  %v351 = vadd.f32 %v73, %v350
  %v352 = vpop.f32.mrb[0].mxu0
  %v353 = vpop.f32.mrb[0].mxu0
  %v354 = vadd.f32 %v73, %v353
  %v355 = vpop.f32.mrb[0].mxu0
  %356 = vmatprep.mubr.bf16.mxu0 0
  %357 = vmatmul.mubr.bf16.gmra.mrb[0].mxu0 %v223
  %v358 = vpop.f32.mrb[0].mxu0
  %v359 = vadd.f32 %v73, %v358
  %v360 = vpop.f32.mrb[0].mxu0
  %v361 = vpop.f32.mrb[0].mxu0
  %v362 = vadd.f32 %v73, %v361
  %v363 = vpop.f32.mrb[0].mxu0
  %364 = vmatprep.mubr.bf16.mxu0 0
  %365 = vmatmul.mubr.bf16.gmra.mrb[0].mxu0 %v226
  %v366 = vpop.f32.mrb[0].mxu0
  %v367 = vadd.f32 %v73, %v366
  %v368 = vpop.f32.mrb[0].mxu0
  %v369 = vpop.f32.mrb[0].mxu0
  %v370 = vadd.f32 %v73, %v369
  %v371 = vpop.f32.mrb[0].mxu0
  %372 = vmatprep.mubr.bf16.mxu0 0
  %373 = vmatmul.mubr.bf16.gmra.mrb[0].mxu0 %v229
  %v374 = vpop.f32.mrb[0].mxu0
  %v375 = vadd.f32 %v73, %v374
  %v376 = vpop.f32.mrb[0].mxu0
  %v377 = vpop.f32.mrb[0].mxu0
  %v378 = vadd.f32 %v73, %v377
  %v379 = vpop.f32.mrb[0].mxu0
  %380 = vmatprep.mubr.bf16.mxu0 0
  %381 = vmatmul.mubr.bf16.gmra.mrb[0].mxu0 %v232
  %v382 = vpop.f32.mrb[0].mxu0
  %v383 = vadd.f32 %v73, %v382
  %v384 = vpop.f32.mrb[0].mxu0
  %v385 = vpop.f32.mrb[0].mxu0
  %v386 = vadd.f32 %v73, %v385
  %v387 = vpop.f32.mrb[0].mxu0
  %388 = vmatprep.mubr.bf16.mxu0 0
  %389 = vmatmul.mubr.bf16.gmra.mrb[0].mxu0 %v235
  %v390 = vpop.f32.mrb[0].mxu0
  %v391 = vadd.f32 %v73, %v390
  %v392 = vpop.f32.mrb[0].mxu0
  %v393 = vpop.f32.mrb[0].mxu0
  %v394 = vadd.f32 %v73, %v393
  %v395 = vpop.f32.mrb[0].mxu0
  %396 = vmatprep.mubr.bf16.mxu0 0
  %397 = vmatmul.mubr.bf16.gmra.mrb[0].mxu0 %v238
  %v398 = vpop.f32.mrb[0].mxu0
  %v399 = vadd.f32 %v73, %v398
  %v400 = vpop.f32.mrb[0].mxu0
  %v401 = vpop.f32.mrb[0].mxu0
  %v402 = vadd.f32 %v73, %v401
  %v403 = vpop.f32.mrb[0].mxu0
  %404 = vmatprep.mubr.bf16.mxu0 0
  %405 = vmatmul.mubr.bf16.gmra.mrb[0].mxu0 %v241
  %v406 = vpop.f32.mrb[0].mxu0
  %v407 = vadd.f32 %v73, %v406
  %v408 = vpop.f32.mrb[0].mxu0
  %v409 = vpop.f32.mrb[0].mxu0
  %v410 = vadd.f32 %v73, %v409
  %v411 = vpop.f32.mrb[0].mxu0
  %412 = vmatprep.mubr.bf16.mxu0 0
  %413 = vmatmul.mubr.bf16.gmra.mrb[0].mxu0 %v244
  %v414 = vpop.f32.mrb[0].mxu0
  %v415 = vadd.f32 %v73, %v414
  %v416 = vpop.f32.mrb[0].mxu0
  %v417 = vpop.f32.mrb[0].mxu0
  %v418 = vadd.f32 %v73, %v417
  %v419 = vpop.f32.mrb[0].mxu0
  %420 = vmatprep.mubr.bf16.mxu0 0
  %421 = vmatmul.mubr.bf16.gmra.mrb[0].mxu0 %v247
  %v422 = vpop.f32.mrb[0].mxu0
  %v423 = vadd.f32 %v73, %v422
  %v424 = vpop.f32.mrb[0].mxu0
  %v425 = vpop.f32.mrb[0].mxu0
  %v426 = vadd.f32 %v73, %v425
  %v427 = vpop.f32.mrb[0].mxu0
  %428 = vmatprep.mubr.bf16.mxu0 0
  %429 = vmatmul.mubr.bf16.gmra.mrb[0].mxu0 %v250
  %v430 = vpop.f32.mrb[0].mxu0
  %v431 = vadd.f32 %v73, %v430
  %v432 = vpop.f32.mrb[0].mxu0
  %v433 = vpop.f32.mrb[0].mxu0
  %v434 = vadd.f32 %v73, %v433
  %v435 = vpop.f32.mrb[0].mxu0
  %436 = vmatprep.mubr.bf16.mxu0 0
  %437 = vmatmul.mubr.bf16.gmra.mrb[0].mxu0 %v253
  %v438 = vpop.f32.mrb[0].mxu0
  %v439 = vadd.f32 %v73, %v438
  %v440 = vpop.f32.mrb[0].mxu0
  %v441 = vpop.f32.mrb[0].mxu0
  %v442 = vadd.f32 %v73, %v441
  %v443 = vpop.f32.mrb[0].mxu0
  %444 = vmatprep.mubr.bf16.mxu0 0
  %445 = vmatmul.mubr.bf16.gmra.mrb[0].mxu0 %v256
  %v446 = vpop.f32.mrb[0].mxu0
  %v447 = vadd.f32 %v73, %v446
  %v448 = vpop.f32.mrb[0].mxu0
  %v449 = vpop.f32.mrb[0].mxu0
  %v450 = vadd.f32 %v73, %v449
  %v451 = vpop.f32.mrb[0].mxu0
  %452 = vmatprep.mubr.bf16.mxu0 0
  %453 = vmatmul.mubr.bf16.gmra.mrb[0].mxu0 %v259
  %v454 = vpop.f32.mrb[0].mxu0
  %v455 = vadd.f32 %v73, %v454
  %v456 = vpop.f32.mrb[0].mxu0
  %v457 = vpop.f32.mrb[0].mxu0
  %v458 = vadd.f32 %v73, %v457
  %v459 = vpop.f32.mrb[0].mxu0
  %460 = vmatprep.mubr.bf16.mxu0 0
  %461 = vmatmul.mubr.bf16.gmra.mrb[0].mxu0 %v262
  %v462 = vpop.f32.mrb[0].mxu0
  %v463 = vadd.f32 %v73, %v462
  %v464 = vpop.f32.mrb[0].mxu0
  %v465 = vpop.f32.mrb[0].mxu0
  %v466 = vadd.f32 %v73, %v465
  %v467 = vpop.f32.mrb[0].mxu0
  %468 = vmatprep.mubr.bf16.mxu0 0
  %469 = vmatmul.mubr.bf16.gmra.mrb[0].mxu0 %v265
  %v470 = vpop.f32.mrb[0].mxu0
  %v471 = vadd.f32 %v73, %v470
  %v472 = vpop.f32.mrb[0].mxu0
  %v473 = vpop.f32.mrb[0].mxu0
  %v474 = vadd.f32 %v73, %v473
  %v475 = vpop.f32.mrb[0].mxu0
  %476 = vmatprep.mubr.bf16.mxu0 0
  %477 = vmatmul.mubr.bf16.gmra.mrb[0].mxu0 %v268
  %v478 = vpop.f32.mrb[0].mxu0
  %v479 = vadd.f32 %v73, %v478
  %v480 = vpop.f32.mrb[0].mxu0
  %v481 = vpop.f32.mrb[0].mxu0
  %v482 = vadd.f32 %v73, %v481
  %v483 = vpop.f32.mrb[0].mxu0
  %484 = vmatprep.mubr.bf16.mxu0 0
  %485 = vmatmul.mubr.bf16.gmra.mrb[0].mxu0 %v271
  %v486 = vpop.f32.mrb[0].mxu0
  %v487 = vadd.f32 %v73, %v486
  %v488 = vpop.f32.mrb[0].mxu0
  %v489 = vpop.f32.mrb[0].mxu0
  %v490 = vadd.f32 %v73, %v489
  %v491 = vpop.f32.mrb[0].mxu0
  %492 = vmatprep.mubr.bf16.mxu0 0
  %493 = vmatmul.mubr.bf16.gmra.mrb[0].mxu0 %v274
  %v494 = vpop.f32.mrb[0].mxu0
  %v495 = vadd.f32 %v73, %v494
  %v496 = vpop.f32.mrb[0].mxu0
  %v497 = vpop.f32.mrb[0].mxu0
  %v498 = vadd.f32 %v73, %v497
  %v499 = vpop.f32.mrb[0].mxu0
  %500 = vmatprep.mubr.bf16.mxu0 0
  %501 = vmatmul.mubr.bf16.gmra.mrb[0].mxu0 %v277
  %v502 = vpop.f32.mrb[0].mxu0
  %v503 = vadd.f32 %v73, %v502
  %v504 = vpop.f32.mrb[0].mxu0
  %v505 = vpop.f32.mrb[0].mxu0
  %v506 = vadd.f32 %v73, %v505
  %v507 = vpop.f32.mrb[0].mxu0
  %508 = vmatprep.mubr.bf16.mxu0 0
  %509 = vmatmul.mubr.bf16.gmra.mrb[0].mxu0 %v280
  %v510 = vpop.f32.mrb[0].mxu0
  %v511 = vadd.f32 %v73, %v510
  %v512 = vpop.f32.mrb[0].mxu0
  %v513 = vpop.f32.mrb[0].mxu0
  %v514 = vadd.f32 %v73, %v513
  %v515 = vpop.f32.mrb[0].mxu0
  %516 = vmatprep.mubr.bf16.mxu0 0
  %517 = vmatmul.mubr.bf16.gmra.mrb[0].mxu0 %v283
  %v518 = vpop.f32.mrb[0].mxu0
  %v519 = vadd.f32 %v73, %v518
  %v520 = vpop.f32.mrb[0].mxu0
  %v521 = vpop.f32.mrb[0].mxu0
  %v522 = vpop.f32.mrb[0].mxu0
  %523 = vdwg.mxu0
  %v524 = vmax.f32 %v327, 0.0
  %v525 = vmax.f32 %v330, 0.0
  %v526 = vmax.f32 %v335, 0.0
  %v527 = vmax.f32 %v338, 0.0
  %v528 = vmax.f32 %v343, 0.0
  %v529 = vmax.f32 %v346, 0.0
  %v530 = vmax.f32 %v351, 0.0
  %v531 = vmax.f32 %v354, 0.0
  %v532 = vmax.f32 %v359, 0.0
  %v533 = vmax.f32 %v362, 0.0
  %v534 = vmax.f32 %v367, 0.0
  %v535 = vmax.f32 %v370, 0.0
  %v536 = vmax.f32 %v375, 0.0
  %v537 = vmax.f32 %v378, 0.0
  %v538 = vmax.f32 %v383, 0.0
  %v539 = vmax.f32 %v386, 0.0
  %v540 = vmax.f32 %v391, 0.0
  %v541 = vmax.f32 %v394, 0.0
  %v542 = vmax.f32 %v399, 0.0
  %v543 = vmax.f32 %v402, 0.0
  %v544 = vmax.f32 %v407, 0.0
  %v545 = vmax.f32 %v410, 0.0
  %v546 = vmax.f32 %v415, 0.0
  %v547 = vmax.f32 %v418, 0.0
  %v548 = vmax.f32 %v423, 0.0
  %v549 = vmax.f32 %v426, 0.0
  %v550 = vmax.f32 %v431, 0.0
  %v551 = vmax.f32 %v434, 0.0
  %v552 = vmax.f32 %v439, 0.0
  %v553 = vmax.f32 %v442, 0.0
  %v554 = vmax.f32 %v447, 0.0
  %v555 = vmax.f32 %v450, 0.0
  %v556 = vmax.f32 %v455, 0.0
  %v557 = vmax.f32 %v458, 0.0
  %v558 = vmax.f32 %v463, 0.0
  %v559 = vmax.f32 %v466, 0.0
  %v560 = vmax.f32 %v471, 0.0
  %v561 = vmax.f32 %v474, 0.0
  %v562 = vmax.f32 %v479, 0.0
  %v563 = vmax.f32 %v482, 0.0
  %v564 = vmax.f32 %v487, 0.0
  %v565 = vmax.f32 %v490, 0.0
  %v566 = vmax.f32 %v495, 0.0
  %v567 = vmax.f32 %v498, 0.0
  %v568 = vmax.f32 %v503, 0.0
  %v569 = vmax.f32 %v506, 0.0
  %v570 = vmax.f32 %v511, 0.0
  %v571 = vmax.f32 %v514, 0.0
  %v572 = vmax.f32 %v519, 0.0
  %vm573 = vcmask 64512
  %574 = vst.msk [vmem:[%s3] sm:$0xff] %vm573, %v524
  %575 = vst.msk [vmem:[%s3 + $0x8] sm:$0xff] %vm573, %v525
  %576 = vst.msk [vmem:[%s3 + $0x10] sm:$0xff] %vm573, %v526
  %577 = vst.msk [vmem:[%s3 + $0x18] sm:$0xff] %vm573, %v527
  %578 = vst.msk [vmem:[%s3 + $0x20] sm:$0xff] %vm573, %v528
  %579 = vst.msk [vmem:[%s3 + $0x28] sm:$0xff] %vm573, %v529
  %580 = vst.msk [vmem:[%s3 + $0x30] sm:$0xff] %vm573, %v530
  %581 = vst.msk [vmem:[%s3 + $0x38] sm:$0xff] %vm573, %v531
  %582 = vst.msk [vmem:[%s3 + $0x40] sm:$0xff] %vm573, %v532
  %583 = vst.msk [vmem:[%s3 + $0x48] sm:$0xff] %vm573, %v533
  %584 = vst.msk [vmem:[%s3 + $0x50] sm:$0xff] %vm573, %v534
  %585 = vst.msk [vmem:[%s3 + $0x58] sm:$0xff] %vm573, %v535
  %586 = vst.msk [vmem:[%s3 + $0x60] sm:$0xff] %vm573, %v536
  %587 = vst.msk [vmem:[%s3 + $0x68] sm:$0xff] %vm573, %v537
  %588 = vst.msk [vmem:[%s3 + $0x70] sm:$0xff] %vm573, %v538
  %589 = vst.msk [vmem:[%s3 + $0x78] sm:$0xff] %vm573, %v539
  %590 = vst.msk [vmem:[%s3 + $0x80] sm:$0xff] %vm573, %v540
  %591 = vst.msk [vmem:[%s3 + $0x88] sm:$0xff] %vm573, %v541
  %592 = vst.msk [vmem:[%s3 + $0x90] sm:$0xff] %vm573, %v542
  %593 = vst.msk [vmem:[%s3 + $0x98] sm:$0xff] %vm573, %v543
  %594 = vst.msk [vmem:[%s3 + $0xa0] sm:$0xff] %vm573, %v544
  %595 = vst.msk [vmem:[%s3 + $0xa8] sm:$0xff] %vm573, %v545
  %596 = vst.msk [vmem:[%s3 + $0xb0] sm:$0xff] %vm573, %v546
  %597 = vst.msk [vmem:[%s3 + $0xb8] sm:$0xff] %vm573, %v547
  %598 = vst.msk [vmem:[%s3 + $0xc0] sm:$0xff] %vm573, %v548
  %599 = vst.msk [vmem:[%s3 + $0xc8] sm:$0xff] %vm573, %v549
  %600 = vst.msk [vmem:[%s3 + $0xd0] sm:$0xff] %vm573, %v550
  %601 = vst.msk [vmem:[%s3 + $0xd8] sm:$0xff] %vm573, %v551
  %602 = vst.msk [vmem:[%s3 + $0xe0] sm:$0xff] %vm573, %v552
  %603 = vst.msk [vmem:[%s3 + $0xe8] sm:$0xff] %vm573, %v553
  %604 = vst.msk [vmem:[%s3 + $0xf0] sm:$0xff] %vm573, %v554
  %605 = vst.msk [vmem:[%s3 + $0xf8] sm:$0xff] %vm573, %v555
  %606 = vst.msk [vmem:[%s3 + $0x100] sm:$0xff] %vm573, %v556
  %607 = vst.msk [vmem:[%s3 + $0x108] sm:$0xff] %vm573, %v557
  %608 = vst.msk [vmem:[%s3 + $0x110] sm:$0xff] %vm573, %v558
  %609 = vst.msk [vmem:[%s3 + $0x118] sm:$0xff] %vm573, %v559
  %610 = vst.msk [vmem:[%s3 + $0x120] sm:$0xff] %vm573, %v560
  %611 = vst.msk [vmem:[%s3 + $0x128] sm:$0xff] %vm573, %v561
  %612 = vst.msk [vmem:[%s3 + $0x130] sm:$0xff] %vm573, %v562
  %613 = vst.msk [vmem:[%s3 + $0x138] sm:$0xff] %vm573, %v563
  %614 = vst.msk [vmem:[%s3 + $0x140] sm:$0xff] %vm573, %v564
  %615 = vst.msk [vmem:[%s3 + $0x148] sm:$0xff] %vm573, %v565
  %616 = vst.msk [vmem:[%s3 + $0x150] sm:$0xff] %vm573, %v566
  %617 = vst.msk [vmem:[%s3 + $0x158] sm:$0xff] %vm573, %v567
  %618 = vst.msk [vmem:[%s3 + $0x160] sm:$0xff] %vm573, %v568
  %619 = vst.msk [vmem:[%s3 + $0x168] sm:$0xff] %vm573, %v569
  %620 = vst.msk [vmem:[%s3 + $0x170] sm:$0xff] %vm573, %v570
  %621 = vst.msk [vmem:[%s3 + $0x178] sm:$0xff] %vm573, %v571
  %622 = vst.msk [vmem:[%s3 + $0x180] sm:$0xff] %vm573, %v572
  // Predicated region
  $region14: #{vae_forward.6} parent=0 // pred_check
    _
  $region15: #{vae_forward.6} parent=0 // pred_check_branch
    %624 = sbr.rel (0) target = $region17
  $region16: #{vae_forward.6} parent=0 // pred_region
    _
  $region17: #{vae_forward.6} parent=0 // pred_fallthru
    _
  // Predicated region
  $region18: #{vae_forward.6} parent=0 // pred_check
    _
  $region19: #{vae_forward.6} parent=0 // pred_check_branch
    %626 = sbr.rel (0) target = $region21
  $region20: #{vae_forward.6} parent=0 // pred_region
    _
  $region21: #{vae_forward.6} parent=0 // pred_fallthru
    _

// kernel: vae_forward.7
$region0: #{vae_forward.7}
  #allocation0 [shape = 'u32[]', space=smem, size = 0x4, offset = 0x4, fixed_abs, tag = 'smem constant byte address 0x4 - core index']
  #allocation1 [shape = 'u32[144,128]{1,0:T(1,128)}', space=vmem, size = 0x12000, scoped, tag = 'internal scratch']
  %s0 = inlined_call_operand.vmem [shape: bf16[98,72], index: 0, kind: input, shape index: {}]
  %s1 = inlined_call_operand.vmem [shape: bf16[72,16], index: 1, kind: input, shape index: {}]
  %s2 = inlined_call_operand.vmem [shape: f32[1,16], index: 2, kind: input, shape index: {}]
  %s3 = inlined_call_operand.vmem [shape: f32[1,16], index: 3, kind: input, shape index: {}]
  %s4 = inlined_call_operand.vmem [shape: f32[1,16], index: 4, kind: input, shape index: {}]
  %s5 = inlined_call_operand.vmem [shape: f32[98,16], index: 5, kind: output, shape index: {}]
  %s6 = sld [smem:[#allocation0]]
  $region30: #{vae_forward.7} parent=0
    _
  %s8 = ssub.s32 1, %s6
  %s9 = scalar_select 0, %s8, %s6
  // Predicated region
  $region2: #{vae_forward.7} parent=0 // pred_check
    _
  $region3: #{vae_forward.7} parent=0 // pred_check_branch
    %11 = sbr.rel (0) target = $region5
  $region4: #{vae_forward.7} parent=0 // pred_region
    _
  $region5: #{vae_forward.7} parent=0 // pred_fallthru
    _
  // Predicated region
  $region6: #{vae_forward.7} parent=0 // pred_check
    _
  $region7: #{vae_forward.7} parent=0 // pred_check_branch
    %13 = sbr.rel (0) target = $region9
  $region8: #{vae_forward.7} parent=0 // pred_region
    _
  $region9: #{vae_forward.7} parent=0 // pred_fallthru
    _
  // Predicated region
  $region10: #{vae_forward.7} parent=0 // pred_check
    _
  $region11: #{vae_forward.7} parent=0 // pred_check_branch
    %15 = sbr.rel (0) target = $region13
  $region12: #{vae_forward.7} parent=0 // pred_region
    _
  $region13: #{vae_forward.7} parent=0 // pred_fallthru
    _
  // Predicated region
  $region14: #{vae_forward.7} parent=0 // pred_check
    _
  $region15: #{vae_forward.7} parent=0 // pred_check_branch
    %17 = sbr.rel (0) target = $region17
  $region16: #{vae_forward.7} parent=0 // pred_region
    _
  $region17: #{vae_forward.7} parent=0 // pred_fallthru
    _
  // Predicated region
  $region18: #{vae_forward.7} parent=0 // pred_check
    _
  $region19: #{vae_forward.7} parent=0 // pred_check_branch
    %19 = sbr.rel (0) target = $region21
  $region20: #{vae_forward.7} parent=0 // pred_region
    _
  $region21: #{vae_forward.7} parent=0 // pred_fallthru
    _
  %v21 = vld [vmem:[%s0] sm:$0xf]
  %v22 = vld [vmem:[%s0 + $0x4] sm:$0xf]
  %v23 = vld [vmem:[%s0 + $0x8] sm:$0xf]
  %v24 = vld [vmem:[%s0 + $0xc] sm:$0xf]
  %v25 = vld [vmem:[%s0 + $0x10] sm:$0xf]
  %v26 = vld [vmem:[%s0 + $0x14] sm:$0xf]
  %v27 = vld [vmem:[%s0 + $0x18] sm:$0xf]
  %v28 = vld [vmem:[%s0 + $0x1c] sm:$0xf]
  %v29 = vld [vmem:[%s0 + $0x20] sm:$0xf]
  %v30 = vld [vmem:[%s0 + $0x24] sm:$0xf]
  %v31 = vld [vmem:[%s0 + $0x28] sm:$0xf]
  %v32 = vld [vmem:[%s0 + $0x2c] sm:$0xf]
  %v33 = vld [vmem:[%s0 + $0x30] sm:$0x1]
  %v34 = vld [vmem:[%s1] sm:$0xf]
  %v35 = vld [vmem:[%s1 + $0x4] sm:$0xf]
  %v36 = vld [vmem:[%s1 + $0x8] sm:$0xf]
  %v37 = vld [vmem:[%s1 + $0xc] sm:$0xf]
  %v38 = vld [vmem:[%s1 + $0x10] sm:$0xf]
  %v39 = vld [vmem:[%s1 + $0x14] sm:$0xf]
  %v40 = vld [vmem:[%s1 + $0x18] sm:$0xf]
  %v41 = vld [vmem:[%s1 + $0x1c] sm:$0xf]
  %v42 = vld [vmem:[%s1 + $0x20] sm:$0xf]
  %v43 = vld [vmem:[%s2] sm:$0x1]
  %v45 = vlaneseq
  %v46 = vshrl.u32 %v45, 7
  %v47 = vsub.s32 0, %v46
  %v48 = vrot.slane %v43, %v47
  %v63 = vunpack.c.l.b16 %v21
  %v64 = vunpack.c.l.b16 %v22
  %v65 = vunpack.c.l.b16 %v23
  %v66 = vunpack.c.l.b16 %v24
  %v67 = vunpack.c.l.b16 %v25
  %v68 = vunpack.c.l.b16 %v26
  %v69 = vunpack.c.l.b16 %v27
  %v70 = vunpack.c.l.b16 %v28
  %v71 = vunpack.c.l.b16 %v29
  %v72 = vunpack.c.l.b16 %v30
  %v73 = vunpack.c.l.b16 %v31
  %v74 = vunpack.c.l.b16 %v32
  %v75 = vunpack.c.l.b16 %v33
  %v76 = vpack.c.b16 %v64, %v63
  %v77 = vpack.c.b16 %v66, %v65
  %v78 = vpack.c.b16 %v68, %v67
  %v79 = vpack.c.b16 %v70, %v69
  %v80 = vpack.c.b16 %v72, %v71
  %v81 = vpack.c.b16 %v74, %v73
  %v82 = vpack.c.b16 %v75, %v75
  %v92 = vunpack.c.l.b16 %v34
  %v93 = vunpack.c.l.b16 %v35
  %v94 = vunpack.c.l.b16 %v36
  %v95 = vunpack.c.l.b16 %v37
  %v96 = vunpack.c.l.b16 %v38
  %v97 = vunpack.c.l.b16 %v39
  %v98 = vunpack.c.l.b16 %v40
  %v99 = vunpack.c.l.b16 %v41
  %v100 = vunpack.c.l.b16 %v42
  %v101 = vpack.c.b16 %v93, %v92
  %v102 = vpack.c.b16 %v95, %v94
  %v103 = vpack.c.b16 %v97, %v96
  %v104 = vpack.c.b16 %v99, %v98
  %v105 = vpack.c.b16 %v100, %v100
  %vm110 = vcmask 588800
  %v112 = vsel %vm110, %v76, 0
  %v115 = vsel %vm110, %v77, 0
  %v118 = vsel %vm110, %v78, 0
  %v121 = vsel %vm110, %v79, 0
  %v124 = vsel %vm110, %v80, 0
  %v127 = vsel %vm110, %v81, 0
  %v130 = vsel %vm110, %v82, 0
  %vm132 = vcmask 1043456
  %v134 = vsel %vm132, %v105, 0
  %136 = vmatprep.subr.bf16.mxu0 0
  %137 = vmatpush1.bf16.msra.mxu0 %v101
  %138 = vmatprep.subr.bf16.mxu0 0
  %139 = vmatpush1.bf16.msra.mxu0 %v102
  %140 = vmatprep.subr.bf16.mxu0 0
  %141 = vmatpush1.bf16.msra.mxu0 %v103
  %142 = vmatprep.subr.bf16.mxu0 0
  %143 = vmatpush1.bf16.msra.mxu0 %v104
  %144 = vmatprep.subr.bf16.mxu0 0
  %145 = vmatpush1.bf16.msra.mxu0 %v134
  %146 = vmatprep.subr.bf16.mxu0 0
  %147 = vmatpush1.bf16.msra.mxu0 0
  %148 = vmatprep.subr.bf16.mxu0 0
  %149 = vmatpush1.bf16.msra.mxu0 0
  %150 = vmatprep.subr.bf16.mxu0 0
  %151 = vmatpush1.bf16.msra.mxu0 0
  %152 = vmatprep.subr.bf16.mxu0 0
  %153 = vmatpush1.bf16.msra.mxu0 0
  %154 = vmatprep.subr.bf16.mxu0 0
  %155 = vmatpush1.bf16.msra.mxu0 0
  %156 = vmatprep.subr.bf16.mxu0 0
  %157 = vmatpush1.bf16.msra.mxu0 0
  %158 = vmatprep.subr.bf16.mxu0 0
  %159 = vmatpush1.bf16.msra.mxu0 0
  %160 = vmatprep.subr.bf16.mxu0 0
  %161 = vmatpush1.bf16.msra.mxu0 0
  %162 = vmatprep.subr.bf16.mxu0 0
  %163 = vmatpush1.bf16.msra.mxu0 0
  %164 = vmatprep.subr.bf16.mxu0 0
  %165 = vmatpush1.bf16.msra.mxu0 0
  %166 = vmatprep.subr.bf16.mxu0 0
  %167 = vmatpush1.bf16.msra.mxu0 0
  %168 = vmatprep.mubr.bf16.mxu0 0
  %169 = vmatmul.mubr.bf16.gmra.mrb[0].mxu0 %v112
  %v170 = vpop.f32.mrb[0].mxu0
  %v171 = vadd.f32 %v48, %v170
  %v172 = vpop.f32.mrb[0].mxu0
  %v173 = vpop.f32.mrb[0].mxu0
  %v174 = vadd.f32 %v48, %v173
  %v175 = vpop.f32.mrb[0].mxu0
  %176 = vmatprep.mubr.bf16.mxu0 0
  %177 = vmatmul.mubr.bf16.gmra.mrb[0].mxu0 %v115
  %v178 = vpop.f32.mrb[0].mxu0
  %v179 = vadd.f32 %v48, %v178
  %v180 = vpop.f32.mrb[0].mxu0
  %v181 = vpop.f32.mrb[0].mxu0
  %v182 = vadd.f32 %v48, %v181
  %v183 = vpop.f32.mrb[0].mxu0
  %184 = vmatprep.mubr.bf16.mxu0 0
  %185 = vmatmul.mubr.bf16.gmra.mrb[0].mxu0 %v118
  %v186 = vpop.f32.mrb[0].mxu0
  %v187 = vadd.f32 %v48, %v186
  %v188 = vpop.f32.mrb[0].mxu0
  %v189 = vpop.f32.mrb[0].mxu0
  %v190 = vadd.f32 %v48, %v189
  %v191 = vpop.f32.mrb[0].mxu0
  %192 = vmatprep.mubr.bf16.mxu0 0
  %193 = vmatmul.mubr.bf16.gmra.mrb[0].mxu0 %v121
  %v194 = vpop.f32.mrb[0].mxu0
  %v195 = vadd.f32 %v48, %v194
  %v196 = vpop.f32.mrb[0].mxu0
  %v197 = vpop.f32.mrb[0].mxu0
  %v198 = vadd.f32 %v48, %v197
  %v199 = vpop.f32.mrb[0].mxu0
  %200 = vmatprep.mubr.bf16.mxu0 0
  %201 = vmatmul.mubr.bf16.gmra.mrb[0].mxu0 %v124
  %v202 = vpop.f32.mrb[0].mxu0
  %v203 = vadd.f32 %v48, %v202
  %v204 = vpop.f32.mrb[0].mxu0
  %v205 = vpop.f32.mrb[0].mxu0
  %v206 = vadd.f32 %v48, %v205
  %v207 = vpop.f32.mrb[0].mxu0
  %208 = vmatprep.mubr.bf16.mxu0 0
  %209 = vmatmul.mubr.bf16.gmra.mrb[0].mxu0 %v127
  %v210 = vpop.f32.mrb[0].mxu0
  %v211 = vadd.f32 %v48, %v210
  %v212 = vpop.f32.mrb[0].mxu0
  %v213 = vpop.f32.mrb[0].mxu0
  %v214 = vadd.f32 %v48, %v213
  %v215 = vpop.f32.mrb[0].mxu0
  %216 = vmatprep.mubr.bf16.mxu0 0
  %217 = vmatmul.mubr.bf16.gmra.mrb[0].mxu0 %v130
  %v218 = vpop.f32.mrb[0].mxu0
  %v219 = vadd.f32 %v48, %v218
  %v220 = vpop.f32.mrb[0].mxu0
  %v221 = vpop.f32.mrb[0].mxu0
  %v222 = vpop.f32.mrb[0].mxu0
  %223 = vdwg.mxu0
  %vm224 = vcmask 130048
  %v225 = vsel %vm224, %v171, 0.0
  %v226 = vsel %vm224, %v174, 0.0
  %v227 = vadd.f32 %v225, %v226
  %v228 = vsel %vm224, %v179, 0.0
  %v229 = vadd.f32 %v227, %v228
  %v230 = vsel %vm224, %v182, 0.0
  %v231 = vadd.f32 %v229, %v230
  %v232 = vsel %vm224, %v187, 0.0
  %v233 = vadd.f32 %v231, %v232
  %v234 = vsel %vm224, %v190, 0.0
  %v235 = vadd.f32 %v233, %v234
  %v236 = vsel %vm224, %v195, 0.0
  %v237 = vadd.f32 %v235, %v236
  %v238 = vsel %vm224, %v198, 0.0
  %v239 = vadd.f32 %v237, %v238
  %v240 = vsel %vm224, %v203, 0.0
  %v241 = vadd.f32 %v239, %v240
  %v242 = vsel %vm224, %v206, 0.0
  %v243 = vadd.f32 %v241, %v242
  %v244 = vsel %vm224, %v211, 0.0
  %v245 = vadd.f32 %v243, %v244
  %v246 = vsel %vm224, %v214, 0.0
  %v247 = vadd.f32 %v245, %v246
  %vm248 = vcmask 123904
  %v249 = vsel %vm248, %v219, 0.0
  %v250 = vadd.f32 %v247, %v249
  %v251 = vrot.slane %v250, 4
  %v252 = vadd.f32 %v250, %v251
  %v253 = vrot.slane %v252, 2
  %v254 = vadd.f32 %v252, %v253
  %v255 = vrot.slane %v254, 1
  %v256 = vadd.f32 %v254, %v255
  %v257 = vmul.f32 %v256, 0.010204081
  %v258 = vsub.f32 %v171, %v257
  %v259 = vsub.f32 %v174, %v257
  %v260 = vsub.f32 %v179, %v257
  %v261 = vsub.f32 %v182, %v257
  %v262 = vsub.f32 %v187, %v257
  %v263 = vsub.f32 %v190, %v257
  %v264 = vsub.f32 %v195, %v257
  %v265 = vsub.f32 %v198, %v257
  %v266 = vsub.f32 %v203, %v257
  %v267 = vsub.f32 %v206, %v257
  %v268 = vsub.f32 %v211, %v257
  %v269 = vsub.f32 %v214, %v257
  %v270 = vsub.f32 %v219, %v257
  %v271 = vmul.f32 %v258, %v258
  %v272 = vmul.f32 %v259, %v259
  %v273 = vmul.f32 %v260, %v260
  %v274 = vmul.f32 %v261, %v261
  %v275 = vmul.f32 %v262, %v262
  %v276 = vmul.f32 %v263, %v263
  %v277 = vmul.f32 %v264, %v264
  %v278 = vmul.f32 %v265, %v265
  %v279 = vmul.f32 %v266, %v266
  %v280 = vmul.f32 %v267, %v267
  %v281 = vmul.f32 %v268, %v268
  %v282 = vmul.f32 %v269, %v269
  %v283 = vmul.f32 %v270, %v270
  %v284 = vsel %vm224, %v271, 0.0
  %v285 = vsel %vm224, %v272, 0.0
  %v286 = vadd.f32 %v284, %v285
  %v287 = vsel %vm224, %v273, 0.0
  %v288 = vadd.f32 %v286, %v287
  %v289 = vsel %vm224, %v274, 0.0
  %v290 = vadd.f32 %v288, %v289
  %v291 = vsel %vm224, %v275, 0.0
  %v292 = vadd.f32 %v290, %v291
  %v293 = vsel %vm224, %v276, 0.0
  %v294 = vadd.f32 %v292, %v293
  %v295 = vsel %vm224, %v277, 0.0
  %v296 = vadd.f32 %v294, %v295
  %v297 = vsel %vm224, %v278, 0.0
  %v298 = vadd.f32 %v296, %v297
  %v299 = vsel %vm224, %v279, 0.0
  %v300 = vadd.f32 %v298, %v299
  %v301 = vsel %vm224, %v280, 0.0
  %v302 = vadd.f32 %v300, %v301
  %v303 = vsel %vm224, %v281, 0.0
  %v304 = vadd.f32 %v302, %v303
  %v305 = vsel %vm224, %v282, 0.0
  %v306 = vadd.f32 %v304, %v305
  %v307 = vsel %vm248, %v283, 0.0
  %v308 = vadd.f32 %v306, %v307
  %v309 = vrot.slane %v308, 4
  %v310 = vadd.f32 %v308, %v309
  %v311 = vrot.slane %v310, 2
  %v312 = vadd.f32 %v310, %v311
  %v313 = vrot.slane %v312, 1
  %v314 = vadd.f32 %v312, %v313
  %v315 = vmul.f32 %v314, 0.010204081
  %v316 = vld [vmem:[%s3] sm:$0x1]
  %v317 = vadd.f32 %v315, 1e-05
  %v318 = vrsqrt.pop %v317
  %v319 = vmul.f32 %v258, %v318
  %v320 = vmul.f32 %v259, %v318
  %v321 = vmul.f32 %v260, %v318
  %v322 = vmul.f32 %v261, %v318
  %v323 = vmul.f32 %v262, %v318
  %v324 = vmul.f32 %v263, %v318
  %v325 = vmul.f32 %v264, %v318
  %v326 = vmul.f32 %v265, %v318
  %v327 = vmul.f32 %v266, %v318
  %v328 = vmul.f32 %v267, %v318
  %v329 = vmul.f32 %v268, %v318
  %v330 = vmul.f32 %v269, %v318
  %v331 = vmul.f32 %v270, %v318
  %v333 = vlaneseq
  %v334 = vshrl.u32 %v333, 7
  %v335 = vsub.s32 0, %v334
  %v336 = vrot.slane %v316, %v335
  %v338 = vmul.f32 %v336, %v319
  %v339 = vmul.f32 %v336, %v320
  %v340 = vmul.f32 %v336, %v321
  %v341 = vmul.f32 %v336, %v322
  %v342 = vmul.f32 %v336, %v323
  %v343 = vmul.f32 %v336, %v324
  %v344 = vmul.f32 %v336, %v325
  %v345 = vmul.f32 %v336, %v326
  %v346 = vmul.f32 %v336, %v327
  %v347 = vmul.f32 %v336, %v328
  %v348 = vmul.f32 %v336, %v329
  %v349 = vmul.f32 %v336, %v330
  %v350 = vmul.f32 %v336, %v331
  %v351 = vld [vmem:[%s4] sm:$0x1]
  %v353 = vlaneseq
  %v354 = vshrl.u32 %v353, 7
  %v355 = vsub.s32 0, %v354
  %v356 = vrot.slane %v351, %v355
  %v358 = vadd.f32 %v338, %v356
  %v359 = vadd.f32 %v339, %v356
  %v360 = vadd.f32 %v340, %v356
  %v361 = vadd.f32 %v341, %v356
  %v362 = vadd.f32 %v342, %v356
  %v363 = vadd.f32 %v343, %v356
  %v364 = vadd.f32 %v344, %v356
  %v365 = vadd.f32 %v345, %v356
  %v366 = vadd.f32 %v346, %v356
  %v367 = vadd.f32 %v347, %v356
  %v368 = vadd.f32 %v348, %v356
  %v369 = vadd.f32 %v349, %v356
  %v370 = vadd.f32 %v350, %v356
  %v371 = vmax.f32 %v358, 0.0
  %v372 = vmax.f32 %v359, 0.0
  %v373 = vmax.f32 %v360, 0.0
  %v374 = vmax.f32 %v361, 0.0
  %v375 = vmax.f32 %v362, 0.0
  %v376 = vmax.f32 %v363, 0.0
  %v377 = vmax.f32 %v364, 0.0
  %v378 = vmax.f32 %v365, 0.0
  %v379 = vmax.f32 %v366, 0.0
  %v380 = vmax.f32 %v367, 0.0
  %v381 = vmax.f32 %v368, 0.0
  %v382 = vmax.f32 %v369, 0.0
  %v383 = vmax.f32 %v370, 0.0
  %384 = vst.msk [vmem:[%s5] sm:$0xff] %vm224, %v371
  %385 = vst.msk [vmem:[%s5 + $0x8] sm:$0xff] %vm224, %v372
  %386 = vst.msk [vmem:[%s5 + $0x10] sm:$0xff] %vm224, %v373
  %387 = vst.msk [vmem:[%s5 + $0x18] sm:$0xff] %vm224, %v374
  %388 = vst.msk [vmem:[%s5 + $0x20] sm:$0xff] %vm224, %v375
  %389 = vst.msk [vmem:[%s5 + $0x28] sm:$0xff] %vm224, %v376
  %390 = vst.msk [vmem:[%s5 + $0x30] sm:$0xff] %vm224, %v377
  %391 = vst.msk [vmem:[%s5 + $0x38] sm:$0xff] %vm224, %v378
  %392 = vst.msk [vmem:[%s5 + $0x40] sm:$0xff] %vm224, %v379
  %393 = vst.msk [vmem:[%s5 + $0x48] sm:$0xff] %vm224, %v380
  %394 = vst.msk [vmem:[%s5 + $0x50] sm:$0xff] %vm224, %v381
  %395 = vst.msk [vmem:[%s5 + $0x58] sm:$0xff] %vm224, %v382
  %396 = vst.msk [vmem:[%s5 + $0x60] sm:$0x3] %vm248, %v383
  // Predicated region
  $region22: #{vae_forward.7} parent=0 // pred_check
    _
  $region23: #{vae_forward.7} parent=0 // pred_check_branch
    %398 = sbr.rel (0) target = $region25
  $region24: #{vae_forward.7} parent=0 // pred_region
    _
  $region25: #{vae_forward.7} parent=0 // pred_fallthru
    _
  // Predicated region
  $region26: #{vae_forward.7} parent=0 // pred_check
    _
  $region27: #{vae_forward.7} parent=0 // pred_check_branch
    %400 = sbr.rel (0) target = $region29
  $region28: #{vae_forward.7} parent=0 // pred_region
    _
  $region29: #{vae_forward.7} parent=0 // pred_fallthru
    _

// kernel: vae_forward.8
$region0: #{vae_forward.8}
  #allocation0 [shape = 'u32[]', space=smem, size = 0x4, offset = 0x4, fixed_abs, tag = 'smem constant byte address 0x4 - core index']
  #allocation1 [shape = 'u32[144,128]{1,0:T(1,128)}', space=vmem, size = 0x12000, scoped, tag = 'internal scratch']
  #allocation2 [shape = 'f32[18,32]{1,0:T(8,128)}', space=vmem, size = 0x3000, scoped, tag = 'scratch operand']
  %s0 = inlined_call_operand.vmem [shape: bf16[18,144], index: 0, kind: input, shape index: {}]
  %s1 = inlined_call_operand.vmem [shape: bf16[144,32], index: 1, kind: input, shape index: {}]
  %s2 = inlined_call_operand.vmem [shape: f32[1,32], index: 2, kind: input, shape index: {}]
  %s3 = inlined_call_operand.vmem [shape: bf16[288,128], index: 3, kind: input, shape index: {}]
  %s4 = inlined_call_operand.vmem [shape: f32[1,128], index: 4, kind: input, shape index: {}]
  %s5 = inlined_call_operand.vmem [shape: bf16[128,4], index: 5, kind: input, shape index: {}]
  %s6 = inlined_call_operand.vmem [shape: f32[1,4], index: 6, kind: input, shape index: {}]
  %s7 = inlined_call_operand.vmem [shape: bf16[128,4], index: 7, kind: input, shape index: {}]
  %s8 = inlined_call_operand.vmem [shape: f32[1,4], index: 8, kind: input, shape index: {}]
  %s9 = inlined_call_operand.vmem [shape: f32[2,4], index: 9, kind: input, shape index: {}]
  %s10 = inlined_call_operand.vmem [shape: bf16[4,128], index: 10, kind: input, shape index: {}]
  %s11 = inlined_call_operand.vmem [shape: f32[1,128], index: 11, kind: input, shape index: {}]
  %s12 = inlined_call_operand.vmem [shape: bf16[128,288], index: 12, kind: input, shape index: {}]
  %s13 = inlined_call_operand.vmem [shape: f32[1,288], index: 13, kind: input, shape index: {}]
  %s14 = inlined_call_operand.vmem [shape: f32[2,288], index: 14, kind: output, shape index: {}]
  %s15 = sld [smem:[#allocation0]]
  $region66: #{vae_forward.8} parent=0
    _
  %s17 = ssub.s32 1, %s15
  %s18 = scalar_select 0, %s17, %s15
  // Predicated region
  $region2: #{vae_forward.8} parent=0 // pred_check
    _
  $region3: #{vae_forward.8} parent=0 // pred_check_branch
    %20 = sbr.rel (0) target = $region5
  $region4: #{vae_forward.8} parent=0 // pred_region
    _
  $region5: #{vae_forward.8} parent=0 // pred_fallthru
    _
  // Predicated region
  $region6: #{vae_forward.8} parent=0 // pred_check
    _
  $region7: #{vae_forward.8} parent=0 // pred_check_branch
    %22 = sbr.rel (0) target = $region9
  $region8: #{vae_forward.8} parent=0 // pred_region
    _
  $region9: #{vae_forward.8} parent=0 // pred_fallthru
    _
  // Predicated region
  $region10: #{vae_forward.8} parent=0 // pred_check
    _
  $region11: #{vae_forward.8} parent=0 // pred_check_branch
    %24 = sbr.rel (0) target = $region13
  $region12: #{vae_forward.8} parent=0 // pred_region
    _
  $region13: #{vae_forward.8} parent=0 // pred_fallthru
    _
  // Predicated region
  $region14: #{vae_forward.8} parent=0 // pred_check
    _
  $region15: #{vae_forward.8} parent=0 // pred_check_branch
    %26 = sbr.rel (0) target = $region17
  $region16: #{vae_forward.8} parent=0 // pred_region
    _
  $region17: #{vae_forward.8} parent=0 // pred_fallthru
    _
  // Predicated region
  $region18: #{vae_forward.8} parent=0 // pred_check
    _
  $region19: #{vae_forward.8} parent=0 // pred_check_branch
    %28 = sbr.rel (0) target = $region21
  $region20: #{vae_forward.8} parent=0 // pred_region
    _
  $region21: #{vae_forward.8} parent=0 // pred_fallthru
    _
  // Predicated region
  $region22: #{vae_forward.8} parent=0 // pred_check
    _
  $region23: #{vae_forward.8} parent=0 // pred_check_branch
    %30 = sbr.rel (0) target = $region25
  $region24: #{vae_forward.8} parent=0 // pred_region
    _
  $region25: #{vae_forward.8} parent=0 // pred_fallthru
    _
  // Predicated region
  $region26: #{vae_forward.8} parent=0 // pred_check
    _
  $region27: #{vae_forward.8} parent=0 // pred_check_branch
    %32 = sbr.rel (0) target = $region29
  $region28: #{vae_forward.8} parent=0 // pred_region
    _
  $region29: #{vae_forward.8} parent=0 // pred_fallthru
    _
  // Predicated region
  $region30: #{vae_forward.8} parent=0 // pred_check
    _
  $region31: #{vae_forward.8} parent=0 // pred_check_branch
    %34 = sbr.rel (0) target = $region33
  $region32: #{vae_forward.8} parent=0 // pred_region
    _
  $region33: #{vae_forward.8} parent=0 // pred_fallthru
    _
  // Predicated region
  $region34: #{vae_forward.8} parent=0 // pred_check
    _
  $region35: #{vae_forward.8} parent=0 // pred_check_branch
    %36 = sbr.rel (0) target = $region37
  $region36: #{vae_forward.8} parent=0 // pred_region
    _
  $region37: #{vae_forward.8} parent=0 // pred_fallthru
    _
  // Predicated region
  $region38: #{vae_forward.8} parent=0 // pred_check
    _
  $region39: #{vae_forward.8} parent=0 // pred_check_branch
    %38 = sbr.rel (0) target = $region41
  $region40: #{vae_forward.8} parent=0 // pred_region
    _
  $region41: #{vae_forward.8} parent=0 // pred_fallthru
    _
  // Predicated region
  $region42: #{vae_forward.8} parent=0 // pred_check
    _
  $region43: #{vae_forward.8} parent=0 // pred_check_branch
    %40 = sbr.rel (0) target = $region45
  $region44: #{vae_forward.8} parent=0 // pred_region
    _
  $region45: #{vae_forward.8} parent=0 // pred_fallthru
    _
  // Predicated region
  $region46: #{vae_forward.8} parent=0 // pred_check
    _
  $region47: #{vae_forward.8} parent=0 // pred_check_branch
    %42 = sbr.rel (0) target = $region49
  $region48: #{vae_forward.8} parent=0 // pred_region
    _
  $region49: #{vae_forward.8} parent=0 // pred_fallthru
    _
  // Predicated region
  $region50: #{vae_forward.8} parent=0 // pred_check
    _
  $region51: #{vae_forward.8} parent=0 // pred_check_branch
    %44 = sbr.rel (0) target = $region53
  $region52: #{vae_forward.8} parent=0 // pred_region
    _
  $region53: #{vae_forward.8} parent=0 // pred_fallthru
    _
  // Predicated region
  $region54: #{vae_forward.8} parent=0 // pred_check
    _
  $region55: #{vae_forward.8} parent=0 // pred_check_branch
    %46 = sbr.rel (0) target = $region57
  $region56: #{vae_forward.8} parent=0 // pred_region
    _
  $region57: #{vae_forward.8} parent=0 // pred_fallthru
    _
  %v48 = vld [vmem:[%s0] sm:$0xff]
  %v49 = vld [vmem:[%s0 + $0x8] sm:$0xff]
  %v50 = vld [vmem:[%s0 + $0x10] sm:$0x11]
  %v51 = vld [vmem:[%s1] sm:$0xf]
  %v52 = vld [vmem:[%s1 + $0x4] sm:$0xf]
  %v53 = vld [vmem:[%s1 + $0x8] sm:$0xf]
  %v54 = vld [vmem:[%s1 + $0xc] sm:$0xf]
  %v55 = vld [vmem:[%s1 + $0x10] sm:$0xf]
  %v56 = vld [vmem:[%s1 + $0x14] sm:$0xf]
  %v57 = vld [vmem:[%s1 + $0x18] sm:$0xf]
  %v58 = vld [vmem:[%s1 + $0x1c] sm:$0xf]
  %v59 = vld [vmem:[%s1 + $0x20] sm:$0xf]
  %v60 = vld [vmem:[%s1 + $0x24] sm:$0xf]
  %v61 = vld [vmem:[%s1 + $0x28] sm:$0xf]
  %v62 = vld [vmem:[%s1 + $0x2c] sm:$0xf]
  %v63 = vld [vmem:[%s1 + $0x30] sm:$0xf]
  %v64 = vld [vmem:[%s1 + $0x34] sm:$0xf]
  %v65 = vld [vmem:[%s1 + $0x38] sm:$0xf]
  %v66 = vld [vmem:[%s1 + $0x3c] sm:$0xf]
  %v67 = vld [vmem:[%s1 + $0x40] sm:$0xf]
  %v68 = vld [vmem:[%s1 + $0x44] sm:$0xf]
  %v69 = vld [vmem:[%s2] sm:$0x1]
  %v71 = vlaneseq
  %v72 = vshrl.u32 %v71, 7
  %v73 = vsub.s32 0, %v72
  %v74 = vrot.slane %v69, %v73
  %v79 = vunpack.c.l.b16 %v48
  %v80 = vunpack.c.h.b16 %v48
  %v81 = vunpack.c.l.b16 %v49
  %v82 = vunpack.c.h.b16 %v49
  %v83 = vunpack.c.l.b16 %v50
  %v84 = vunpack.c.h.b16 %v50
  %v85 = vpack.c.b16 %v81, %v79
  %v86 = vpack.c.b16 %v82, %v80
  %v87 = vpack.c.b16 %v83, %v83
  %v88 = vpack.c.b16 %v84, %v84
  %v109 = vunpack.c.l.b16 %v51
  %v110 = vunpack.c.l.b16 %v52
  %v111 = vunpack.c.l.b16 %v53
  %v112 = vunpack.c.l.b16 %v54
  %v113 = vunpack.c.l.b16 %v55
  %v114 = vunpack.c.l.b16 %v56
  %v115 = vunpack.c.l.b16 %v57
  %v116 = vunpack.c.l.b16 %v58
  %v117 = vunpack.c.l.b16 %v59
  %v118 = vunpack.c.l.b16 %v60
  %v119 = vunpack.c.l.b16 %v61
  %v120 = vunpack.c.l.b16 %v62
  %v121 = vunpack.c.l.b16 %v63
  %v122 = vunpack.c.l.b16 %v64
  %v123 = vunpack.c.l.b16 %v65
  %v124 = vunpack.c.l.b16 %v66
  %v125 = vunpack.c.l.b16 %v67
  %v126 = vunpack.c.l.b16 %v68
  %v127 = vpack.c.b16 %v110, %v109
  %v128 = vpack.c.b16 %v112, %v111
  %v129 = vpack.c.b16 %v114, %v113
  %v130 = vpack.c.b16 %v116, %v115
  %v131 = vpack.c.b16 %v118, %v117
  %v132 = vpack.c.b16 %v120, %v119
  %v133 = vpack.c.b16 %v122, %v121
  %v134 = vpack.c.b16 %v124, %v123
  %v135 = vpack.c.b16 %v126, %v125
  %vm145 = vcmask 130048
  %v147 = vsel %vm145, %v86, 0
  %v150 = vsel %vm145, %v88, 0
  %152 = vmatprep.subr.bf16.mxu0 0
  %153 = vmatpush1.bf16.msra.mxu0 %v127
  %154 = vmatprep.subr.bf16.mxu0 0
  %155 = vmatpush1.bf16.msra.mxu0 %v128
  %156 = vmatprep.subr.bf16.mxu0 0
  %157 = vmatpush1.bf16.msra.mxu0 %v129
  %158 = vmatprep.subr.bf16.mxu0 0
  %159 = vmatpush1.bf16.msra.mxu0 %v130
  %160 = vmatprep.subr.bf16.mxu0 0
  %161 = vmatpush1.bf16.msra.mxu0 %v131
  %162 = vmatprep.subr.bf16.mxu0 0
  %163 = vmatpush1.bf16.msra.mxu0 %v132
  %164 = vmatprep.subr.bf16.mxu0 0
  %165 = vmatpush1.bf16.msra.mxu0 %v133
  %166 = vmatprep.subr.bf16.mxu0 0
  %167 = vmatpush1.bf16.msra.mxu0 %v134
  %168 = vmatprep.subr.bf16.mxu0 0
  %169 = vmatpush1.bf16.msra.mxu0 %v135
  %170 = vmatprep.subr.bf16.mxu0 0
  %171 = vmatpush1.bf16.msra.mxu0 0
  %172 = vmatprep.subr.bf16.mxu0 0
  %173 = vmatpush1.bf16.msra.mxu0 0
  %174 = vmatprep.subr.bf16.mxu0 0
  %175 = vmatpush1.bf16.msra.mxu0 0
  %176 = vmatprep.subr.bf16.mxu0 0
  %177 = vmatpush1.bf16.msra.mxu0 0
  %178 = vmatprep.subr.bf16.mxu0 0
  %179 = vmatpush1.bf16.msra.mxu0 0
  %180 = vmatprep.subr.bf16.mxu0 0
  %181 = vmatpush1.bf16.msra.mxu0 0
  %182 = vmatprep.subr.bf16.mxu0 0
  %183 = vmatpush1.bf16.msra.mxu0 0
  %184 = vmatprep.mubr.bf16.mxu0 %v147
  %185 = vmatmul.mubr.bf16.gmra.mrb[0].mxu0 %v85
  %v186 = vpop.f32.mrb[0].mxu0
  %v187 = vadd.f32 %v74, %v186
  %v188 = vpop.f32.mrb[0].mxu0
  %v189 = vpop.f32.mrb[0].mxu0
  %v190 = vadd.f32 %v74, %v189
  %v191 = vpop.f32.mrb[0].mxu0
  %192 = vmatprep.mubr.bf16.mxu0 %v150
  %193 = vmatmul.mubr.bf16.gmra.mrb[0].mxu0 %v87
  %v194 = vpop.f32.mrb[0].mxu0
  %v195 = vadd.f32 %v74, %v194
  %v196 = vpop.f32.mrb[0].mxu0
  %v197 = vpop.f32.mrb[0].mxu0
  %v198 = vpop.f32.mrb[0].mxu0
  %199 = vdwg.mxu0
  %v200 = vmax.f32 %v187, 0.0
  %v201 = vmax.f32 %v190, 0.0
  %v202 = vmax.f32 %v195, 0.0
  %vm203 = vcmask 261120
  %204 = vst.msk [vmem:[#allocation2] sm:$0xff] %vm203, %v200
  %205 = vst.msk [vmem:[#allocation2 + $0x8] sm:$0xff] %vm203, %v201
  %vm206 = vcmask 254976
  %207 = vst.msk [vmem:[#allocation2 + $0x10] sm:$0x3] %vm206, %v202
  %v208 = vld [vmem:[#allocation2] sm:$0x3]
  %v209 = vpack.c.bf16 %v208, %v208
  %v210 = vld [vmem:[%s3] sm:$0xf]
  %v211 = vld [vmem:[%s3 + $0x4] sm:$0xf]
  %v212 = vld [vmem:[%s3 + $0x8] sm:$0xf]
  %v213 = vld [vmem:[%s3 + $0xc] sm:$0xf]
  %v214 = vld [vmem:[#allocation2 + $0x2] sm:$0x3]
  %v215 = vpack.c.bf16 %v214, %v214
  %v216 = vld [vmem:[%s3 + $0x10] sm:$0xf]
  %v217 = vld [vmem:[%s3 + $0x14] sm:$0xf]
  %v218 = vld [vmem:[%s3 + $0x18] sm:$0xf]
  %v219 = vld [vmem:[%s3 + $0x1c] sm:$0xf]
  %v224 = vunpack.c.l.b16 %v216
  %v225 = vunpack.c.l.b16 %v217
  %v226 = vunpack.c.l.b16 %v218
  %v227 = vunpack.c.l.b16 %v219
  %v228 = vpack.c.b16 %v225, %v224
  %v229 = vpack.c.b16 %v227, %v226
  %v233 = vsel %vm203, %v215, 0
  %235 = vmatprep.subr.bf16.mxu0 0
  %236 = vmatpush1.bf16.msra.mxu0 %v228
  %237 = vmatprep.subr.bf16.mxu0 0
  %238 = vmatpush1.bf16.msra.mxu0 %v229
  %239 = vmatprep.subr.bf16.mxu0 0
  %240 = vmatpush1.bf16.msra.mxu0 0
  %241 = vmatprep.subr.bf16.mxu0 0
  %242 = vmatpush1.bf16.msra.mxu0 0
  %243 = vmatprep.subr.bf16.mxu0 0
  %244 = vmatpush1.bf16.msra.mxu0 0
  %245 = vmatprep.subr.bf16.mxu0 0
  %246 = vmatpush1.bf16.msra.mxu0 0
  %247 = vmatprep.subr.bf16.mxu0 0
  %248 = vmatpush1.bf16.msra.mxu0 0
  %249 = vmatprep.subr.bf16.mxu0 0
  %250 = vmatpush1.bf16.msra.mxu0 0
  %251 = vmatprep.subr.bf16.mxu0 0
  %252 = vmatpush1.bf16.msra.mxu0 0
  %253 = vmatprep.subr.bf16.mxu0 0
  %254 = vmatpush1.bf16.msra.mxu0 0
  %255 = vmatprep.subr.bf16.mxu0 0
  %256 = vmatpush1.bf16.msra.mxu0 0
  %257 = vmatprep.subr.bf16.mxu0 0
  %258 = vmatpush1.bf16.msra.mxu0 0
  %259 = vmatprep.subr.bf16.mxu0 0
  %260 = vmatpush1.bf16.msra.mxu0 0
  %261 = vmatprep.subr.bf16.mxu0 0
  %262 = vmatpush1.bf16.msra.mxu0 0
  %263 = vmatprep.subr.bf16.mxu0 0
  %264 = vmatpush1.bf16.msra.mxu0 0
  %265 = vmatprep.subr.bf16.mxu0 0
  %266 = vmatpush1.bf16.msra.mxu0 0
  %267 = vmatprep.mubr.bf16.mxu0 0
  %268 = vmatmul.mubr.bf16.gmra.mrb[0].mxu0 %v233
  %v269 = vpop.f32.mrb[0].mxu0
  %v270 = vadd.f32 0.0, %v269
  %v271 = vpop.f32.mrb[0].mxu0
  %v272 = vpop.f32.mrb[0].mxu0
  %v273 = vpop.f32.mrb[0].mxu0
  %274 = vdwg.mxu0
  %v279 = vunpack.c.l.b16 %v210
  %v280 = vunpack.c.l.b16 %v211
  %v281 = vunpack.c.l.b16 %v212
  %v282 = vunpack.c.l.b16 %v213
  %v283 = vpack.c.b16 %v280, %v279
  %v284 = vpack.c.b16 %v282, %v281
  %v288 = vsel %vm203, %v209, 0
  %290 = vmatprep.subr.bf16.mxu0 0
  %291 = vmatpush1.bf16.msra.mxu0 %v283
  %292 = vmatprep.subr.bf16.mxu0 0
  %293 = vmatpush1.bf16.msra.mxu0 %v284
  %294 = vmatprep.subr.bf16.mxu0 0
  %295 = vmatpush1.bf16.msra.mxu0 0
  %296 = vmatprep.subr.bf16.mxu0 0
  %297 = vmatpush1.bf16.msra.mxu0 0
  %298 = vmatprep.subr.bf16.mxu0 0
  %299 = vmatpush1.bf16.msra.mxu0 0
  %300 = vmatprep.subr.bf16.mxu0 0
  %301 = vmatpush1.bf16.msra.mxu0 0
  %302 = vmatprep.subr.bf16.mxu0 0
  %303 = vmatpush1.bf16.msra.mxu0 0
  %304 = vmatprep.subr.bf16.mxu0 0
  %305 = vmatpush1.bf16.msra.mxu0 0
  %306 = vmatprep.subr.bf16.mxu0 0
  %307 = vmatpush1.bf16.msra.mxu0 0
  %308 = vmatprep.subr.bf16.mxu0 0
  %309 = vmatpush1.bf16.msra.mxu0 0
  %310 = vmatprep.subr.bf16.mxu0 0
  %311 = vmatpush1.bf16.msra.mxu0 0
  %312 = vmatprep.subr.bf16.mxu0 0
  %313 = vmatpush1.bf16.msra.mxu0 0
  %314 = vmatprep.subr.bf16.mxu0 0
  %315 = vmatpush1.bf16.msra.mxu0 0
  %316 = vmatprep.subr.bf16.mxu0 0
  %317 = vmatpush1.bf16.msra.mxu0 0
  %318 = vmatprep.subr.bf16.mxu0 0
  %319 = vmatpush1.bf16.msra.mxu0 0
  %320 = vmatprep.subr.bf16.mxu0 0
  %321 = vmatpush1.bf16.msra.mxu0 0
  %322 = vmatprep.mubr.bf16.mxu0 0
  %323 = vmatmul.mubr.bf16.gmra.mrb[0].mxu0 %v288
  %v324 = vpop.f32.mrb[0].mxu0
  %v325 = vadd.f32 %v270, %v324
  %v326 = vpop.f32.mrb[0].mxu0
  %v327 = vpop.f32.mrb[0].mxu0
  %v328 = vpop.f32.mrb[0].mxu0
  %329 = vdwg.mxu0
  %v330 = vld [vmem:[#allocation2 + $0x4] sm:$0x3]
  %v331 = vpack.c.bf16 %v330, %v330
  %v332 = vld [vmem:[%s3 + $0x20] sm:$0xf]
  %v333 = vld [vmem:[%s3 + $0x24] sm:$0xf]
  %v334 = vld [vmem:[%s3 + $0x28] sm:$0xf]
  %v335 = vld [vmem:[%s3 + $0x2c] sm:$0xf]
  %v340 = vunpack.c.l.b16 %v332
  %v341 = vunpack.c.l.b16 %v333
  %v342 = vunpack.c.l.b16 %v334
  %v343 = vunpack.c.l.b16 %v335
  %v344 = vpack.c.b16 %v341, %v340
  %v345 = vpack.c.b16 %v343, %v342
  %v349 = vsel %vm203, %v331, 0
  %351 = vmatprep.subr.bf16.mxu0 0
  %352 = vmatpush1.bf16.msra.mxu0 %v344
  %353 = vmatprep.subr.bf16.mxu0 0
  %354 = vmatpush1.bf16.msra.mxu0 %v345
  %355 = vmatprep.subr.bf16.mxu0 0
  %356 = vmatpush1.bf16.msra.mxu0 0
  %357 = vmatprep.subr.bf16.mxu0 0
  %358 = vmatpush1.bf16.msra.mxu0 0
  %359 = vmatprep.subr.bf16.mxu0 0
  %360 = vmatpush1.bf16.msra.mxu0 0
  %361 = vmatprep.subr.bf16.mxu0 0
  %362 = vmatpush1.bf16.msra.mxu0 0
  %363 = vmatprep.subr.bf16.mxu0 0
  %364 = vmatpush1.bf16.msra.mxu0 0
  %365 = vmatprep.subr.bf16.mxu0 0
  %366 = vmatpush1.bf16.msra.mxu0 0
  %367 = vmatprep.subr.bf16.mxu0 0
  %368 = vmatpush1.bf16.msra.mxu0 0
  %369 = vmatprep.subr.bf16.mxu0 0
  %370 = vmatpush1.bf16.msra.mxu0 0
  %371 = vmatprep.subr.bf16.mxu0 0
  %372 = vmatpush1.bf16.msra.mxu0 0
  %373 = vmatprep.subr.bf16.mxu0 0
  %374 = vmatpush1.bf16.msra.mxu0 0
  %375 = vmatprep.subr.bf16.mxu0 0
  %376 = vmatpush1.bf16.msra.mxu0 0
  %377 = vmatprep.subr.bf16.mxu0 0
  %378 = vmatpush1.bf16.msra.mxu0 0
  %379 = vmatprep.subr.bf16.mxu0 0
  %380 = vmatpush1.bf16.msra.mxu0 0
  %381 = vmatprep.subr.bf16.mxu0 0
  %382 = vmatpush1.bf16.msra.mxu0 0
  %383 = vmatprep.mubr.bf16.mxu0 0
  %384 = vmatmul.mubr.bf16.gmra.mrb[0].mxu0 %v349
  %v385 = vpop.f32.mrb[0].mxu0
  %v386 = vadd.f32 0.0, %v385
  %v387 = vpop.f32.mrb[0].mxu0
  %v388 = vpop.f32.mrb[0].mxu0
  %v389 = vpop.f32.mrb[0].mxu0
  %390 = vdwg.mxu0
  %v391 = vadd.f32 %v325, %v386
  %v392 = vld [vmem:[#allocation2 + $0x6] sm:$0x3]
  %v393 = vpack.c.bf16 %v392, %v392
  %v394 = vld [vmem:[%s3 + $0x30] sm:$0xf]
  %v395 = vld [vmem:[%s3 + $0x34] sm:$0xf]
  %v396 = vld [vmem:[%s3 + $0x38] sm:$0xf]
  %v397 = vld [vmem:[%s3 + $0x3c] sm:$0xf]
  %v402 = vunpack.c.l.b16 %v394
  %v403 = vunpack.c.l.b16 %v395
  %v404 = vunpack.c.l.b16 %v396
  %v405 = vunpack.c.l.b16 %v397
  %v406 = vpack.c.b16 %v403, %v402
  %v407 = vpack.c.b16 %v405, %v404
  %v411 = vsel %vm203, %v393, 0
  %413 = vmatprep.subr.bf16.mxu0 0
  %414 = vmatpush1.bf16.msra.mxu0 %v406
  %415 = vmatprep.subr.bf16.mxu0 0
  %416 = vmatpush1.bf16.msra.mxu0 %v407
  %417 = vmatprep.subr.bf16.mxu0 0
  %418 = vmatpush1.bf16.msra.mxu0 0
  %419 = vmatprep.subr.bf16.mxu0 0
  %420 = vmatpush1.bf16.msra.mxu0 0
  %421 = vmatprep.subr.bf16.mxu0 0
  %422 = vmatpush1.bf16.msra.mxu0 0
  %423 = vmatprep.subr.bf16.mxu0 0
  %424 = vmatpush1.bf16.msra.mxu0 0
  %425 = vmatprep.subr.bf16.mxu0 0
  %426 = vmatpush1.bf16.msra.mxu0 0
  %427 = vmatprep.subr.bf16.mxu0 0
  %428 = vmatpush1.bf16.msra.mxu0 0
  %429 = vmatprep.subr.bf16.mxu0 0
  %430 = vmatpush1.bf16.msra.mxu0 0
  %431 = vmatprep.subr.bf16.mxu0 0
  %432 = vmatpush1.bf16.msra.mxu0 0
  %433 = vmatprep.subr.bf16.mxu0 0
  %434 = vmatpush1.bf16.msra.mxu0 0
  %435 = vmatprep.subr.bf16.mxu0 0
  %436 = vmatpush1.bf16.msra.mxu0 0
  %437 = vmatprep.subr.bf16.mxu0 0
  %438 = vmatpush1.bf16.msra.mxu0 0
  %439 = vmatprep.subr.bf16.mxu0 0
  %440 = vmatpush1.bf16.msra.mxu0 0
  %441 = vmatprep.subr.bf16.mxu0 0
  %442 = vmatpush1.bf16.msra.mxu0 0
  %443 = vmatprep.subr.bf16.mxu0 0
  %444 = vmatpush1.bf16.msra.mxu0 0
  %445 = vmatprep.mubr.bf16.mxu0 0
  %446 = vmatmul.mubr.bf16.gmra.mrb[0].mxu0 %v411
  %v447 = vpop.f32.mrb[0].mxu0
  %v448 = vadd.f32 0.0, %v447
  %v449 = vpop.f32.mrb[0].mxu0
  %v450 = vpop.f32.mrb[0].mxu0
  %v451 = vpop.f32.mrb[0].mxu0
  %452 = vdwg.mxu0
  %v453 = vadd.f32 %v391, %v448
  %v454 = vld [vmem:[#allocation2 + $0x8] sm:$0x3]
  %v455 = vpack.c.bf16 %v454, %v454
  %v456 = vld [vmem:[%s3 + $0x40] sm:$0xf]
  %v457 = vld [vmem:[%s3 + $0x44] sm:$0xf]
  %v458 = vld [vmem:[%s3 + $0x48] sm:$0xf]
  %v459 = vld [vmem:[%s3 + $0x4c] sm:$0xf]
  %v464 = vunpack.c.l.b16 %v456
  %v465 = vunpack.c.l.b16 %v457
  %v466 = vunpack.c.l.b16 %v458
  %v467 = vunpack.c.l.b16 %v459
  %v468 = vpack.c.b16 %v465, %v464
  %v469 = vpack.c.b16 %v467, %v466
  %v473 = vsel %vm203, %v455, 0
  %475 = vmatprep.subr.bf16.mxu0 0
  %476 = vmatpush1.bf16.msra.mxu0 %v468
  %477 = vmatprep.subr.bf16.mxu0 0
  %478 = vmatpush1.bf16.msra.mxu0 %v469
  %479 = vmatprep.subr.bf16.mxu0 0
  %480 = vmatpush1.bf16.msra.mxu0 0
  %481 = vmatprep.subr.bf16.mxu0 0
  %482 = vmatpush1.bf16.msra.mxu0 0
  %483 = vmatprep.subr.bf16.mxu0 0
  %484 = vmatpush1.bf16.msra.mxu0 0
  %485 = vmatprep.subr.bf16.mxu0 0
  %486 = vmatpush1.bf16.msra.mxu0 0
  %487 = vmatprep.subr.bf16.mxu0 0
  %488 = vmatpush1.bf16.msra.mxu0 0
  %489 = vmatprep.subr.bf16.mxu0 0
  %490 = vmatpush1.bf16.msra.mxu0 0
  %491 = vmatprep.subr.bf16.mxu0 0
  %492 = vmatpush1.bf16.msra.mxu0 0
  %493 = vmatprep.subr.bf16.mxu0 0
  %494 = vmatpush1.bf16.msra.mxu0 0
  %495 = vmatprep.subr.bf16.mxu0 0
  %496 = vmatpush1.bf16.msra.mxu0 0
  %497 = vmatprep.subr.bf16.mxu0 0
  %498 = vmatpush1.bf16.msra.mxu0 0
  %499 = vmatprep.subr.bf16.mxu0 0
  %500 = vmatpush1.bf16.msra.mxu0 0
  %501 = vmatprep.subr.bf16.mxu0 0
  %502 = vmatpush1.bf16.msra.mxu0 0
  %503 = vmatprep.subr.bf16.mxu0 0
  %504 = vmatpush1.bf16.msra.mxu0 0
  %505 = vmatprep.subr.bf16.mxu0 0
  %506 = vmatpush1.bf16.msra.mxu0 0
  %507 = vmatprep.mubr.bf16.mxu0 0
  %508 = vmatmul.mubr.bf16.gmra.mrb[0].mxu0 %v473
  %v509 = vpop.f32.mrb[0].mxu0
  %v510 = vadd.f32 0.0, %v509
  %v511 = vpop.f32.mrb[0].mxu0
  %v512 = vpop.f32.mrb[0].mxu0
  %v513 = vpop.f32.mrb[0].mxu0
  %514 = vdwg.mxu0
  %v515 = vadd.f32 %v453, %v510
  %v516 = vld [vmem:[#allocation2 + $0xa] sm:$0x3]
  %v517 = vpack.c.bf16 %v516, %v516
  %v518 = vld [vmem:[%s3 + $0x50] sm:$0xf]
  %v519 = vld [vmem:[%s3 + $0x54] sm:$0xf]
  %v520 = vld [vmem:[%s3 + $0x58] sm:$0xf]
  %v521 = vld [vmem:[%s3 + $0x5c] sm:$0xf]
  %v526 = vunpack.c.l.b16 %v518
  %v527 = vunpack.c.l.b16 %v519
  %v528 = vunpack.c.l.b16 %v520
  %v529 = vunpack.c.l.b16 %v521
  %v530 = vpack.c.b16 %v527, %v526
  %v531 = vpack.c.b16 %v529, %v528
  %v535 = vsel %vm203, %v517, 0
  %537 = vmatprep.subr.bf16.mxu0 0
  %538 = vmatpush1.bf16.msra.mxu0 %v530
  %539 = vmatprep.subr.bf16.mxu0 0
  %540 = vmatpush1.bf16.msra.mxu0 %v531
  %541 = vmatprep.subr.bf16.mxu0 0
  %542 = vmatpush1.bf16.msra.mxu0 0
  %543 = vmatprep.subr.bf16.mxu0 0
  %544 = vmatpush1.bf16.msra.mxu0 0
  %545 = vmatprep.subr.bf16.mxu0 0
  %546 = vmatpush1.bf16.msra.mxu0 0
  %547 = vmatprep.subr.bf16.mxu0 0
  %548 = vmatpush1.bf16.msra.mxu0 0
  %549 = vmatprep.subr.bf16.mxu0 0
  %550 = vmatpush1.bf16.msra.mxu0 0
  %551 = vmatprep.subr.bf16.mxu0 0
  %552 = vmatpush1.bf16.msra.mxu0 0
  %553 = vmatprep.subr.bf16.mxu0 0
  %554 = vmatpush1.bf16.msra.mxu0 0
  %555 = vmatprep.subr.bf16.mxu0 0
  %556 = vmatpush1.bf16.msra.mxu0 0
  %557 = vmatprep.subr.bf16.mxu0 0
  %558 = vmatpush1.bf16.msra.mxu0 0
  %559 = vmatprep.subr.bf16.mxu0 0
  %560 = vmatpush1.bf16.msra.mxu0 0
  %561 = vmatprep.subr.bf16.mxu0 0
  %562 = vmatpush1.bf16.msra.mxu0 0
  %563 = vmatprep.subr.bf16.mxu0 0
  %564 = vmatpush1.bf16.msra.mxu0 0
  %565 = vmatprep.subr.bf16.mxu0 0
  %566 = vmatpush1.bf16.msra.mxu0 0
  %567 = vmatprep.subr.bf16.mxu0 0
  %568 = vmatpush1.bf16.msra.mxu0 0
  %569 = vmatprep.mubr.bf16.mxu0 0
  %570 = vmatmul.mubr.bf16.gmra.mrb[0].mxu0 %v535
  %v571 = vpop.f32.mrb[0].mxu0
  %v572 = vadd.f32 0.0, %v571
  %v573 = vpop.f32.mrb[0].mxu0
  %v574 = vpop.f32.mrb[0].mxu0
  %v575 = vpop.f32.mrb[0].mxu0
  %576 = vdwg.mxu0
  %v577 = vadd.f32 %v515, %v572
  %v578 = vld [vmem:[#allocation2 + $0xc] sm:$0x3]
  %v579 = vpack.c.bf16 %v578, %v578
  %v580 = vld [vmem:[%s3 + $0x60] sm:$0xf]
  %v581 = vld [vmem:[%s3 + $0x64] sm:$0xf]
  %v582 = vld [vmem:[%s3 + $0x68] sm:$0xf]
  %v583 = vld [vmem:[%s3 + $0x6c] sm:$0xf]
  %v588 = vunpack.c.l.b16 %v580
  %v589 = vunpack.c.l.b16 %v581
  %v590 = vunpack.c.l.b16 %v582
  %v591 = vunpack.c.l.b16 %v583
  %v592 = vpack.c.b16 %v589, %v588
  %v593 = vpack.c.b16 %v591, %v590
  %v597 = vsel %vm203, %v579, 0
  %599 = vmatprep.subr.bf16.mxu0 0
  %600 = vmatpush1.bf16.msra.mxu0 %v592
  %601 = vmatprep.subr.bf16.mxu0 0
  %602 = vmatpush1.bf16.msra.mxu0 %v593
  %603 = vmatprep.subr.bf16.mxu0 0
  %604 = vmatpush1.bf16.msra.mxu0 0
  %605 = vmatprep.subr.bf16.mxu0 0
  %606 = vmatpush1.bf16.msra.mxu0 0
  %607 = vmatprep.subr.bf16.mxu0 0
  %608 = vmatpush1.bf16.msra.mxu0 0
  %609 = vmatprep.subr.bf16.mxu0 0
  %610 = vmatpush1.bf16.msra.mxu0 0
  %611 = vmatprep.subr.bf16.mxu0 0
  %612 = vmatpush1.bf16.msra.mxu0 0
  %613 = vmatprep.subr.bf16.mxu0 0
  %614 = vmatpush1.bf16.msra.mxu0 0
  %615 = vmatprep.subr.bf16.mxu0 0
  %616 = vmatpush1.bf16.msra.mxu0 0
  %617 = vmatprep.subr.bf16.mxu0 0
  %618 = vmatpush1.bf16.msra.mxu0 0
  %619 = vmatprep.subr.bf16.mxu0 0
  %620 = vmatpush1.bf16.msra.mxu0 0
  %621 = vmatprep.subr.bf16.mxu0 0
  %622 = vmatpush1.bf16.msra.mxu0 0
  %623 = vmatprep.subr.bf16.mxu0 0
  %624 = vmatpush1.bf16.msra.mxu0 0
  %625 = vmatprep.subr.bf16.mxu0 0
  %626 = vmatpush1.bf16.msra.mxu0 0
  %627 = vmatprep.subr.bf16.mxu0 0
  %628 = vmatpush1.bf16.msra.mxu0 0
  %629 = vmatprep.subr.bf16.mxu0 0
  %630 = vmatpush1.bf16.msra.mxu0 0
  %631 = vmatprep.mubr.bf16.mxu0 0
  %632 = vmatmul.mubr.bf16.gmra.mrb[0].mxu0 %v597
  %v633 = vpop.f32.mrb[0].mxu0
  %v634 = vadd.f32 0.0, %v633
  %v635 = vpop.f32.mrb[0].mxu0
  %v636 = vpop.f32.mrb[0].mxu0
  %v637 = vpop.f32.mrb[0].mxu0
  %638 = vdwg.mxu0
  %v639 = vadd.f32 %v577, %v634
  %v640 = vld [vmem:[#allocation2 + $0xe] sm:$0x3]
  %v641 = vpack.c.bf16 %v640, %v640
  %v642 = vld [vmem:[%s3 + $0x70] sm:$0xf]
  %v643 = vld [vmem:[%s3 + $0x74] sm:$0xf]
  %v644 = vld [vmem:[%s3 + $0x78] sm:$0xf]
  %v645 = vld [vmem:[%s3 + $0x7c] sm:$0xf]
  %v650 = vunpack.c.l.b16 %v642
  %v651 = vunpack.c.l.b16 %v643
  %v652 = vunpack.c.l.b16 %v644
  %v653 = vunpack.c.l.b16 %v645
  %v654 = vpack.c.b16 %v651, %v650
  %v655 = vpack.c.b16 %v653, %v652
  %v659 = vsel %vm203, %v641, 0
  %661 = vmatprep.subr.bf16.mxu0 0
  %662 = vmatpush1.bf16.msra.mxu0 %v654
  %663 = vmatprep.subr.bf16.mxu0 0
  %664 = vmatpush1.bf16.msra.mxu0 %v655
  %665 = vmatprep.subr.bf16.mxu0 0
  %666 = vmatpush1.bf16.msra.mxu0 0
  %667 = vmatprep.subr.bf16.mxu0 0
  %668 = vmatpush1.bf16.msra.mxu0 0
  %669 = vmatprep.subr.bf16.mxu0 0
  %670 = vmatpush1.bf16.msra.mxu0 0
  %671 = vmatprep.subr.bf16.mxu0 0
  %672 = vmatpush1.bf16.msra.mxu0 0
  %673 = vmatprep.subr.bf16.mxu0 0
  %674 = vmatpush1.bf16.msra.mxu0 0
  %675 = vmatprep.subr.bf16.mxu0 0
  %676 = vmatpush1.bf16.msra.mxu0 0
  %677 = vmatprep.subr.bf16.mxu0 0
  %678 = vmatpush1.bf16.msra.mxu0 0
  %679 = vmatprep.subr.bf16.mxu0 0
  %680 = vmatpush1.bf16.msra.mxu0 0
  %681 = vmatprep.subr.bf16.mxu0 0
  %682 = vmatpush1.bf16.msra.mxu0 0
  %683 = vmatprep.subr.bf16.mxu0 0
  %684 = vmatpush1.bf16.msra.mxu0 0
  %685 = vmatprep.subr.bf16.mxu0 0
  %686 = vmatpush1.bf16.msra.mxu0 0
  %687 = vmatprep.subr.bf16.mxu0 0
  %688 = vmatpush1.bf16.msra.mxu0 0
  %689 = vmatprep.subr.bf16.mxu0 0
  %690 = vmatpush1.bf16.msra.mxu0 0
  %691 = vmatprep.subr.bf16.mxu0 0
  %692 = vmatpush1.bf16.msra.mxu0 0
  %693 = vmatprep.mubr.bf16.mxu0 0
  %694 = vmatmul.mubr.bf16.gmra.mrb[0].mxu0 %v659
  %v695 = vpop.f32.mrb[0].mxu0
  %v696 = vadd.f32 0.0, %v695
  %v697 = vpop.f32.mrb[0].mxu0
  %v698 = vpop.f32.mrb[0].mxu0
  %v699 = vpop.f32.mrb[0].mxu0
  %700 = vdwg.mxu0
  %v701 = vadd.f32 %v639, %v696
  %v702 = vld [vmem:[#allocation2 + $0x10] sm:$0x3]
  %v703 = vpack.c.bf16 %v702, %v702
  %v704 = vld [vmem:[%s3 + $0x80] sm:$0xf]
  %v705 = vld [vmem:[%s3 + $0x84] sm:$0xf]
  %v706 = vld [vmem:[%s3 + $0x88] sm:$0xf]
  %v707 = vld [vmem:[%s3 + $0x8c] sm:$0xf]
  %v712 = vunpack.c.l.b16 %v704
  %v713 = vunpack.c.l.b16 %v705
  %v714 = vunpack.c.l.b16 %v706
  %v715 = vunpack.c.l.b16 %v707
  %v716 = vpack.c.b16 %v713, %v712
  %v717 = vpack.c.b16 %v715, %v714
  %v721 = vsel %vm203, %v703, 0
  %723 = vmatprep.subr.bf16.mxu0 0
  %724 = vmatpush1.bf16.msra.mxu0 %v716
  %725 = vmatprep.subr.bf16.mxu0 0
  %726 = vmatpush1.bf16.msra.mxu0 %v717
  %727 = vmatprep.subr.bf16.mxu0 0
  %728 = vmatpush1.bf16.msra.mxu0 0
  %729 = vmatprep.subr.bf16.mxu0 0
  %730 = vmatpush1.bf16.msra.mxu0 0
  %731 = vmatprep.subr.bf16.mxu0 0
  %732 = vmatpush1.bf16.msra.mxu0 0
  %733 = vmatprep.subr.bf16.mxu0 0
  %734 = vmatpush1.bf16.msra.mxu0 0
  %735 = vmatprep.subr.bf16.mxu0 0
  %736 = vmatpush1.bf16.msra.mxu0 0
  %737 = vmatprep.subr.bf16.mxu0 0
  %738 = vmatpush1.bf16.msra.mxu0 0
  %739 = vmatprep.subr.bf16.mxu0 0
  %740 = vmatpush1.bf16.msra.mxu0 0
  %741 = vmatprep.subr.bf16.mxu0 0
  %742 = vmatpush1.bf16.msra.mxu0 0
  %743 = vmatprep.subr.bf16.mxu0 0
  %744 = vmatpush1.bf16.msra.mxu0 0
  %745 = vmatprep.subr.bf16.mxu0 0
  %746 = vmatpush1.bf16.msra.mxu0 0
  %747 = vmatprep.subr.bf16.mxu0 0
  %748 = vmatpush1.bf16.msra.mxu0 0
  %749 = vmatprep.subr.bf16.mxu0 0
  %750 = vmatpush1.bf16.msra.mxu0 0
  %751 = vmatprep.subr.bf16.mxu0 0
  %752 = vmatpush1.bf16.msra.mxu0 0
  %753 = vmatprep.subr.bf16.mxu0 0
  %754 = vmatpush1.bf16.msra.mxu0 0
  %755 = vmatprep.mubr.bf16.mxu0 0
  %756 = vmatmul.mubr.bf16.gmra.mrb[0].mxu0 %v721
  %v757 = vpop.f32.mrb[0].mxu0
  %v758 = vadd.f32 0.0, %v757
  %v759 = vpop.f32.mrb[0].mxu0
  %v760 = vpop.f32.mrb[0].mxu0
  %v761 = vpop.f32.mrb[0].mxu0
  %762 = vdwg.mxu0
  %v763 = vadd.f32 %v701, %v758
  %v764 = vld [vmem:[%s4] sm:$0x1]
  %v766 = vlaneseq
  %v767 = vshrl.u32 %v766, 7
  %v768 = vsub.s32 0, %v767
  %v769 = vrot.slane %v764, %v768
  %v771 = vadd.f32 %v763, %v769
  %v772 = vmax.f32 %v771, 0.0
  %v773 = vpack.c.bf16 %v772, %v772
  %v774 = vld [vmem:[%s5] sm:$0xf]
  %v775 = vld [vmem:[%s5 + $0x4] sm:$0xf]
  %v776 = vld [vmem:[%s5 + $0x8] sm:$0xf]
  %v777 = vld [vmem:[%s5 + $0xc] sm:$0xf]
  %v778 = vld [vmem:[%s5 + $0x10] sm:$0xf]
  %v779 = vld [vmem:[%s5 + $0x14] sm:$0xf]
  %v780 = vld [vmem:[%s5 + $0x18] sm:$0xf]
  %v781 = vld [vmem:[%s5 + $0x1c] sm:$0xf]
  %v782 = vld [vmem:[%s5 + $0x20] sm:$0xf]
  %v783 = vld [vmem:[%s5 + $0x24] sm:$0xf]
  %v784 = vld [vmem:[%s5 + $0x28] sm:$0xf]
  %v785 = vld [vmem:[%s5 + $0x2c] sm:$0xf]
  %v786 = vld [vmem:[%s5 + $0x30] sm:$0xf]
  %v787 = vld [vmem:[%s5 + $0x34] sm:$0xf]
  %v788 = vld [vmem:[%s5 + $0x38] sm:$0xf]
  %v789 = vld [vmem:[%s5 + $0x3c] sm:$0xf]
  %v790 = vld [vmem:[%s6] sm:$0x1]
  %v792 = vlaneseq
  %v793 = vshrl.u32 %v792, 7
  %v794 = vsub.s32 0, %v793
  %v795 = vrot.slane %v790, %v794
  %v813 = vunpack.c.l.b16 %v774
  %v814 = vunpack.c.l.b16 %v775
  %v815 = vunpack.c.l.b16 %v776
  %v816 = vunpack.c.l.b16 %v777
  %v817 = vunpack.c.l.b16 %v778
  %v818 = vunpack.c.l.b16 %v779
  %v819 = vunpack.c.l.b16 %v780
  %v820 = vunpack.c.l.b16 %v781
  %v821 = vunpack.c.l.b16 %v782
  %v822 = vunpack.c.l.b16 %v783
  %v823 = vunpack.c.l.b16 %v784
  %v824 = vunpack.c.l.b16 %v785
  %v825 = vunpack.c.l.b16 %v786
  %v826 = vunpack.c.l.b16 %v787
  %v827 = vunpack.c.l.b16 %v788
  %v828 = vunpack.c.l.b16 %v789
  %v829 = vpack.c.b16 %v814, %v813
  %v830 = vpack.c.b16 %v816, %v815
  %v831 = vpack.c.b16 %v818, %v817
  %v832 = vpack.c.b16 %v820, %v819
  %v833 = vpack.c.b16 %v822, %v821
  %v834 = vpack.c.b16 %v824, %v823
  %v835 = vpack.c.b16 %v826, %v825
  %v836 = vpack.c.b16 %v828, %v827
  %845 = vmatprep.subr.bf16.mxu0 0
  %846 = vmatpush1.bf16.msra.mxu0 %v829
  %847 = vmatprep.subr.bf16.mxu0 0
  %848 = vmatpush1.bf16.msra.mxu0 %v830
  %849 = vmatprep.subr.bf16.mxu0 0
  %850 = vmatpush1.bf16.msra.mxu0 %v831
  %851 = vmatprep.subr.bf16.mxu0 0
  %852 = vmatpush1.bf16.msra.mxu0 %v832
  %853 = vmatprep.subr.bf16.mxu0 0
  %854 = vmatpush1.bf16.msra.mxu0 %v833
  %855 = vmatprep.subr.bf16.mxu0 0
  %856 = vmatpush1.bf16.msra.mxu0 %v834
  %857 = vmatprep.subr.bf16.mxu0 0
  %858 = vmatpush1.bf16.msra.mxu0 %v835
  %859 = vmatprep.subr.bf16.mxu0 0
  %860 = vmatpush1.bf16.msra.mxu0 %v836
  %861 = vmatprep.subr.bf16.mxu0 0
  %862 = vmatpush1.bf16.msra.mxu0 0
  %863 = vmatprep.subr.bf16.mxu0 0
  %864 = vmatpush1.bf16.msra.mxu0 0
  %865 = vmatprep.subr.bf16.mxu0 0
  %866 = vmatpush1.bf16.msra.mxu0 0
  %867 = vmatprep.subr.bf16.mxu0 0
  %868 = vmatpush1.bf16.msra.mxu0 0
  %869 = vmatprep.subr.bf16.mxu0 0
  %870 = vmatpush1.bf16.msra.mxu0 0
  %871 = vmatprep.subr.bf16.mxu0 0
  %872 = vmatpush1.bf16.msra.mxu0 0
  %873 = vmatprep.subr.bf16.mxu0 0
  %874 = vmatpush1.bf16.msra.mxu0 0
  %875 = vmatprep.subr.bf16.mxu0 0
  %876 = vmatpush1.bf16.msra.mxu0 0
  %877 = vmatprep.mubr.bf16.mxu0 0
  %878 = vmatmul.mubr.bf16.gmra.mrb[0].mxu0 %v773
  %v879 = vpop.f32.mrb[0].mxu0
  %v880 = vadd.f32 %v795, %v879
  %v881 = vpop.f32.mrb[0].mxu0
  %v882 = vpop.f32.mrb[0].mxu0
  %v883 = vpop.f32.mrb[0].mxu0
  %884 = vdwg.mxu0
  %v885 = vld [vmem:[%s7] sm:$0xf]
  %v886 = vld [vmem:[%s7 + $0x4] sm:$0xf]
  %v887 = vld [vmem:[%s7 + $0x8] sm:$0xf]
  %v888 = vld [vmem:[%s7 + $0xc] sm:$0xf]
  %v889 = vld [vmem:[%s7 + $0x10] sm:$0xf]
  %v890 = vld [vmem:[%s7 + $0x14] sm:$0xf]
  %v891 = vld [vmem:[%s7 + $0x18] sm:$0xf]
  %v892 = vld [vmem:[%s7 + $0x1c] sm:$0xf]
  %v893 = vld [vmem:[%s7 + $0x20] sm:$0xf]
  %v894 = vld [vmem:[%s7 + $0x24] sm:$0xf]
  %v895 = vld [vmem:[%s7 + $0x28] sm:$0xf]
  %v896 = vld [vmem:[%s7 + $0x2c] sm:$0xf]
  %v897 = vld [vmem:[%s7 + $0x30] sm:$0xf]
  %v898 = vld [vmem:[%s7 + $0x34] sm:$0xf]
  %v899 = vld [vmem:[%s7 + $0x38] sm:$0xf]
  %v900 = vld [vmem:[%s7 + $0x3c] sm:$0xf]
  %v901 = vld [vmem:[%s8] sm:$0x1]
  %v903 = vlaneseq
  %v904 = vshrl.u32 %v903, 7
  %v905 = vsub.s32 0, %v904
  %v906 = vrot.slane %v901, %v905
  %v924 = vunpack.c.l.b16 %v885
  %v925 = vunpack.c.l.b16 %v886
  %v926 = vunpack.c.l.b16 %v887
  %v927 = vunpack.c.l.b16 %v888
  %v928 = vunpack.c.l.b16 %v889
  %v929 = vunpack.c.l.b16 %v890
  %v930 = vunpack.c.l.b16 %v891
  %v931 = vunpack.c.l.b16 %v892
  %v932 = vunpack.c.l.b16 %v893
  %v933 = vunpack.c.l.b16 %v894
  %v934 = vunpack.c.l.b16 %v895
  %v935 = vunpack.c.l.b16 %v896
  %v936 = vunpack.c.l.b16 %v897
  %v937 = vunpack.c.l.b16 %v898
  %v938 = vunpack.c.l.b16 %v899
  %v939 = vunpack.c.l.b16 %v900
  %v940 = vpack.c.b16 %v925, %v924
  %v941 = vpack.c.b16 %v927, %v926
  %v942 = vpack.c.b16 %v929, %v928
  %v943 = vpack.c.b16 %v931, %v930
  %v944 = vpack.c.b16 %v933, %v932
  %v945 = vpack.c.b16 %v935, %v934
  %v946 = vpack.c.b16 %v937, %v936
  %v947 = vpack.c.b16 %v939, %v938
  %956 = vmatprep.subr.bf16.mxu0 0
  %957 = vmatpush1.bf16.msra.mxu0 %v940
  %958 = vmatprep.subr.bf16.mxu0 0
  %959 = vmatpush1.bf16.msra.mxu0 %v941
  %960 = vmatprep.subr.bf16.mxu0 0
  %961 = vmatpush1.bf16.msra.mxu0 %v942
  %962 = vmatprep.subr.bf16.mxu0 0
  %963 = vmatpush1.bf16.msra.mxu0 %v943
  %964 = vmatprep.subr.bf16.mxu0 0
  %965 = vmatpush1.bf16.msra.mxu0 %v944
  %966 = vmatprep.subr.bf16.mxu0 0
  %967 = vmatpush1.bf16.msra.mxu0 %v945
  %968 = vmatprep.subr.bf16.mxu0 0
  %969 = vmatpush1.bf16.msra.mxu0 %v946
  %970 = vmatprep.subr.bf16.mxu0 0
  %971 = vmatpush1.bf16.msra.mxu0 %v947
  %972 = vmatprep.subr.bf16.mxu0 0
  %973 = vmatpush1.bf16.msra.mxu0 0
  %974 = vmatprep.subr.bf16.mxu0 0
  %975 = vmatpush1.bf16.msra.mxu0 0
  %976 = vmatprep.subr.bf16.mxu0 0
  %977 = vmatpush1.bf16.msra.mxu0 0
  %978 = vmatprep.subr.bf16.mxu0 0
  %979 = vmatpush1.bf16.msra.mxu0 0
  %980 = vmatprep.subr.bf16.mxu0 0
  %981 = vmatpush1.bf16.msra.mxu0 0
  %982 = vmatprep.subr.bf16.mxu0 0
  %983 = vmatpush1.bf16.msra.mxu0 0
  %984 = vmatprep.subr.bf16.mxu0 0
  %985 = vmatpush1.bf16.msra.mxu0 0
  %986 = vmatprep.subr.bf16.mxu0 0
  %987 = vmatpush1.bf16.msra.mxu0 0
  %988 = vmatprep.mubr.bf16.mxu0 0
  %989 = vmatmul.mubr.bf16.gmra.mrb[0].mxu0 %v773
  %v990 = vpop.f32.mrb[0].mxu0
  %v991 = vadd.f32 %v906, %v990
  %v992 = vpop.f32.mrb[0].mxu0
  %v993 = vpop.f32.mrb[0].mxu0
  %v994 = vpop.f32.mrb[0].mxu0
  %995 = vdwg.mxu0
  %v996 = vmul.f32 %v991, 1.442695
  %v997 = vpow.pop %v996
  %v998 = vld [vmem:[%s9] sm:$0x3]
  %v999 = vmul.f32 %v997, %v998
  %v1000 = vadd.f32 %v880, %v999
  %v1001 = vpack.c.bf16 %v1000, %v1000
  %v1002 = vld [vmem:[%s10] sm:$0x3]
  %v1003 = vld [vmem:[%s11] sm:$0x1]
  %v1005 = vlaneseq
  %v1006 = vshrl.u32 %v1005, 7
  %v1007 = vsub.s32 0, %v1006
  %v1008 = vrot.slane %v1003, %v1007
  %vm1010 = vcmask 31744
  %v1012 = vsel %vm1010, %v1001, 0
  %vm1014 = vcmask 1041408
  %v1016 = vsel %vm1014, %v1002, 0
  %1018 = vmatprep.subr.bf16.mxu0 0
  %1019 = vmatpush1.bf16.msra.mxu0 %v1016
  %1020 = vmatprep.subr.bf16.mxu0 0
  %1021 = vmatpush1.bf16.msra.mxu0 0
  %1022 = vmatprep.subr.bf16.mxu0 0
  %1023 = vmatpush1.bf16.msra.mxu0 0
  %1024 = vmatprep.subr.bf16.mxu0 0
  %1025 = vmatpush1.bf16.msra.mxu0 0
  %1026 = vmatprep.subr.bf16.mxu0 0
  %1027 = vmatpush1.bf16.msra.mxu0 0
  %1028 = vmatprep.subr.bf16.mxu0 0
  %1029 = vmatpush1.bf16.msra.mxu0 0
  %1030 = vmatprep.subr.bf16.mxu0 0
  %1031 = vmatpush1.bf16.msra.mxu0 0
  %1032 = vmatprep.subr.bf16.mxu0 0
  %1033 = vmatpush1.bf16.msra.mxu0 0
  %1034 = vmatprep.subr.bf16.mxu0 0
  %1035 = vmatpush1.bf16.msra.mxu0 0
  %1036 = vmatprep.subr.bf16.mxu0 0
  %1037 = vmatpush1.bf16.msra.mxu0 0
  %1038 = vmatprep.subr.bf16.mxu0 0
  %1039 = vmatpush1.bf16.msra.mxu0 0
  %1040 = vmatprep.subr.bf16.mxu0 0
  %1041 = vmatpush1.bf16.msra.mxu0 0
  %1042 = vmatprep.subr.bf16.mxu0 0
  %1043 = vmatpush1.bf16.msra.mxu0 0
  %1044 = vmatprep.subr.bf16.mxu0 0
  %1045 = vmatpush1.bf16.msra.mxu0 0
  %1046 = vmatprep.subr.bf16.mxu0 0
  %1047 = vmatpush1.bf16.msra.mxu0 0
  %1048 = vmatprep.subr.bf16.mxu0 0
  %1049 = vmatpush1.bf16.msra.mxu0 0
  %1050 = vmatprep.mubr.bf16.mxu0 0
  %1051 = vmatmul.mubr.bf16.gmra.mrb[0].mxu0 %v1012
  %v1052 = vpop.f32.mrb[0].mxu0
  %v1053 = vadd.f32 %v1008, %v1052
  %v1054 = vpop.f32.mrb[0].mxu0
  %v1055 = vpop.f32.mrb[0].mxu0
  %v1056 = vpop.f32.mrb[0].mxu0
  %1057 = vdwg.mxu0
  %v1058 = vmax.f32 %v1053, 0.0
  %v1059 = vpack.c.bf16 %v1058, %v1058
  %v1060 = vld [vmem:[%s12] sm:$0xff]
  %v1061 = vld [vmem:[%s12 + $0x8] sm:$0xf]
  %v1062 = vld [vmem:[%s12 + $0xc] sm:$0xff]
  %v1063 = vld [vmem:[%s12 + $0x14] sm:$0xf]
  %v1064 = vld [vmem:[%s12 + $0x18] sm:$0xff]
  %v1065 = vld [vmem:[%s12 + $0x20] sm:$0xf]
  %v1066 = vld [vmem:[%s12 + $0x24] sm:$0xff]
  %v1067 = vld [vmem:[%s12 + $0x2c] sm:$0xf]
  %v1068 = vld [vmem:[%s12 + $0x30] sm:$0xff]
  %v1069 = vld [vmem:[%s12 + $0x38] sm:$0xf]
  %v1070 = vld [vmem:[%s12 + $0x3c] sm:$0xff]
  %v1071 = vld [vmem:[%s12 + $0x44] sm:$0xf]
  %v1072 = vld [vmem:[%s12 + $0x48] sm:$0xff]
  %v1073 = vld [vmem:[%s12 + $0x50] sm:$0xf]
  %v1074 = vld [vmem:[%s12 + $0x54] sm:$0xff]
  %v1075 = vld [vmem:[%s12 + $0x5c] sm:$0xf]
  %v1076 = vld [vmem:[%s12 + $0x60] sm:$0xff]
  %v1077 = vld [vmem:[%s12 + $0x68] sm:$0xf]
  %v1078 = vld [vmem:[%s12 + $0x6c] sm:$0xff]
  %v1079 = vld [vmem:[%s12 + $0x74] sm:$0xf]
  %v1080 = vld [vmem:[%s12 + $0x78] sm:$0xff]
  %v1081 = vld [vmem:[%s12 + $0x80] sm:$0xf]
  %v1082 = vld [vmem:[%s12 + $0x84] sm:$0xff]
  %v1083 = vld [vmem:[%s12 + $0x8c] sm:$0xf]
  %v1084 = vld [vmem:[%s12 + $0x90] sm:$0xff]
  %v1085 = vld [vmem:[%s12 + $0x98] sm:$0xf]
  %v1086 = vld [vmem:[%s12 + $0x9c] sm:$0xff]
  %v1087 = vld [vmem:[%s12 + $0xa4] sm:$0xf]
  %v1088 = vld [vmem:[%s12 + $0xa8] sm:$0xff]
  %v1089 = vld [vmem:[%s12 + $0xb0] sm:$0xf]
  %v1090 = vld [vmem:[%s12 + $0xb4] sm:$0xff]
  %v1091 = vld [vmem:[%s12 + $0xbc] sm:$0xf]
  %v1092 = vld [vmem:[%s13] sm:$0x7]
  %v1094 = vlaneseq
  %v1095 = vshrl.u32 %v1094, 7
  %v1096 = vsub.s32 0, %v1095
  %v1097 = vrot.slane %v1092, %v1096
  %v1098 = vlaneseq
  %v1099 = vshrl.u32 %v1098, 7
  %v1100 = vsub.s32 1, %v1099
  %v1101 = vrot.slane %v1092, %v1100
  %v1102 = vlaneseq
  %v1103 = vshrl.u32 %v1102, 7
  %v1104 = vsub.s32 2, %v1103
  %v1105 = vrot.slane %v1092, %v1104
  %v1141 = vunpack.c.l.b16 %v1060
  %v1142 = vunpack.c.h.b16 %v1060
  %v1143 = vunpack.c.l.b16 %v1061
  %v1144 = vunpack.c.l.b16 %v1062
  %v1145 = vunpack.c.h.b16 %v1062
  %v1146 = vunpack.c.l.b16 %v1063
  %v1147 = vunpack.c.l.b16 %v1064
  %v1148 = vunpack.c.h.b16 %v1064
  %v1149 = vunpack.c.l.b16 %v1065
  %v1150 = vunpack.c.l.b16 %v1066
  %v1151 = vunpack.c.h.b16 %v1066
  %v1152 = vunpack.c.l.b16 %v1067
  %v1153 = vunpack.c.l.b16 %v1068
  %v1154 = vunpack.c.h.b16 %v1068
  %v1155 = vunpack.c.l.b16 %v1069
  %v1156 = vunpack.c.l.b16 %v1070
  %v1157 = vunpack.c.h.b16 %v1070
  %v1158 = vunpack.c.l.b16 %v1071
  %v1159 = vunpack.c.l.b16 %v1072
  %v1160 = vunpack.c.h.b16 %v1072
  %v1161 = vunpack.c.l.b16 %v1073
  %v1162 = vunpack.c.l.b16 %v1074
  %v1163 = vunpack.c.h.b16 %v1074
  %v1164 = vunpack.c.l.b16 %v1075
  %v1165 = vunpack.c.l.b16 %v1076
  %v1166 = vunpack.c.h.b16 %v1076
  %v1167 = vunpack.c.l.b16 %v1077
  %v1168 = vunpack.c.l.b16 %v1078
  %v1169 = vunpack.c.h.b16 %v1078
  %v1170 = vunpack.c.l.b16 %v1079
  %v1171 = vunpack.c.l.b16 %v1080
  %v1172 = vunpack.c.h.b16 %v1080
  %v1173 = vunpack.c.l.b16 %v1081
  %v1174 = vunpack.c.l.b16 %v1082
  %v1175 = vunpack.c.h.b16 %v1082
  %v1176 = vunpack.c.l.b16 %v1083
  %v1177 = vunpack.c.l.b16 %v1084
  %v1178 = vunpack.c.h.b16 %v1084
  %v1179 = vunpack.c.l.b16 %v1085
  %v1180 = vunpack.c.l.b16 %v1086
  %v1181 = vunpack.c.h.b16 %v1086
  %v1182 = vunpack.c.l.b16 %v1087
  %v1183 = vunpack.c.l.b16 %v1088
  %v1184 = vunpack.c.h.b16 %v1088
  %v1185 = vunpack.c.l.b16 %v1089
  %v1186 = vunpack.c.l.b16 %v1090
  %v1187 = vunpack.c.h.b16 %v1090
  %v1188 = vunpack.c.l.b16 %v1091
  %v1189 = vpack.c.b16 %v1144, %v1141
  %v1190 = vpack.c.b16 %v1145, %v1142
  %v1191 = vpack.c.b16 %v1146, %v1143
  %v1192 = vpack.c.b16 %v1150, %v1147
  %v1193 = vpack.c.b16 %v1151, %v1148
  %v1194 = vpack.c.b16 %v1152, %v1149
  %v1195 = vpack.c.b16 %v1156, %v1153
  %v1196 = vpack.c.b16 %v1157, %v1154
  %v1197 = vpack.c.b16 %v1158, %v1155
  %v1198 = vpack.c.b16 %v1162, %v1159
  %v1199 = vpack.c.b16 %v1163, %v1160
  %v1200 = vpack.c.b16 %v1164, %v1161
  %v1201 = vpack.c.b16 %v1168, %v1165
  %v1202 = vpack.c.b16 %v1169, %v1166
  %v1203 = vpack.c.b16 %v1170, %v1167
  %v1204 = vpack.c.b16 %v1174, %v1171
  %v1205 = vpack.c.b16 %v1175, %v1172
  %v1206 = vpack.c.b16 %v1176, %v1173
  %v1207 = vpack.c.b16 %v1180, %v1177
  %v1208 = vpack.c.b16 %v1181, %v1178
  %v1209 = vpack.c.b16 %v1182, %v1179
  %v1210 = vpack.c.b16 %v1186, %v1183
  %v1211 = vpack.c.b16 %v1187, %v1184
  %v1212 = vpack.c.b16 %v1188, %v1185
  %1237 = vmatprep.subr.bf16.mxu0 %v1190
  %1238 = vmatpush1.bf16.msra.mxu0 %v1189
  %1239 = vmatprep.subr.bf16.mxu0 %v1193
  %1240 = vmatpush1.bf16.msra.mxu0 %v1192
  %1241 = vmatprep.subr.bf16.mxu0 %v1196
  %1242 = vmatpush1.bf16.msra.mxu0 %v1195
  %1243 = vmatprep.subr.bf16.mxu0 %v1199
  %1244 = vmatpush1.bf16.msra.mxu0 %v1198
  %1245 = vmatprep.subr.bf16.mxu0 %v1202
  %1246 = vmatpush1.bf16.msra.mxu0 %v1201
  %1247 = vmatprep.subr.bf16.mxu0 %v1205
  %1248 = vmatpush1.bf16.msra.mxu0 %v1204
  %1249 = vmatprep.subr.bf16.mxu0 %v1208
  %1250 = vmatpush1.bf16.msra.mxu0 %v1207
  %1251 = vmatprep.subr.bf16.mxu0 %v1211
  %1252 = vmatpush1.bf16.msra.mxu0 %v1210
  %1253 = vmatprep.subr.bf16.mxu0 0
  %1254 = vmatpush1.bf16.msra.mxu0 0
  %1255 = vmatprep.subr.bf16.mxu0 0
  %1256 = vmatpush1.bf16.msra.mxu0 0
  %1257 = vmatprep.subr.bf16.mxu0 0
  %1258 = vmatpush1.bf16.msra.mxu0 0
  %1259 = vmatprep.subr.bf16.mxu0 0
  %1260 = vmatpush1.bf16.msra.mxu0 0
  %1261 = vmatprep.subr.bf16.mxu0 0
  %1262 = vmatpush1.bf16.msra.mxu0 0
  %1263 = vmatprep.subr.bf16.mxu0 0
  %1264 = vmatpush1.bf16.msra.mxu0 0
  %1265 = vmatprep.subr.bf16.mxu0 0
  %1266 = vmatpush1.bf16.msra.mxu0 0
  %1267 = vmatprep.subr.bf16.mxu0 0
  %1268 = vmatpush1.bf16.msra.mxu0 0
  %1269 = vmatprep.mubr.bf16.mxu0 0
  %1270 = vmatmul.mubr.bf16.gmra.mrb[0].mxu0 %v1059
  %v1271 = vpop.f32.mrb[0].mxu0
  %v1272 = vadd.f32 %v1097, %v1271
  %v1273 = vpop.f32.mrb[0].mxu0
  %v1274 = vadd.f32 %v1101, %v1273
  %v1275 = vpop.f32.mrb[0].mxu0
  %v1276 = vpop.f32.mrb[0].mxu0
  %1277 = vdwg.mxu0
  %1278 = vmatprep.subr.bf16.mxu0 0
  %1279 = vmatpush1.bf16.msra.mxu0 %v1191
  %1280 = vmatprep.subr.bf16.mxu0 0
  %1281 = vmatpush1.bf16.msra.mxu0 %v1194
  %1282 = vmatprep.subr.bf16.mxu0 0
  %1283 = vmatpush1.bf16.msra.mxu0 %v1197
  %1284 = vmatprep.subr.bf16.mxu0 0
  %1285 = vmatpush1.bf16.msra.mxu0 %v1200
  %1286 = vmatprep.subr.bf16.mxu0 0
  %1287 = vmatpush1.bf16.msra.mxu0 %v1203
  %1288 = vmatprep.subr.bf16.mxu0 0
  %1289 = vmatpush1.bf16.msra.mxu0 %v1206
  %1290 = vmatprep.subr.bf16.mxu0 0
  %1291 = vmatpush1.bf16.msra.mxu0 %v1209
  %1292 = vmatprep.subr.bf16.mxu0 0
  %1293 = vmatpush1.bf16.msra.mxu0 %v1212
  %1294 = vmatprep.subr.bf16.mxu0 0
  %1295 = vmatpush1.bf16.msra.mxu0 0
  %1296 = vmatprep.subr.bf16.mxu0 0
  %1297 = vmatpush1.bf16.msra.mxu0 0
  %1298 = vmatprep.subr.bf16.mxu0 0
  %1299 = vmatpush1.bf16.msra.mxu0 0
  %1300 = vmatprep.subr.bf16.mxu0 0
  %1301 = vmatpush1.bf16.msra.mxu0 0
  %1302 = vmatprep.subr.bf16.mxu0 0
  %1303 = vmatpush1.bf16.msra.mxu0 0
  %1304 = vmatprep.subr.bf16.mxu0 0
  %1305 = vmatpush1.bf16.msra.mxu0 0
  %1306 = vmatprep.subr.bf16.mxu0 0
  %1307 = vmatpush1.bf16.msra.mxu0 0
  %1308 = vmatprep.subr.bf16.mxu0 0
  %1309 = vmatpush1.bf16.msra.mxu0 0
  %1310 = vmatprep.mubr.bf16.mxu0 0
  %1311 = vmatmul.mubr.bf16.gmra.mrb[0].mxu0 %v1059
  %v1312 = vpop.f32.mrb[0].mxu0
  %v1313 = vadd.f32 %v1105, %v1312
  %v1314 = vpop.f32.mrb[0].mxu0
  %v1315 = vpop.f32.mrb[0].mxu0
  %v1316 = vpop.f32.mrb[0].mxu0
  %1317 = vdwg.mxu0
  %v1318 = vmax.f32 %v1272, 0.0
  %v1319 = vmax.f32 %v1274, 0.0
  %v1320 = vmax.f32 %v1313, 0.0
  %v1324 = vcombine.low %v1318, %v1319
  %v1326 = vunpack.c.l.s4 1983009808
  %v1327 = vunpack.c.0.s8 %v1326
  %v1328 = vlaneseq
  %v1329 = vshrl.u32 %v1328, 7
  %v1330 = vsub.s32 %v1327, %v1329
  %v1331 = vrot.slane %v1324, %v1330
  %v1333 = vunpack.c.l.s4 1983009808
  %v1334 = vunpack.c.0.s8 %v1333
  %v1335 = vlaneseq
  %v1336 = vshrl.u32 %v1335, 7
  %v1337 = vsub.s32 %v1334, %v1336
  %v1338 = vrot.slane %v1320, %v1337
  %v1339 = vcombine.low %v1331, %v1338
  %vm1341 = vcmask 1043458
  %vm1342 = vmor %vm1341, %vm1014
  %vm1343 = vcmask 259076
  %vm1344 = vmor %vm1343, %vm1342
  %1345 = vst.msk [vmem:[%s14] sm:$0x3f] %vm1344, %v1339
  // Predicated region
  $region58: #{vae_forward.8} parent=0 // pred_check
    _
  $region59: #{vae_forward.8} parent=0 // pred_check_branch
    %1347 = sbr.rel (0) target = $region61
  $region60: #{vae_forward.8} parent=0 // pred_region
    _
  $region61: #{vae_forward.8} parent=0 // pred_fallthru
    _
  // Predicated region
  $region62: #{vae_forward.8} parent=0 // pred_check
    _
  $region63: #{vae_forward.8} parent=0 // pred_check_branch
    %1349 = sbr.rel (0) target = $region65
  $region64: #{vae_forward.8} parent=0 // pred_region
    _
  $region65: #{vae_forward.8} parent=0 // pred_fallthru
    _

// kernel: vae_forward.9
$region0: #{vae_forward.9}
  #allocation0 [shape = 'u32[]', space=smem, size = 0x4, offset = 0x4, fixed_abs, tag = 'smem constant byte address 0x4 - core index']
  #allocation1 [shape = 'u32[144,128]{1,0:T(1,128)}', space=vmem, size = 0x12000, scoped, tag = 'internal scratch']
  %s0 = inlined_call_operand.vmem [shape: bf16[98,288], index: 0, kind: input, shape index: {}]
  %s1 = inlined_call_operand.vmem [shape: bf16[288,16], index: 1, kind: input, shape index: {}]
  %s2 = inlined_call_operand.vmem [shape: f32[1,16], index: 2, kind: input, shape index: {}]
  %s3 = inlined_call_operand.vmem [shape: f32[1,16], index: 3, kind: input, shape index: {}]
  %s4 = inlined_call_operand.vmem [shape: f32[1,16], index: 4, kind: input, shape index: {}]
  %s5 = inlined_call_operand.vmem [shape: f32[98,16], index: 5, kind: output, shape index: {}]
  %s6 = sld [smem:[#allocation0]]
  $region30: #{vae_forward.9} parent=0
    _
  %s8 = ssub.s32 1, %s6
  %s9 = scalar_select 0, %s8, %s6
  // Predicated region
  $region2: #{vae_forward.9} parent=0 // pred_check
    _
  $region3: #{vae_forward.9} parent=0 // pred_check_branch
    %11 = sbr.rel (0) target = $region5
  $region4: #{vae_forward.9} parent=0 // pred_region
    _
  $region5: #{vae_forward.9} parent=0 // pred_fallthru
    _
  // Predicated region
  $region6: #{vae_forward.9} parent=0 // pred_check
    _
  $region7: #{vae_forward.9} parent=0 // pred_check_branch
    %13 = sbr.rel (0) target = $region9
  $region8: #{vae_forward.9} parent=0 // pred_region
    _
  $region9: #{vae_forward.9} parent=0 // pred_fallthru
    _
  // Predicated region
  $region10: #{vae_forward.9} parent=0 // pred_check
    _
  $region11: #{vae_forward.9} parent=0 // pred_check_branch
    %15 = sbr.rel (0) target = $region13
  $region12: #{vae_forward.9} parent=0 // pred_region
    _
  $region13: #{vae_forward.9} parent=0 // pred_fallthru
    _
  // Predicated region
  $region14: #{vae_forward.9} parent=0 // pred_check
    _
  $region15: #{vae_forward.9} parent=0 // pred_check_branch
    %17 = sbr.rel (0) target = $region17
  $region16: #{vae_forward.9} parent=0 // pred_region
    _
  $region17: #{vae_forward.9} parent=0 // pred_fallthru
    _
  // Predicated region
  $region18: #{vae_forward.9} parent=0 // pred_check
    _
  $region19: #{vae_forward.9} parent=0 // pred_check_branch
    %19 = sbr.rel (0) target = $region21
  $region20: #{vae_forward.9} parent=0 // pred_region
    _
  $region21: #{vae_forward.9} parent=0 // pred_fallthru
    _
  %v21 = vld [vmem:[%s0] sm:$0xff]
  %v22 = vld [vmem:[%s0 + $0x8] sm:$0xf]
  %v23 = vld [vmem:[%s0 + $0xc] sm:$0xff]
  %v24 = vld [vmem:[%s0 + $0x14] sm:$0xf]
  %v25 = vld [vmem:[%s0 + $0x18] sm:$0xff]
  %v26 = vld [vmem:[%s0 + $0x20] sm:$0xf]
  %v27 = vld [vmem:[%s0 + $0x24] sm:$0xff]
  %v28 = vld [vmem:[%s0 + $0x2c] sm:$0xf]
  %v29 = vld [vmem:[%s0 + $0x30] sm:$0xff]
  %v30 = vld [vmem:[%s0 + $0x38] sm:$0xf]
  %v31 = vld [vmem:[%s0 + $0x3c] sm:$0xff]
  %v32 = vld [vmem:[%s0 + $0x44] sm:$0xf]
  %v33 = vld [vmem:[%s0 + $0x48] sm:$0xff]
  %v34 = vld [vmem:[%s0 + $0x50] sm:$0xf]
  %v35 = vld [vmem:[%s0 + $0x54] sm:$0xff]
  %v36 = vld [vmem:[%s0 + $0x5c] sm:$0xf]
  %v37 = vld [vmem:[%s0 + $0x60] sm:$0xff]
  %v38 = vld [vmem:[%s0 + $0x68] sm:$0xf]
  %v39 = vld [vmem:[%s0 + $0x6c] sm:$0xff]
  %v40 = vld [vmem:[%s0 + $0x74] sm:$0xf]
  %v41 = vld [vmem:[%s0 + $0x78] sm:$0xff]
  %v42 = vld [vmem:[%s0 + $0x80] sm:$0xf]
  %v43 = vld [vmem:[%s0 + $0x84] sm:$0xff]
  %v44 = vld [vmem:[%s0 + $0x8c] sm:$0xf]
  %v45 = vld [vmem:[%s0 + $0x90] sm:$0x11]
  %v46 = vld [vmem:[%s0 + $0x98] sm:$0x1]
  %v47 = vld [vmem:[%s1] sm:$0xf]
  %v48 = vld [vmem:[%s1 + $0x4] sm:$0xf]
  %v49 = vld [vmem:[%s1 + $0x8] sm:$0xf]
  %v50 = vld [vmem:[%s1 + $0xc] sm:$0xf]
  %v51 = vld [vmem:[%s1 + $0x10] sm:$0xf]
  %v52 = vld [vmem:[%s1 + $0x14] sm:$0xf]
  %v53 = vld [vmem:[%s1 + $0x18] sm:$0xf]
  %v54 = vld [vmem:[%s1 + $0x1c] sm:$0xf]
  %v55 = vld [vmem:[%s1 + $0x20] sm:$0xf]
  %v56 = vld [vmem:[%s1 + $0x24] sm:$0xf]
  %v57 = vld [vmem:[%s1 + $0x28] sm:$0xf]
  %v58 = vld [vmem:[%s1 + $0x2c] sm:$0xf]
  %v59 = vld [vmem:[%s1 + $0x30] sm:$0xf]
  %v60 = vld [vmem:[%s1 + $0x34] sm:$0xf]
  %v61 = vld [vmem:[%s1 + $0x38] sm:$0xf]
  %v62 = vld [vmem:[%s1 + $0x3c] sm:$0xf]
  %v63 = vld [vmem:[%s1 + $0x40] sm:$0xf]
  %v64 = vld [vmem:[%s1 + $0x44] sm:$0xf]
  %v65 = vld [vmem:[%s1 + $0x48] sm:$0xf]
  %v66 = vld [vmem:[%s1 + $0x4c] sm:$0xf]
  %v67 = vld [vmem:[%s1 + $0x50] sm:$0xf]
  %v68 = vld [vmem:[%s1 + $0x54] sm:$0xf]
  %v69 = vld [vmem:[%s1 + $0x58] sm:$0xf]
  %v70 = vld [vmem:[%s1 + $0x5c] sm:$0xf]
  %v71 = vld [vmem:[%s1 + $0x60] sm:$0xf]
  %v72 = vld [vmem:[%s1 + $0x64] sm:$0xf]
  %v73 = vld [vmem:[%s1 + $0x68] sm:$0xf]
  %v74 = vld [vmem:[%s1 + $0x6c] sm:$0xf]
  %v75 = vld [vmem:[%s1 + $0x70] sm:$0xf]
  %v76 = vld [vmem:[%s1 + $0x74] sm:$0xf]
  %v77 = vld [vmem:[%s1 + $0x78] sm:$0xf]
  %v78 = vld [vmem:[%s1 + $0x7c] sm:$0xf]
  %v79 = vld [vmem:[%s1 + $0x80] sm:$0xf]
  %v80 = vld [vmem:[%s1 + $0x84] sm:$0xf]
  %v81 = vld [vmem:[%s1 + $0x88] sm:$0xf]
  %v82 = vld [vmem:[%s1 + $0x8c] sm:$0xf]
  %v83 = vld [vmem:[%s2] sm:$0x1]
  %v85 = vlaneseq
  %v86 = vshrl.u32 %v85, 7
  %v87 = vsub.s32 0, %v86
  %v88 = vrot.slane %v83, %v87
  %v116 = vunpack.c.l.b16 %v21
  %v117 = vunpack.c.h.b16 %v21
  %v118 = vunpack.c.l.b16 %v22
  %v119 = vunpack.c.l.b16 %v23
  %v120 = vunpack.c.h.b16 %v23
  %v121 = vunpack.c.l.b16 %v24
  %v122 = vunpack.c.l.b16 %v25
  %v123 = vunpack.c.h.b16 %v25
  %v124 = vunpack.c.l.b16 %v26
  %v125 = vunpack.c.l.b16 %v27
  %v126 = vunpack.c.h.b16 %v27
  %v127 = vunpack.c.l.b16 %v28
  %v128 = vunpack.c.l.b16 %v29
  %v129 = vunpack.c.h.b16 %v29
  %v130 = vunpack.c.l.b16 %v30
  %v131 = vunpack.c.l.b16 %v31
  %v132 = vunpack.c.h.b16 %v31
  %v133 = vunpack.c.l.b16 %v32
  %v134 = vunpack.c.l.b16 %v33
  %v135 = vunpack.c.h.b16 %v33
  %v136 = vunpack.c.l.b16 %v34
  %v137 = vunpack.c.l.b16 %v35
  %v138 = vunpack.c.h.b16 %v35
  %v139 = vunpack.c.l.b16 %v36
  %v140 = vunpack.c.l.b16 %v37
  %v141 = vunpack.c.h.b16 %v37
  %v142 = vunpack.c.l.b16 %v38
  %v143 = vunpack.c.l.b16 %v39
  %v144 = vunpack.c.h.b16 %v39
  %v145 = vunpack.c.l.b16 %v40
  %v146 = vunpack.c.l.b16 %v41
  %v147 = vunpack.c.h.b16 %v41
  %v148 = vunpack.c.l.b16 %v42
  %v149 = vunpack.c.l.b16 %v43
  %v150 = vunpack.c.h.b16 %v43
  %v151 = vunpack.c.l.b16 %v44
  %v152 = vunpack.c.l.b16 %v45
  %v153 = vunpack.c.h.b16 %v45
  %v154 = vunpack.c.l.b16 %v46
  %v155 = vpack.c.b16 %v119, %v116
  %v156 = vpack.c.b16 %v120, %v117
  %v157 = vpack.c.b16 %v121, %v118
  %v158 = vpack.c.b16 %v125, %v122
  %v159 = vpack.c.b16 %v126, %v123
  %v160 = vpack.c.b16 %v127, %v124
  %v161 = vpack.c.b16 %v131, %v128
  %v162 = vpack.c.b16 %v132, %v129
  %v163 = vpack.c.b16 %v133, %v130
  %v164 = vpack.c.b16 %v137, %v134
  %v165 = vpack.c.b16 %v138, %v135
  %v166 = vpack.c.b16 %v139, %v136
  %v167 = vpack.c.b16 %v143, %v140
  %v168 = vpack.c.b16 %v144, %v141
  %v169 = vpack.c.b16 %v145, %v142
  %v170 = vpack.c.b16 %v149, %v146
  %v171 = vpack.c.b16 %v150, %v147
  %v172 = vpack.c.b16 %v151, %v148
  %v173 = vpack.c.b16 %v152, %v152
  %v174 = vpack.c.b16 %v153, %v153
  %v175 = vpack.c.b16 %v154, %v154
  %v226 = vunpack.c.l.b16 %v47
  %v227 = vunpack.c.l.b16 %v48
  %v228 = vunpack.c.l.b16 %v49
  %v229 = vunpack.c.l.b16 %v50
  %v230 = vunpack.c.l.b16 %v51
  %v231 = vunpack.c.l.b16 %v52
  %v232 = vunpack.c.l.b16 %v53
  %v233 = vunpack.c.l.b16 %v54
  %v234 = vunpack.c.l.b16 %v55
  %v235 = vunpack.c.l.b16 %v56
  %v236 = vunpack.c.l.b16 %v57
  %v237 = vunpack.c.l.b16 %v58
  %v238 = vunpack.c.l.b16 %v59
  %v239 = vunpack.c.l.b16 %v60
  %v240 = vunpack.c.l.b16 %v61
  %v241 = vunpack.c.l.b16 %v62
  %v242 = vunpack.c.l.b16 %v63
  %v243 = vunpack.c.l.b16 %v64
  %v244 = vunpack.c.l.b16 %v65
  %v245 = vunpack.c.l.b16 %v66
  %v246 = vunpack.c.l.b16 %v67
  %v247 = vunpack.c.l.b16 %v68
  %v248 = vunpack.c.l.b16 %v69
  %v249 = vunpack.c.l.b16 %v70
  %v250 = vunpack.c.l.b16 %v71
  %v251 = vunpack.c.l.b16 %v72
  %v252 = vunpack.c.l.b16 %v73
  %v253 = vunpack.c.l.b16 %v74
  %v254 = vunpack.c.l.b16 %v75
  %v255 = vunpack.c.l.b16 %v76
  %v256 = vunpack.c.l.b16 %v77
  %v257 = vunpack.c.l.b16 %v78
  %v258 = vunpack.c.l.b16 %v79
  %v259 = vunpack.c.l.b16 %v80
  %v260 = vunpack.c.l.b16 %v81
  %v261 = vunpack.c.l.b16 %v82
  %v262 = vpack.c.b16 %v227, %v226
  %v263 = vpack.c.b16 %v229, %v228
  %v264 = vpack.c.b16 %v231, %v230
  %v265 = vpack.c.b16 %v233, %v232
  %v266 = vpack.c.b16 %v235, %v234
  %v267 = vpack.c.b16 %v237, %v236
  %v268 = vpack.c.b16 %v239, %v238
  %v269 = vpack.c.b16 %v241, %v240
  %v270 = vpack.c.b16 %v243, %v242
  %v271 = vpack.c.b16 %v245, %v244
  %v272 = vpack.c.b16 %v247, %v246
  %v273 = vpack.c.b16 %v249, %v248
  %v274 = vpack.c.b16 %v251, %v250
  %v275 = vpack.c.b16 %v253, %v252
  %v276 = vpack.c.b16 %v255, %v254
  %v277 = vpack.c.b16 %v257, %v256
  %v278 = vpack.c.b16 %v259, %v258
  %v279 = vpack.c.b16 %v261, %v260
  %vm298 = vcmask 261120
  %v300 = vsel %vm298, %v157, 0
  %v303 = vsel %vm298, %v160, 0
  %v306 = vsel %vm298, %v163, 0
  %v309 = vsel %vm298, %v166, 0
  %v312 = vsel %vm298, %v169, 0
  %v315 = vsel %vm298, %v172, 0
  %v318 = vsel %vm298, %v175, 0
  %320 = vmatprep.subr.bf16.mxu0 0
  %321 = vmatpush1.bf16.msra.mxu0 %v262
  %322 = vmatprep.subr.bf16.mxu0 0
  %323 = vmatpush1.bf16.msra.mxu0 %v263
  %324 = vmatprep.subr.bf16.mxu0 0
  %325 = vmatpush1.bf16.msra.mxu0 %v264
  %326 = vmatprep.subr.bf16.mxu0 0
  %327 = vmatpush1.bf16.msra.mxu0 %v265
  %328 = vmatprep.subr.bf16.mxu0 0
  %329 = vmatpush1.bf16.msra.mxu0 %v266
  %330 = vmatprep.subr.bf16.mxu0 0
  %331 = vmatpush1.bf16.msra.mxu0 %v267
  %332 = vmatprep.subr.bf16.mxu0 0
  %333 = vmatpush1.bf16.msra.mxu0 %v268
  %334 = vmatprep.subr.bf16.mxu0 0
  %335 = vmatpush1.bf16.msra.mxu0 %v269
  %336 = vmatprep.subr.bf16.mxu0 0
  %337 = vmatpush1.bf16.msra.mxu0 %v270
  %338 = vmatprep.subr.bf16.mxu0 0
  %339 = vmatpush1.bf16.msra.mxu0 %v271
  %340 = vmatprep.subr.bf16.mxu0 0
  %341 = vmatpush1.bf16.msra.mxu0 %v272
  %342 = vmatprep.subr.bf16.mxu0 0
  %343 = vmatpush1.bf16.msra.mxu0 %v273
  %344 = vmatprep.subr.bf16.mxu0 0
  %345 = vmatpush1.bf16.msra.mxu0 %v274
  %346 = vmatprep.subr.bf16.mxu0 0
  %347 = vmatpush1.bf16.msra.mxu0 %v275
  %348 = vmatprep.subr.bf16.mxu0 0
  %349 = vmatpush1.bf16.msra.mxu0 %v276
  %350 = vmatprep.subr.bf16.mxu0 0
  %351 = vmatpush1.bf16.msra.mxu0 %v277
  %352 = vmatprep.mubr.bf16.mxu0 %v156
  %353 = vmatmul.mubr.bf16.gmra.mrb[0].mxu0 %v155
  %v354 = vpop.f32.mrb[0].mxu0
  %v355 = vadd.f32 %v88, %v354
  %v356 = vpop.f32.mrb[0].mxu0
  %v357 = vpop.f32.mrb[0].mxu0
  %v358 = vadd.f32 %v88, %v357
  %v359 = vpop.f32.mrb[0].mxu0
  %360 = vmatprep.mubr.bf16.mxu0 %v159
  %361 = vmatmul.mubr.bf16.gmra.mrb[0].mxu0 %v158
  %v362 = vpop.f32.mrb[0].mxu0
  %v363 = vadd.f32 %v88, %v362
  %v364 = vpop.f32.mrb[0].mxu0
  %v365 = vpop.f32.mrb[0].mxu0
  %v366 = vadd.f32 %v88, %v365
  %v367 = vpop.f32.mrb[0].mxu0
  %368 = vmatprep.mubr.bf16.mxu0 %v162
  %369 = vmatmul.mubr.bf16.gmra.mrb[0].mxu0 %v161
  %v370 = vpop.f32.mrb[0].mxu0
  %v371 = vadd.f32 %v88, %v370
  %v372 = vpop.f32.mrb[0].mxu0
  %v373 = vpop.f32.mrb[0].mxu0
  %v374 = vadd.f32 %v88, %v373
  %v375 = vpop.f32.mrb[0].mxu0
  %376 = vmatprep.mubr.bf16.mxu0 %v165
  %377 = vmatmul.mubr.bf16.gmra.mrb[0].mxu0 %v164
  %v378 = vpop.f32.mrb[0].mxu0
  %v379 = vadd.f32 %v88, %v378
  %v380 = vpop.f32.mrb[0].mxu0
  %v381 = vpop.f32.mrb[0].mxu0
  %v382 = vadd.f32 %v88, %v381
  %v383 = vpop.f32.mrb[0].mxu0
  %384 = vmatprep.mubr.bf16.mxu0 %v168
  %385 = vmatmul.mubr.bf16.gmra.mrb[0].mxu0 %v167
  %v386 = vpop.f32.mrb[0].mxu0
  %v387 = vadd.f32 %v88, %v386
  %v388 = vpop.f32.mrb[0].mxu0
  %v389 = vpop.f32.mrb[0].mxu0
  %v390 = vadd.f32 %v88, %v389
  %v391 = vpop.f32.mrb[0].mxu0
  %392 = vmatprep.mubr.bf16.mxu0 %v171
  %393 = vmatmul.mubr.bf16.gmra.mrb[0].mxu0 %v170
  %v394 = vpop.f32.mrb[0].mxu0
  %v395 = vadd.f32 %v88, %v394
  %v396 = vpop.f32.mrb[0].mxu0
  %v397 = vpop.f32.mrb[0].mxu0
  %v398 = vadd.f32 %v88, %v397
  %v399 = vpop.f32.mrb[0].mxu0
  %400 = vmatprep.mubr.bf16.mxu0 %v174
  %401 = vmatmul.mubr.bf16.gmra.mrb[0].mxu0 %v173
  %v402 = vpop.f32.mrb[0].mxu0
  %v403 = vadd.f32 %v88, %v402
  %v404 = vpop.f32.mrb[0].mxu0
  %v405 = vpop.f32.mrb[0].mxu0
  %v406 = vpop.f32.mrb[0].mxu0
  %407 = vdwg.mxu0
  %408 = vmatprep.subr.bf16.mxu0 0
  %409 = vmatpush1.bf16.msra.mxu0 %v278
  %410 = vmatprep.subr.bf16.mxu0 0
  %411 = vmatpush1.bf16.msra.mxu0 %v279
  %412 = vmatprep.subr.bf16.mxu0 0
  %413 = vmatpush1.bf16.msra.mxu0 0
  %414 = vmatprep.subr.bf16.mxu0 0
  %415 = vmatpush1.bf16.msra.mxu0 0
  %416 = vmatprep.subr.bf16.mxu0 0
  %417 = vmatpush1.bf16.msra.mxu0 0
  %418 = vmatprep.subr.bf16.mxu0 0
  %419 = vmatpush1.bf16.msra.mxu0 0
  %420 = vmatprep.subr.bf16.mxu0 0
  %421 = vmatpush1.bf16.msra.mxu0 0
  %422 = vmatprep.subr.bf16.mxu0 0
  %423 = vmatpush1.bf16.msra.mxu0 0
  %424 = vmatprep.subr.bf16.mxu0 0
  %425 = vmatpush1.bf16.msra.mxu0 0
  %426 = vmatprep.subr.bf16.mxu0 0
  %427 = vmatpush1.bf16.msra.mxu0 0
  %428 = vmatprep.subr.bf16.mxu0 0
  %429 = vmatpush1.bf16.msra.mxu0 0
  %430 = vmatprep.subr.bf16.mxu0 0
  %431 = vmatpush1.bf16.msra.mxu0 0
  %432 = vmatprep.subr.bf16.mxu0 0
  %433 = vmatpush1.bf16.msra.mxu0 0
  %434 = vmatprep.subr.bf16.mxu0 0
  %435 = vmatpush1.bf16.msra.mxu0 0
  %436 = vmatprep.subr.bf16.mxu0 0
  %437 = vmatpush1.bf16.msra.mxu0 0
  %438 = vmatprep.subr.bf16.mxu0 0
  %439 = vmatpush1.bf16.msra.mxu0 0
  %440 = vmatprep.mubr.bf16.mxu0 0
  %441 = vmatmul.mubr.bf16.gmra.mrb[0].mxu0 %v300
  %v442 = vpop.f32.mrb[0].mxu0
  %v443 = vadd.f32 %v355, %v442
  %v444 = vpop.f32.mrb[0].mxu0
  %v445 = vpop.f32.mrb[0].mxu0
  %v446 = vadd.f32 %v358, %v445
  %v447 = vpop.f32.mrb[0].mxu0
  %448 = vmatprep.mubr.bf16.mxu0 0
  %449 = vmatmul.mubr.bf16.gmra.mrb[0].mxu0 %v303
  %v450 = vpop.f32.mrb[0].mxu0
  %v451 = vadd.f32 %v363, %v450
  %v452 = vpop.f32.mrb[0].mxu0
  %v453 = vpop.f32.mrb[0].mxu0
  %v454 = vadd.f32 %v366, %v453
  %v455 = vpop.f32.mrb[0].mxu0
  %456 = vmatprep.mubr.bf16.mxu0 0
  %457 = vmatmul.mubr.bf16.gmra.mrb[0].mxu0 %v306
  %v458 = vpop.f32.mrb[0].mxu0
  %v459 = vadd.f32 %v371, %v458
  %v460 = vpop.f32.mrb[0].mxu0
  %v461 = vpop.f32.mrb[0].mxu0
  %v462 = vadd.f32 %v374, %v461
  %v463 = vpop.f32.mrb[0].mxu0
  %464 = vmatprep.mubr.bf16.mxu0 0
  %465 = vmatmul.mubr.bf16.gmra.mrb[0].mxu0 %v309
  %v466 = vpop.f32.mrb[0].mxu0
  %v467 = vadd.f32 %v379, %v466
  %v468 = vpop.f32.mrb[0].mxu0
  %v469 = vpop.f32.mrb[0].mxu0
  %v470 = vadd.f32 %v382, %v469
  %v471 = vpop.f32.mrb[0].mxu0
  %472 = vmatprep.mubr.bf16.mxu0 0
  %473 = vmatmul.mubr.bf16.gmra.mrb[0].mxu0 %v312
  %v474 = vpop.f32.mrb[0].mxu0
  %v475 = vadd.f32 %v387, %v474
  %v476 = vpop.f32.mrb[0].mxu0
  %v477 = vpop.f32.mrb[0].mxu0
  %v478 = vadd.f32 %v390, %v477
  %v479 = vpop.f32.mrb[0].mxu0
  %480 = vmatprep.mubr.bf16.mxu0 0
  %481 = vmatmul.mubr.bf16.gmra.mrb[0].mxu0 %v315
  %v482 = vpop.f32.mrb[0].mxu0
  %v483 = vadd.f32 %v395, %v482
  %v484 = vpop.f32.mrb[0].mxu0
  %v485 = vpop.f32.mrb[0].mxu0
  %v486 = vadd.f32 %v398, %v485
  %v487 = vpop.f32.mrb[0].mxu0
  %488 = vmatprep.mubr.bf16.mxu0 0
  %489 = vmatmul.mubr.bf16.gmra.mrb[0].mxu0 %v318
  %v490 = vpop.f32.mrb[0].mxu0
  %v491 = vadd.f32 %v403, %v490
  %v492 = vpop.f32.mrb[0].mxu0
  %v493 = vpop.f32.mrb[0].mxu0
  %v494 = vpop.f32.mrb[0].mxu0
  %495 = vdwg.mxu0
  %vm496 = vcmask 130048
  %v497 = vsel %vm496, %v443, 0.0
  %v498 = vsel %vm496, %v446, 0.0
  %v499 = vadd.f32 %v497, %v498
  %v500 = vsel %vm496, %v451, 0.0
  %v501 = vadd.f32 %v499, %v500
  %v502 = vsel %vm496, %v454, 0.0
  %v503 = vadd.f32 %v501, %v502
  %v504 = vsel %vm496, %v459, 0.0
  %v505 = vadd.f32 %v503, %v504
  %v506 = vsel %vm496, %v462, 0.0
  %v507 = vadd.f32 %v505, %v506
  %v508 = vsel %vm496, %v467, 0.0
  %v509 = vadd.f32 %v507, %v508
  %v510 = vsel %vm496, %v470, 0.0
  %v511 = vadd.f32 %v509, %v510
  %v512 = vsel %vm496, %v475, 0.0
  %v513 = vadd.f32 %v511, %v512
  %v514 = vsel %vm496, %v478, 0.0
  %v515 = vadd.f32 %v513, %v514
  %v516 = vsel %vm496, %v483, 0.0
  %v517 = vadd.f32 %v515, %v516
  %v518 = vsel %vm496, %v486, 0.0
  %v519 = vadd.f32 %v517, %v518
  %vm520 = vcmask 123904
  %v521 = vsel %vm520, %v491, 0.0
  %v522 = vadd.f32 %v519, %v521
  %v523 = vrot.slane %v522, 4
  %v524 = vadd.f32 %v522, %v523
  %v525 = vrot.slane %v524, 2
  %v526 = vadd.f32 %v524, %v525
  %v527 = vrot.slane %v526, 1
  %v528 = vadd.f32 %v526, %v527
  %v529 = vmul.f32 %v528, 0.010204081
  %v530 = vsub.f32 %v443, %v529
  %v531 = vsub.f32 %v446, %v529
  %v532 = vsub.f32 %v451, %v529
  %v533 = vsub.f32 %v454, %v529
  %v534 = vsub.f32 %v459, %v529
  %v535 = vsub.f32 %v462, %v529
  %v536 = vsub.f32 %v467, %v529
  %v537 = vsub.f32 %v470, %v529
  %v538 = vsub.f32 %v475, %v529
  %v539 = vsub.f32 %v478, %v529
  %v540 = vsub.f32 %v483, %v529
  %v541 = vsub.f32 %v486, %v529
  %v542 = vsub.f32 %v491, %v529
  %v543 = vmul.f32 %v530, %v530
  %v544 = vmul.f32 %v531, %v531
  %v545 = vmul.f32 %v532, %v532
  %v546 = vmul.f32 %v533, %v533
  %v547 = vmul.f32 %v534, %v534
  %v548 = vmul.f32 %v535, %v535
  %v549 = vmul.f32 %v536, %v536
  %v550 = vmul.f32 %v537, %v537
  %v551 = vmul.f32 %v538, %v538
  %v552 = vmul.f32 %v539, %v539
  %v553 = vmul.f32 %v540, %v540
  %v554 = vmul.f32 %v541, %v541
  %v555 = vmul.f32 %v542, %v542
  %v556 = vsel %vm496, %v543, 0.0
  %v557 = vsel %vm496, %v544, 0.0
  %v558 = vadd.f32 %v556, %v557
  %v559 = vsel %vm496, %v545, 0.0
  %v560 = vadd.f32 %v558, %v559
  %v561 = vsel %vm496, %v546, 0.0
  %v562 = vadd.f32 %v560, %v561
  %v563 = vsel %vm496, %v547, 0.0
  %v564 = vadd.f32 %v562, %v563
  %v565 = vsel %vm496, %v548, 0.0
  %v566 = vadd.f32 %v564, %v565
  %v567 = vsel %vm496, %v549, 0.0
  %v568 = vadd.f32 %v566, %v567
  %v569 = vsel %vm496, %v550, 0.0
  %v570 = vadd.f32 %v568, %v569
  %v571 = vsel %vm496, %v551, 0.0
  %v572 = vadd.f32 %v570, %v571
  %v573 = vsel %vm496, %v552, 0.0
  %v574 = vadd.f32 %v572, %v573
  %v575 = vsel %vm496, %v553, 0.0
  %v576 = vadd.f32 %v574, %v575
  %v577 = vsel %vm496, %v554, 0.0
  %v578 = vadd.f32 %v576, %v577
  %v579 = vsel %vm520, %v555, 0.0
  %v580 = vadd.f32 %v578, %v579
  %v581 = vrot.slane %v580, 4
  %v582 = vadd.f32 %v580, %v581
  %v583 = vrot.slane %v582, 2
  %v584 = vadd.f32 %v582, %v583
  %v585 = vrot.slane %v584, 1
  %v586 = vadd.f32 %v584, %v585
  %v587 = vmul.f32 %v586, 0.010204081
  %v588 = vld [vmem:[%s3] sm:$0x1]
  %v589 = vadd.f32 %v587, 1e-05
  %v590 = vrsqrt.pop %v589
  %v591 = vmul.f32 %v530, %v590
  %v592 = vmul.f32 %v531, %v590
  %v593 = vmul.f32 %v532, %v590
  %v594 = vmul.f32 %v533, %v590
  %v595 = vmul.f32 %v534, %v590
  %v596 = vmul.f32 %v535, %v590
  %v597 = vmul.f32 %v536, %v590
  %v598 = vmul.f32 %v537, %v590
  %v599 = vmul.f32 %v538, %v590
  %v600 = vmul.f32 %v539, %v590
  %v601 = vmul.f32 %v540, %v590
  %v602 = vmul.f32 %v541, %v590
  %v603 = vmul.f32 %v542, %v590
  %v605 = vlaneseq
  %v606 = vshrl.u32 %v605, 7
  %v607 = vsub.s32 0, %v606
  %v608 = vrot.slane %v588, %v607
  %v610 = vmul.f32 %v608, %v591
  %v611 = vmul.f32 %v608, %v592
  %v612 = vmul.f32 %v608, %v593
  %v613 = vmul.f32 %v608, %v594
  %v614 = vmul.f32 %v608, %v595
  %v615 = vmul.f32 %v608, %v596
  %v616 = vmul.f32 %v608, %v597
  %v617 = vmul.f32 %v608, %v598
  %v618 = vmul.f32 %v608, %v599
  %v619 = vmul.f32 %v608, %v600
  %v620 = vmul.f32 %v608, %v601
  %v621 = vmul.f32 %v608, %v602
  %v622 = vmul.f32 %v608, %v603
  %v623 = vld [vmem:[%s4] sm:$0x1]
  %v625 = vlaneseq
  %v626 = vshrl.u32 %v625, 7
  %v627 = vsub.s32 0, %v626
  %v628 = vrot.slane %v623, %v627
  %v630 = vadd.f32 %v610, %v628
  %v631 = vadd.f32 %v611, %v628
  %v632 = vadd.f32 %v612, %v628
  %v633 = vadd.f32 %v613, %v628
  %v634 = vadd.f32 %v614, %v628
  %v635 = vadd.f32 %v615, %v628
  %v636 = vadd.f32 %v616, %v628
  %v637 = vadd.f32 %v617, %v628
  %v638 = vadd.f32 %v618, %v628
  %v639 = vadd.f32 %v619, %v628
  %v640 = vadd.f32 %v620, %v628
  %v641 = vadd.f32 %v621, %v628
  %v642 = vadd.f32 %v622, %v628
  %v643 = vmax.f32 %v630, 0.0
  %v644 = vmax.f32 %v631, 0.0
  %v645 = vmax.f32 %v632, 0.0
  %v646 = vmax.f32 %v633, 0.0
  %v647 = vmax.f32 %v634, 0.0
  %v648 = vmax.f32 %v635, 0.0
  %v649 = vmax.f32 %v636, 0.0
  %v650 = vmax.f32 %v637, 0.0
  %v651 = vmax.f32 %v638, 0.0
  %v652 = vmax.f32 %v639, 0.0
  %v653 = vmax.f32 %v640, 0.0
  %v654 = vmax.f32 %v641, 0.0
  %v655 = vmax.f32 %v642, 0.0
  %656 = vst.msk [vmem:[%s5] sm:$0xff] %vm496, %v643
  %657 = vst.msk [vmem:[%s5 + $0x8] sm:$0xff] %vm496, %v644
  %658 = vst.msk [vmem:[%s5 + $0x10] sm:$0xff] %vm496, %v645
  %659 = vst.msk [vmem:[%s5 + $0x18] sm:$0xff] %vm496, %v646
  %660 = vst.msk [vmem:[%s5 + $0x20] sm:$0xff] %vm496, %v647
  %661 = vst.msk [vmem:[%s5 + $0x28] sm:$0xff] %vm496, %v648
  %662 = vst.msk [vmem:[%s5 + $0x30] sm:$0xff] %vm496, %v649
  %663 = vst.msk [vmem:[%s5 + $0x38] sm:$0xff] %vm496, %v650
  %664 = vst.msk [vmem:[%s5 + $0x40] sm:$0xff] %vm496, %v651
  %665 = vst.msk [vmem:[%s5 + $0x48] sm:$0xff] %vm496, %v652
  %666 = vst.msk [vmem:[%s5 + $0x50] sm:$0xff] %vm496, %v653
  %667 = vst.msk [vmem:[%s5 + $0x58] sm:$0xff] %vm496, %v654
  %668 = vst.msk [vmem:[%s5 + $0x60] sm:$0x3] %vm520, %v655
  // Predicated region
  $region22: #{vae_forward.9} parent=0 // pred_check
    _
  $region23: #{vae_forward.9} parent=0 // pred_check_branch
    %670 = sbr.rel (0) target = $region25
  $region24: #{vae_forward.9} parent=0 // pred_region
    _
  $region25: #{vae_forward.9} parent=0 // pred_fallthru
    _
  // Predicated region
  $region26: #{vae_forward.9} parent=0 // pred_check
    _
  $region27: #{vae_forward.9} parent=0 // pred_check_branch
    %672 = sbr.rel (0) target = $region29
  $region28: #{vae_forward.9} parent=0 // pred_region
    _
  $region29: #{vae_forward.9} parent=0 // pred_fallthru
    _

// kernel: vae_forward.10
$region0: #{vae_forward.10}
  #allocation0 [shape = 'u32[]', space=smem, size = 0x4, offset = 0x4, fixed_abs, tag = 'smem constant byte address 0x4 - core index']
  #allocation1 [shape = 'u32[144,128]{1,0:T(1,128)}', space=vmem, size = 0x12000, scoped, tag = 'internal scratch']
  %s0 = inlined_call_operand.vmem [shape: bf16[392,144], index: 0, kind: input, shape index: {}]
  %s1 = inlined_call_operand.vmem [shape: bf16[144,8], index: 1, kind: input, shape index: {}]
  %s2 = inlined_call_operand.vmem [shape: f32[1,8], index: 2, kind: input, shape index: {}]
  %s3 = inlined_call_operand.vmem [shape: f32[1,8], index: 3, kind: input, shape index: {}]
  %s4 = inlined_call_operand.vmem [shape: f32[1,8], index: 4, kind: input, shape index: {}]
  %s5 = inlined_call_operand.vmem [shape: f32[392,8], index: 5, kind: output, shape index: {}]
  %s6 = sld [smem:[#allocation0]]
  $region30: #{vae_forward.10} parent=0
    _
  %s8 = ssub.s32 1, %s6
  %s9 = scalar_select 0, %s8, %s6
  // Predicated region
  $region2: #{vae_forward.10} parent=0 // pred_check
    _
  $region3: #{vae_forward.10} parent=0 // pred_check_branch
    %11 = sbr.rel (0) target = $region5
  $region4: #{vae_forward.10} parent=0 // pred_region
    _
  $region5: #{vae_forward.10} parent=0 // pred_fallthru
    _
  // Predicated region
  $region6: #{vae_forward.10} parent=0 // pred_check
    _
  $region7: #{vae_forward.10} parent=0 // pred_check_branch
    %13 = sbr.rel (0) target = $region9
  $region8: #{vae_forward.10} parent=0 // pred_region
    _
  $region9: #{vae_forward.10} parent=0 // pred_fallthru
    _
  // Predicated region
  $region10: #{vae_forward.10} parent=0 // pred_check
    _
  $region11: #{vae_forward.10} parent=0 // pred_check_branch
    %15 = sbr.rel (0) target = $region13
  $region12: #{vae_forward.10} parent=0 // pred_region
    _
  $region13: #{vae_forward.10} parent=0 // pred_fallthru
    _
  // Predicated region
  $region14: #{vae_forward.10} parent=0 // pred_check
    _
  $region15: #{vae_forward.10} parent=0 // pred_check_branch
    %17 = sbr.rel (0) target = $region17
  $region16: #{vae_forward.10} parent=0 // pred_region
    _
  $region17: #{vae_forward.10} parent=0 // pred_fallthru
    _
  // Predicated region
  $region18: #{vae_forward.10} parent=0 // pred_check
    _
  $region19: #{vae_forward.10} parent=0 // pred_check_branch
    %19 = sbr.rel (0) target = $region21
  $region20: #{vae_forward.10} parent=0 // pred_region
    _
  $region21: #{vae_forward.10} parent=0 // pred_fallthru
    _
  %v21 = vld [vmem:[%s0] sm:$0xff]
  %v22 = vld [vmem:[%s0 + $0x8] sm:$0xff]
  %v23 = vld [vmem:[%s0 + $0x10] sm:$0xff]
  %v24 = vld [vmem:[%s0 + $0x18] sm:$0xff]
  %v25 = vld [vmem:[%s0 + $0x20] sm:$0xff]
  %v26 = vld [vmem:[%s0 + $0x28] sm:$0xff]
  %v27 = vld [vmem:[%s0 + $0x30] sm:$0xff]
  %v28 = vld [vmem:[%s0 + $0x38] sm:$0xff]
  %v29 = vld [vmem:[%s0 + $0x40] sm:$0xff]
  %v30 = vld [vmem:[%s0 + $0x48] sm:$0xff]
  %v31 = vld [vmem:[%s0 + $0x50] sm:$0xff]
  %v32 = vld [vmem:[%s0 + $0x58] sm:$0xff]
  %v33 = vld [vmem:[%s0 + $0x60] sm:$0xff]
  %v34 = vld [vmem:[%s0 + $0x68] sm:$0xff]
  %v35 = vld [vmem:[%s0 + $0x70] sm:$0xff]
  %v36 = vld [vmem:[%s0 + $0x78] sm:$0xff]
  %v37 = vld [vmem:[%s0 + $0x80] sm:$0xff]
  %v38 = vld [vmem:[%s0 + $0x88] sm:$0xff]
  %v39 = vld [vmem:[%s0 + $0x90] sm:$0xff]
  %v40 = vld [vmem:[%s0 + $0x98] sm:$0xff]
  %v41 = vld [vmem:[%s0 + $0xa0] sm:$0xff]
  %v42 = vld [vmem:[%s0 + $0xa8] sm:$0xff]
  %v43 = vld [vmem:[%s0 + $0xb0] sm:$0xff]
  %v44 = vld [vmem:[%s0 + $0xb8] sm:$0xff]
  %v45 = vld [vmem:[%s0 + $0xc0] sm:$0xff]
  %v46 = vld [vmem:[%s0 + $0xc8] sm:$0xff]
  %v47 = vld [vmem:[%s0 + $0xd0] sm:$0xff]
  %v48 = vld [vmem:[%s0 + $0xd8] sm:$0xff]
  %v49 = vld [vmem:[%s0 + $0xe0] sm:$0xff]
  %v50 = vld [vmem:[%s0 + $0xe8] sm:$0xff]
  %v51 = vld [vmem:[%s0 + $0xf0] sm:$0xff]
  %v52 = vld [vmem:[%s0 + $0xf8] sm:$0xff]
  %v53 = vld [vmem:[%s0 + $0x100] sm:$0xff]
  %v54 = vld [vmem:[%s0 + $0x108] sm:$0xff]
  %v55 = vld [vmem:[%s0 + $0x110] sm:$0xff]
  %v56 = vld [vmem:[%s0 + $0x118] sm:$0xff]
  %v57 = vld [vmem:[%s0 + $0x120] sm:$0xff]
  %v58 = vld [vmem:[%s0 + $0x128] sm:$0xff]
  %v59 = vld [vmem:[%s0 + $0x130] sm:$0xff]
  %v60 = vld [vmem:[%s0 + $0x138] sm:$0xff]
  %v61 = vld [vmem:[%s0 + $0x140] sm:$0xff]
  %v62 = vld [vmem:[%s0 + $0x148] sm:$0xff]
  %v63 = vld [vmem:[%s0 + $0x150] sm:$0xff]
  %v64 = vld [vmem:[%s0 + $0x158] sm:$0xff]
  %v65 = vld [vmem:[%s0 + $0x160] sm:$0xff]
  %v66 = vld [vmem:[%s0 + $0x168] sm:$0xff]
  %v67 = vld [vmem:[%s0 + $0x170] sm:$0xff]
  %v68 = vld [vmem:[%s0 + $0x178] sm:$0xff]
  %v69 = vld [vmem:[%s0 + $0x180] sm:$0xff]
  %v70 = vld [vmem:[%s1] sm:$0xf]
  %v71 = vld [vmem:[%s1 + $0x4] sm:$0xf]
  %v72 = vld [vmem:[%s1 + $0x8] sm:$0xf]
  %v73 = vld [vmem:[%s1 + $0xc] sm:$0xf]
  %v74 = vld [vmem:[%s1 + $0x10] sm:$0xf]
  %v75 = vld [vmem:[%s1 + $0x14] sm:$0xf]
  %v76 = vld [vmem:[%s1 + $0x18] sm:$0xf]
  %v77 = vld [vmem:[%s1 + $0x1c] sm:$0xf]
  %v78 = vld [vmem:[%s1 + $0x20] sm:$0xf]
  %v79 = vld [vmem:[%s1 + $0x24] sm:$0xf]
  %v80 = vld [vmem:[%s1 + $0x28] sm:$0xf]
  %v81 = vld [vmem:[%s1 + $0x2c] sm:$0xf]
  %v82 = vld [vmem:[%s1 + $0x30] sm:$0xf]
  %v83 = vld [vmem:[%s1 + $0x34] sm:$0xf]
  %v84 = vld [vmem:[%s1 + $0x38] sm:$0xf]
  %v85 = vld [vmem:[%s1 + $0x3c] sm:$0xf]
  %v86 = vld [vmem:[%s1 + $0x40] sm:$0xf]
  %v87 = vld [vmem:[%s1 + $0x44] sm:$0xf]
  %v88 = vld [vmem:[%s2] sm:$0x1]
  %v90 = vlaneseq
  %v91 = vshrl.u32 %v90, 7
  %v92 = vsub.s32 0, %v91
  %v93 = vrot.slane %v88, %v92
  %v144 = vunpack.c.l.b16 %v21
  %v145 = vunpack.c.h.b16 %v21
  %v146 = vunpack.c.l.b16 %v22
  %v147 = vunpack.c.h.b16 %v22
  %v148 = vunpack.c.l.b16 %v23
  %v149 = vunpack.c.h.b16 %v23
  %v150 = vunpack.c.l.b16 %v24
  %v151 = vunpack.c.h.b16 %v24
  %v152 = vunpack.c.l.b16 %v25
  %v153 = vunpack.c.h.b16 %v25
  %v154 = vunpack.c.l.b16 %v26
  %v155 = vunpack.c.h.b16 %v26
  %v156 = vunpack.c.l.b16 %v27
  %v157 = vunpack.c.h.b16 %v27
  %v158 = vunpack.c.l.b16 %v28
  %v159 = vunpack.c.h.b16 %v28
  %v160 = vunpack.c.l.b16 %v29
  %v161 = vunpack.c.h.b16 %v29
  %v162 = vunpack.c.l.b16 %v30
  %v163 = vunpack.c.h.b16 %v30
  %v164 = vunpack.c.l.b16 %v31
  %v165 = vunpack.c.h.b16 %v31
  %v166 = vunpack.c.l.b16 %v32
  %v167 = vunpack.c.h.b16 %v32
  %v168 = vunpack.c.l.b16 %v33
  %v169 = vunpack.c.h.b16 %v33
  %v170 = vunpack.c.l.b16 %v34
  %v171 = vunpack.c.h.b16 %v34
  %v172 = vunpack.c.l.b16 %v35
  %v173 = vunpack.c.h.b16 %v35
  %v174 = vunpack.c.l.b16 %v36
  %v175 = vunpack.c.h.b16 %v36
  %v176 = vunpack.c.l.b16 %v37
  %v177 = vunpack.c.h.b16 %v37
  %v178 = vunpack.c.l.b16 %v38
  %v179 = vunpack.c.h.b16 %v38
  %v180 = vunpack.c.l.b16 %v39
  %v181 = vunpack.c.h.b16 %v39
  %v182 = vunpack.c.l.b16 %v40
  %v183 = vunpack.c.h.b16 %v40
  %v184 = vunpack.c.l.b16 %v41
  %v185 = vunpack.c.h.b16 %v41
  %v186 = vunpack.c.l.b16 %v42
  %v187 = vunpack.c.h.b16 %v42
  %v188 = vunpack.c.l.b16 %v43
  %v189 = vunpack.c.h.b16 %v43
  %v190 = vunpack.c.l.b16 %v44
  %v191 = vunpack.c.h.b16 %v44
  %v192 = vunpack.c.l.b16 %v45
  %v193 = vunpack.c.h.b16 %v45
  %v194 = vunpack.c.l.b16 %v46
  %v195 = vunpack.c.h.b16 %v46
  %v196 = vunpack.c.l.b16 %v47
  %v197 = vunpack.c.h.b16 %v47
  %v198 = vunpack.c.l.b16 %v48
  %v199 = vunpack.c.h.b16 %v48
  %v200 = vunpack.c.l.b16 %v49
  %v201 = vunpack.c.h.b16 %v49
  %v202 = vunpack.c.l.b16 %v50
  %v203 = vunpack.c.h.b16 %v50
  %v204 = vunpack.c.l.b16 %v51
  %v205 = vunpack.c.h.b16 %v51
  %v206 = vunpack.c.l.b16 %v52
  %v207 = vunpack.c.h.b16 %v52
  %v208 = vunpack.c.l.b16 %v53
  %v209 = vunpack.c.h.b16 %v53
  %v210 = vunpack.c.l.b16 %v54
  %v211 = vunpack.c.h.b16 %v54
  %v212 = vunpack.c.l.b16 %v55
  %v213 = vunpack.c.h.b16 %v55
  %v214 = vunpack.c.l.b16 %v56
  %v215 = vunpack.c.h.b16 %v56
  %v216 = vunpack.c.l.b16 %v57
  %v217 = vunpack.c.h.b16 %v57
  %v218 = vunpack.c.l.b16 %v58
  %v219 = vunpack.c.h.b16 %v58
  %v220 = vunpack.c.l.b16 %v59
  %v221 = vunpack.c.h.b16 %v59
  %v222 = vunpack.c.l.b16 %v60
  %v223 = vunpack.c.h.b16 %v60
  %v224 = vunpack.c.l.b16 %v61
  %v225 = vunpack.c.h.b16 %v61
  %v226 = vunpack.c.l.b16 %v62
  %v227 = vunpack.c.h.b16 %v62
  %v228 = vunpack.c.l.b16 %v63
  %v229 = vunpack.c.h.b16 %v63
  %v230 = vunpack.c.l.b16 %v64
  %v231 = vunpack.c.h.b16 %v64
  %v232 = vunpack.c.l.b16 %v65
  %v233 = vunpack.c.h.b16 %v65
  %v234 = vunpack.c.l.b16 %v66
  %v235 = vunpack.c.h.b16 %v66
  %v236 = vunpack.c.l.b16 %v67
  %v237 = vunpack.c.h.b16 %v67
  %v238 = vunpack.c.l.b16 %v68
  %v239 = vunpack.c.h.b16 %v68
  %v240 = vunpack.c.l.b16 %v69
  %v241 = vunpack.c.h.b16 %v69
  %v242 = vpack.c.b16 %v146, %v144
  %v243 = vpack.c.b16 %v147, %v145
  %v244 = vpack.c.b16 %v150, %v148
  %v245 = vpack.c.b16 %v151, %v149
  %v246 = vpack.c.b16 %v154, %v152
  %v247 = vpack.c.b16 %v155, %v153
  %v248 = vpack.c.b16 %v158, %v156
  %v249 = vpack.c.b16 %v159, %v157
  %v250 = vpack.c.b16 %v162, %v160
  %v251 = vpack.c.b16 %v163, %v161
  %v252 = vpack.c.b16 %v166, %v164
  %v253 = vpack.c.b16 %v167, %v165
  %v254 = vpack.c.b16 %v170, %v168
  %v255 = vpack.c.b16 %v171, %v169
  %v256 = vpack.c.b16 %v174, %v172
  %v257 = vpack.c.b16 %v175, %v173
  %v258 = vpack.c.b16 %v178, %v176
  %v259 = vpack.c.b16 %v179, %v177
  %v260 = vpack.c.b16 %v182, %v180
  %v261 = vpack.c.b16 %v183, %v181
  %v262 = vpack.c.b16 %v186, %v184
  %v263 = vpack.c.b16 %v187, %v185
  %v264 = vpack.c.b16 %v190, %v188
  %v265 = vpack.c.b16 %v191, %v189
  %v266 = vpack.c.b16 %v194, %v192
  %v267 = vpack.c.b16 %v195, %v193
  %v268 = vpack.c.b16 %v198, %v196
  %v269 = vpack.c.b16 %v199, %v197
  %v270 = vpack.c.b16 %v202, %v200
  %v271 = vpack.c.b16 %v203, %v201
  %v272 = vpack.c.b16 %v206, %v204
  %v273 = vpack.c.b16 %v207, %v205
  %v274 = vpack.c.b16 %v210, %v208
  %v275 = vpack.c.b16 %v211, %v209
  %v276 = vpack.c.b16 %v214, %v212
  %v277 = vpack.c.b16 %v215, %v213
  %v278 = vpack.c.b16 %v218, %v216
  %v279 = vpack.c.b16 %v219, %v217
  %v280 = vpack.c.b16 %v222, %v220
  %v281 = vpack.c.b16 %v223, %v221
  %v282 = vpack.c.b16 %v226, %v224
  %v283 = vpack.c.b16 %v227, %v225
  %v284 = vpack.c.b16 %v230, %v228
  %v285 = vpack.c.b16 %v231, %v229
  %v286 = vpack.c.b16 %v234, %v232
  %v287 = vpack.c.b16 %v235, %v233
  %v288 = vpack.c.b16 %v238, %v236
  %v289 = vpack.c.b16 %v239, %v237
  %v290 = vpack.c.b16 %v240, %v240
  %v291 = vpack.c.b16 %v241, %v241
  %v335 = vunpack.c.l.b16 %v70
  %v336 = vunpack.c.l.b16 %v71
  %v337 = vunpack.c.l.b16 %v72
  %v338 = vunpack.c.l.b16 %v73
  %v339 = vunpack.c.l.b16 %v74
  %v340 = vunpack.c.l.b16 %v75
  %v341 = vunpack.c.l.b16 %v76
  %v342 = vunpack.c.l.b16 %v77
  %v343 = vunpack.c.l.b16 %v78
  %v344 = vunpack.c.l.b16 %v79
  %v345 = vunpack.c.l.b16 %v80
  %v346 = vunpack.c.l.b16 %v81
  %v347 = vunpack.c.l.b16 %v82
  %v348 = vunpack.c.l.b16 %v83
  %v349 = vunpack.c.l.b16 %v84
  %v350 = vunpack.c.l.b16 %v85
  %v351 = vunpack.c.l.b16 %v86
  %v352 = vunpack.c.l.b16 %v87
  %v353 = vpack.c.b16 %v336, %v335
  %v354 = vpack.c.b16 %v338, %v337
  %v355 = vpack.c.b16 %v340, %v339
  %v356 = vpack.c.b16 %v342, %v341
  %v357 = vpack.c.b16 %v344, %v343
  %v358 = vpack.c.b16 %v346, %v345
  %v359 = vpack.c.b16 %v348, %v347
  %v360 = vpack.c.b16 %v350, %v349
  %v361 = vpack.c.b16 %v352, %v351
  %vm371 = vcmask 130048
  %v373 = vsel %vm371, %v243, 0
  %v376 = vsel %vm371, %v245, 0
  %v379 = vsel %vm371, %v247, 0
  %v382 = vsel %vm371, %v249, 0
  %v385 = vsel %vm371, %v251, 0
  %v388 = vsel %vm371, %v253, 0
  %v391 = vsel %vm371, %v255, 0
  %v394 = vsel %vm371, %v257, 0
  %v397 = vsel %vm371, %v259, 0
  %v400 = vsel %vm371, %v261, 0
  %v403 = vsel %vm371, %v263, 0
  %v406 = vsel %vm371, %v265, 0
  %v409 = vsel %vm371, %v267, 0
  %v412 = vsel %vm371, %v269, 0
  %v415 = vsel %vm371, %v271, 0
  %v418 = vsel %vm371, %v273, 0
  %v421 = vsel %vm371, %v275, 0
  %v424 = vsel %vm371, %v277, 0
  %v427 = vsel %vm371, %v279, 0
  %v430 = vsel %vm371, %v281, 0
  %v433 = vsel %vm371, %v283, 0
  %v436 = vsel %vm371, %v285, 0
  %v439 = vsel %vm371, %v287, 0
  %v442 = vsel %vm371, %v289, 0
  %v445 = vsel %vm371, %v291, 0
  %447 = vmatprep.subr.bf16.mxu0 0
  %448 = vmatpush1.bf16.msra.mxu0 %v353
  %449 = vmatprep.subr.bf16.mxu0 0
  %450 = vmatpush1.bf16.msra.mxu0 %v354
  %451 = vmatprep.subr.bf16.mxu0 0
  %452 = vmatpush1.bf16.msra.mxu0 %v355
  %453 = vmatprep.subr.bf16.mxu0 0
  %454 = vmatpush1.bf16.msra.mxu0 %v356
  %455 = vmatprep.subr.bf16.mxu0 0
  %456 = vmatpush1.bf16.msra.mxu0 %v357
  %457 = vmatprep.subr.bf16.mxu0 0
  %458 = vmatpush1.bf16.msra.mxu0 %v358
  %459 = vmatprep.subr.bf16.mxu0 0
  %460 = vmatpush1.bf16.msra.mxu0 %v359
  %461 = vmatprep.subr.bf16.mxu0 0
  %462 = vmatpush1.bf16.msra.mxu0 %v360
  %463 = vmatprep.subr.bf16.mxu0 0
  %464 = vmatpush1.bf16.msra.mxu0 %v361
  %465 = vmatprep.subr.bf16.mxu0 0
  %466 = vmatpush1.bf16.msra.mxu0 0
  %467 = vmatprep.subr.bf16.mxu0 0
  %468 = vmatpush1.bf16.msra.mxu0 0
  %469 = vmatprep.subr.bf16.mxu0 0
  %470 = vmatpush1.bf16.msra.mxu0 0
  %471 = vmatprep.subr.bf16.mxu0 0
  %472 = vmatpush1.bf16.msra.mxu0 0
  %473 = vmatprep.subr.bf16.mxu0 0
  %474 = vmatpush1.bf16.msra.mxu0 0
  %475 = vmatprep.subr.bf16.mxu0 0
  %476 = vmatpush1.bf16.msra.mxu0 0
  %477 = vmatprep.subr.bf16.mxu0 0
  %478 = vmatpush1.bf16.msra.mxu0 0
  %479 = vmatprep.mubr.bf16.mxu0 %v373
  %480 = vmatmul.mubr.bf16.gmra.mrb[0].mxu0 %v242
  %v481 = vpop.f32.mrb[0].mxu0
  %v482 = vadd.f32 %v93, %v481
  %v483 = vpop.f32.mrb[0].mxu0
  %v484 = vpop.f32.mrb[0].mxu0
  %v485 = vadd.f32 %v93, %v484
  %v486 = vpop.f32.mrb[0].mxu0
  %487 = vmatprep.mubr.bf16.mxu0 %v376
  %488 = vmatmul.mubr.bf16.gmra.mrb[0].mxu0 %v244
  %v489 = vpop.f32.mrb[0].mxu0
  %v490 = vadd.f32 %v93, %v489
  %v491 = vpop.f32.mrb[0].mxu0
  %v492 = vpop.f32.mrb[0].mxu0
  %v493 = vadd.f32 %v93, %v492
  %v494 = vpop.f32.mrb[0].mxu0
  %495 = vmatprep.mubr.bf16.mxu0 %v379
  %496 = vmatmul.mubr.bf16.gmra.mrb[0].mxu0 %v246
  %v497 = vpop.f32.mrb[0].mxu0
  %v498 = vadd.f32 %v93, %v497
  %v499 = vpop.f32.mrb[0].mxu0
  %v500 = vpop.f32.mrb[0].mxu0
  %v501 = vadd.f32 %v93, %v500
  %v502 = vpop.f32.mrb[0].mxu0
  %503 = vmatprep.mubr.bf16.mxu0 %v382
  %504 = vmatmul.mubr.bf16.gmra.mrb[0].mxu0 %v248
  %v505 = vpop.f32.mrb[0].mxu0
  %v506 = vadd.f32 %v93, %v505
  %v507 = vpop.f32.mrb[0].mxu0
  %v508 = vpop.f32.mrb[0].mxu0
  %v509 = vadd.f32 %v93, %v508
  %v510 = vpop.f32.mrb[0].mxu0
  %511 = vmatprep.mubr.bf16.mxu0 %v385
  %512 = vmatmul.mubr.bf16.gmra.mrb[0].mxu0 %v250
  %v513 = vpop.f32.mrb[0].mxu0
  %v514 = vadd.f32 %v93, %v513
  %v515 = vpop.f32.mrb[0].mxu0
  %v516 = vpop.f32.mrb[0].mxu0
  %v517 = vadd.f32 %v93, %v516
  %v518 = vpop.f32.mrb[0].mxu0
  %519 = vmatprep.mubr.bf16.mxu0 %v388
  %520 = vmatmul.mubr.bf16.gmra.mrb[0].mxu0 %v252
  %v521 = vpop.f32.mrb[0].mxu0
  %v522 = vadd.f32 %v93, %v521
  %v523 = vpop.f32.mrb[0].mxu0
  %v524 = vpop.f32.mrb[0].mxu0
  %v525 = vadd.f32 %v93, %v524
  %v526 = vpop.f32.mrb[0].mxu0
  %527 = vmatprep.mubr.bf16.mxu0 %v391
  %528 = vmatmul.mubr.bf16.gmra.mrb[0].mxu0 %v254
  %v529 = vpop.f32.mrb[0].mxu0
  %v530 = vadd.f32 %v93, %v529
  %v531 = vpop.f32.mrb[0].mxu0
  %v532 = vpop.f32.mrb[0].mxu0
  %v533 = vadd.f32 %v93, %v532
  %v534 = vpop.f32.mrb[0].mxu0
  %535 = vmatprep.mubr.bf16.mxu0 %v394
  %536 = vmatmul.mubr.bf16.gmra.mrb[0].mxu0 %v256
  %v537 = vpop.f32.mrb[0].mxu0
  %v538 = vadd.f32 %v93, %v537
  %v539 = vpop.f32.mrb[0].mxu0
  %v540 = vpop.f32.mrb[0].mxu0
  %v541 = vadd.f32 %v93, %v540
  %v542 = vpop.f32.mrb[0].mxu0
  %543 = vmatprep.mubr.bf16.mxu0 %v397
  %544 = vmatmul.mubr.bf16.gmra.mrb[0].mxu0 %v258
  %v545 = vpop.f32.mrb[0].mxu0
  %v546 = vadd.f32 %v93, %v545
  %v547 = vpop.f32.mrb[0].mxu0
  %v548 = vpop.f32.mrb[0].mxu0
  %v549 = vadd.f32 %v93, %v548
  %v550 = vpop.f32.mrb[0].mxu0
  %551 = vmatprep.mubr.bf16.mxu0 %v400
  %552 = vmatmul.mubr.bf16.gmra.mrb[0].mxu0 %v260
  %v553 = vpop.f32.mrb[0].mxu0
  %v554 = vadd.f32 %v93, %v553
  %v555 = vpop.f32.mrb[0].mxu0
  %v556 = vpop.f32.mrb[0].mxu0
  %v557 = vadd.f32 %v93, %v556
  %v558 = vpop.f32.mrb[0].mxu0
  %559 = vmatprep.mubr.bf16.mxu0 %v403
  %560 = vmatmul.mubr.bf16.gmra.mrb[0].mxu0 %v262
  %v561 = vpop.f32.mrb[0].mxu0
  %v562 = vadd.f32 %v93, %v561
  %v563 = vpop.f32.mrb[0].mxu0
  %v564 = vpop.f32.mrb[0].mxu0
  %v565 = vadd.f32 %v93, %v564
  %v566 = vpop.f32.mrb[0].mxu0
  %567 = vmatprep.mubr.bf16.mxu0 %v406
  %568 = vmatmul.mubr.bf16.gmra.mrb[0].mxu0 %v264
  %v569 = vpop.f32.mrb[0].mxu0
  %v570 = vadd.f32 %v93, %v569
  %v571 = vpop.f32.mrb[0].mxu0
  %v572 = vpop.f32.mrb[0].mxu0
  %v573 = vadd.f32 %v93, %v572
  %v574 = vpop.f32.mrb[0].mxu0
  %575 = vmatprep.mubr.bf16.mxu0 %v409
  %576 = vmatmul.mubr.bf16.gmra.mrb[0].mxu0 %v266
  %v577 = vpop.f32.mrb[0].mxu0
  %v578 = vadd.f32 %v93, %v577
  %v579 = vpop.f32.mrb[0].mxu0
  %v580 = vpop.f32.mrb[0].mxu0
  %v581 = vadd.f32 %v93, %v580
  %v582 = vpop.f32.mrb[0].mxu0
  %583 = vmatprep.mubr.bf16.mxu0 %v412
  %584 = vmatmul.mubr.bf16.gmra.mrb[0].mxu0 %v268
  %v585 = vpop.f32.mrb[0].mxu0
  %v586 = vadd.f32 %v93, %v585
  %v587 = vpop.f32.mrb[0].mxu0
  %v588 = vpop.f32.mrb[0].mxu0
  %v589 = vadd.f32 %v93, %v588
  %v590 = vpop.f32.mrb[0].mxu0
  %591 = vmatprep.mubr.bf16.mxu0 %v415
  %592 = vmatmul.mubr.bf16.gmra.mrb[0].mxu0 %v270
  %v593 = vpop.f32.mrb[0].mxu0
  %v594 = vadd.f32 %v93, %v593
  %v595 = vpop.f32.mrb[0].mxu0
  %v596 = vpop.f32.mrb[0].mxu0
  %v597 = vadd.f32 %v93, %v596
  %v598 = vpop.f32.mrb[0].mxu0
  %599 = vmatprep.mubr.bf16.mxu0 %v418
  %600 = vmatmul.mubr.bf16.gmra.mrb[0].mxu0 %v272
  %v601 = vpop.f32.mrb[0].mxu0
  %v602 = vadd.f32 %v93, %v601
  %v603 = vpop.f32.mrb[0].mxu0
  %v604 = vpop.f32.mrb[0].mxu0
  %v605 = vadd.f32 %v93, %v604
  %v606 = vpop.f32.mrb[0].mxu0
  %607 = vmatprep.mubr.bf16.mxu0 %v421
  %608 = vmatmul.mubr.bf16.gmra.mrb[0].mxu0 %v274
  %v609 = vpop.f32.mrb[0].mxu0
  %v610 = vadd.f32 %v93, %v609
  %v611 = vpop.f32.mrb[0].mxu0
  %v612 = vpop.f32.mrb[0].mxu0
  %v613 = vadd.f32 %v93, %v612
  %v614 = vpop.f32.mrb[0].mxu0
  %615 = vmatprep.mubr.bf16.mxu0 %v424
  %616 = vmatmul.mubr.bf16.gmra.mrb[0].mxu0 %v276
  %v617 = vpop.f32.mrb[0].mxu0
  %v618 = vadd.f32 %v93, %v617
  %v619 = vpop.f32.mrb[0].mxu0
  %v620 = vpop.f32.mrb[0].mxu0
  %v621 = vadd.f32 %v93, %v620
  %v622 = vpop.f32.mrb[0].mxu0
  %623 = vmatprep.mubr.bf16.mxu0 %v427
  %624 = vmatmul.mubr.bf16.gmra.mrb[0].mxu0 %v278
  %v625 = vpop.f32.mrb[0].mxu0
  %v626 = vadd.f32 %v93, %v625
  %v627 = vpop.f32.mrb[0].mxu0
  %v628 = vpop.f32.mrb[0].mxu0
  %v629 = vadd.f32 %v93, %v628
  %v630 = vpop.f32.mrb[0].mxu0
  %631 = vmatprep.mubr.bf16.mxu0 %v430
  %632 = vmatmul.mubr.bf16.gmra.mrb[0].mxu0 %v280
  %v633 = vpop.f32.mrb[0].mxu0
  %v634 = vadd.f32 %v93, %v633
  %v635 = vpop.f32.mrb[0].mxu0
  %v636 = vpop.f32.mrb[0].mxu0
  %v637 = vadd.f32 %v93, %v636
  %v638 = vpop.f32.mrb[0].mxu0
  %639 = vmatprep.mubr.bf16.mxu0 %v433
  %640 = vmatmul.mubr.bf16.gmra.mrb[0].mxu0 %v282
  %v641 = vpop.f32.mrb[0].mxu0
  %v642 = vadd.f32 %v93, %v641
  %v643 = vpop.f32.mrb[0].mxu0
  %v644 = vpop.f32.mrb[0].mxu0
  %v645 = vadd.f32 %v93, %v644
  %v646 = vpop.f32.mrb[0].mxu0
  %647 = vmatprep.mubr.bf16.mxu0 %v436
  %648 = vmatmul.mubr.bf16.gmra.mrb[0].mxu0 %v284
  %v649 = vpop.f32.mrb[0].mxu0
  %v650 = vadd.f32 %v93, %v649
  %v651 = vpop.f32.mrb[0].mxu0
  %v652 = vpop.f32.mrb[0].mxu0
  %v653 = vadd.f32 %v93, %v652
  %v654 = vpop.f32.mrb[0].mxu0
  %655 = vmatprep.mubr.bf16.mxu0 %v439
  %656 = vmatmul.mubr.bf16.gmra.mrb[0].mxu0 %v286
  %v657 = vpop.f32.mrb[0].mxu0
  %v658 = vadd.f32 %v93, %v657
  %v659 = vpop.f32.mrb[0].mxu0
  %v660 = vpop.f32.mrb[0].mxu0
  %v661 = vadd.f32 %v93, %v660
  %v662 = vpop.f32.mrb[0].mxu0
  %663 = vmatprep.mubr.bf16.mxu0 %v442
  %664 = vmatmul.mubr.bf16.gmra.mrb[0].mxu0 %v288
  %v665 = vpop.f32.mrb[0].mxu0
  %v666 = vadd.f32 %v93, %v665
  %v667 = vpop.f32.mrb[0].mxu0
  %v668 = vpop.f32.mrb[0].mxu0
  %v669 = vadd.f32 %v93, %v668
  %v670 = vpop.f32.mrb[0].mxu0
  %671 = vmatprep.mubr.bf16.mxu0 %v445
  %672 = vmatmul.mubr.bf16.gmra.mrb[0].mxu0 %v290
  %v673 = vpop.f32.mrb[0].mxu0
  %v674 = vadd.f32 %v93, %v673
  %v675 = vpop.f32.mrb[0].mxu0
  %v676 = vpop.f32.mrb[0].mxu0
  %v677 = vpop.f32.mrb[0].mxu0
  %678 = vdwg.mxu0
  %vm679 = vcmask 64512
  %v680 = vsel %vm679, %v482, 0.0
  %v681 = vsel %vm679, %v485, 0.0
  %v682 = vadd.f32 %v680, %v681
  %v683 = vsel %vm679, %v490, 0.0
  %v684 = vadd.f32 %v682, %v683
  %v685 = vsel %vm679, %v493, 0.0
  %v686 = vadd.f32 %v684, %v685
  %v687 = vsel %vm679, %v498, 0.0
  %v688 = vadd.f32 %v686, %v687
  %v689 = vsel %vm679, %v501, 0.0
  %v690 = vadd.f32 %v688, %v689
  %v691 = vsel %vm679, %v506, 0.0
  %v692 = vadd.f32 %v690, %v691
  %v693 = vsel %vm679, %v509, 0.0
  %v694 = vadd.f32 %v692, %v693
  %v695 = vsel %vm679, %v514, 0.0
  %v696 = vadd.f32 %v694, %v695
  %v697 = vsel %vm679, %v517, 0.0
  %v698 = vadd.f32 %v696, %v697
  %v699 = vsel %vm679, %v522, 0.0
  %v700 = vadd.f32 %v698, %v699
  %v701 = vsel %vm679, %v525, 0.0
  %v702 = vadd.f32 %v700, %v701
  %v703 = vsel %vm679, %v530, 0.0
  %v704 = vadd.f32 %v702, %v703
  %v705 = vsel %vm679, %v533, 0.0
  %v706 = vadd.f32 %v704, %v705
  %v707 = vsel %vm679, %v538, 0.0
  %v708 = vadd.f32 %v706, %v707
  %v709 = vsel %vm679, %v541, 0.0
  %v710 = vadd.f32 %v708, %v709
  %v711 = vsel %vm679, %v546, 0.0
  %v712 = vadd.f32 %v710, %v711
  %v713 = vsel %vm679, %v549, 0.0
  %v714 = vadd.f32 %v712, %v713
  %v715 = vsel %vm679, %v554, 0.0
  %v716 = vadd.f32 %v714, %v715
  %v717 = vsel %vm679, %v557, 0.0
  %v718 = vadd.f32 %v716, %v717
  %v719 = vsel %vm679, %v562, 0.0
  %v720 = vadd.f32 %v718, %v719
  %v721 = vsel %vm679, %v565, 0.0
  %v722 = vadd.f32 %v720, %v721
  %v723 = vsel %vm679, %v570, 0.0
  %v724 = vadd.f32 %v722, %v723
  %v725 = vsel %vm679, %v573, 0.0
  %v726 = vadd.f32 %v724, %v725
  %v727 = vsel %vm679, %v578, 0.0
  %v728 = vadd.f32 %v726, %v727
  %v729 = vsel %vm679, %v581, 0.0
  %v730 = vadd.f32 %v728, %v729
  %v731 = vsel %vm679, %v586, 0.0
  %v732 = vadd.f32 %v730, %v731
  %v733 = vsel %vm679, %v589, 0.0
  %v734 = vadd.f32 %v732, %v733
  %v735 = vsel %vm679, %v594, 0.0
  %v736 = vadd.f32 %v734, %v735
  %v737 = vsel %vm679, %v597, 0.0
  %v738 = vadd.f32 %v736, %v737
  %v739 = vsel %vm679, %v602, 0.0
  %v740 = vadd.f32 %v738, %v739
  %v741 = vsel %vm679, %v605, 0.0
  %v742 = vadd.f32 %v740, %v741
  %v743 = vsel %vm679, %v610, 0.0
  %v744 = vadd.f32 %v742, %v743
  %v745 = vsel %vm679, %v613, 0.0
  %v746 = vadd.f32 %v744, %v745
  %v747 = vsel %vm679, %v618, 0.0
  %v748 = vadd.f32 %v746, %v747
  %v749 = vsel %vm679, %v621, 0.0
  %v750 = vadd.f32 %v748, %v749
  %v751 = vsel %vm679, %v626, 0.0
  %v752 = vadd.f32 %v750, %v751
  %v753 = vsel %vm679, %v629, 0.0
  %v754 = vadd.f32 %v752, %v753
  %v755 = vsel %vm679, %v634, 0.0
  %v756 = vadd.f32 %v754, %v755
  %v757 = vsel %vm679, %v637, 0.0
  %v758 = vadd.f32 %v756, %v757
  %v759 = vsel %vm679, %v642, 0.0
  %v760 = vadd.f32 %v758, %v759
  %v761 = vsel %vm679, %v645, 0.0
  %v762 = vadd.f32 %v760, %v761
  %v763 = vsel %vm679, %v650, 0.0
  %v764 = vadd.f32 %v762, %v763
  %v765 = vsel %vm679, %v653, 0.0
  %v766 = vadd.f32 %v764, %v765
  %v767 = vsel %vm679, %v658, 0.0
  %v768 = vadd.f32 %v766, %v767
  %v769 = vsel %vm679, %v661, 0.0
  %v770 = vadd.f32 %v768, %v769
  %v771 = vsel %vm679, %v666, 0.0
  %v772 = vadd.f32 %v770, %v771
  %v773 = vsel %vm679, %v669, 0.0
  %v774 = vadd.f32 %v772, %v773
  %v775 = vsel %vm679, %v674, 0.0
  %v776 = vadd.f32 %v774, %v775
  %v777 = vrot.slane %v776, 4
  %v778 = vadd.f32 %v776, %v777
  %v779 = vrot.slane %v778, 2
  %v780 = vadd.f32 %v778, %v779
  %v781 = vrot.slane %v780, 1
  %v782 = vadd.f32 %v780, %v781
  %v783 = vmul.f32 %v782, 0.0025510204
  %v784 = vsub.f32 %v482, %v783
  %v785 = vsub.f32 %v485, %v783
  %v786 = vsub.f32 %v490, %v783
  %v787 = vsub.f32 %v493, %v783
  %v788 = vsub.f32 %v498, %v783
  %v789 = vsub.f32 %v501, %v783
  %v790 = vsub.f32 %v506, %v783
  %v791 = vsub.f32 %v509, %v783
  %v792 = vsub.f32 %v514, %v783
  %v793 = vsub.f32 %v517, %v783
  %v794 = vsub.f32 %v522, %v783
  %v795 = vsub.f32 %v525, %v783
  %v796 = vsub.f32 %v530, %v783
  %v797 = vsub.f32 %v533, %v783
  %v798 = vsub.f32 %v538, %v783
  %v799 = vsub.f32 %v541, %v783
  %v800 = vsub.f32 %v546, %v783
  %v801 = vsub.f32 %v549, %v783
  %v802 = vsub.f32 %v554, %v783
  %v803 = vsub.f32 %v557, %v783
  %v804 = vsub.f32 %v562, %v783
  %v805 = vsub.f32 %v565, %v783
  %v806 = vsub.f32 %v570, %v783
  %v807 = vsub.f32 %v573, %v783
  %v808 = vsub.f32 %v578, %v783
  %v809 = vsub.f32 %v581, %v783
  %v810 = vsub.f32 %v586, %v783
  %v811 = vsub.f32 %v589, %v783
  %v812 = vsub.f32 %v594, %v783
  %v813 = vsub.f32 %v597, %v783
  %v814 = vsub.f32 %v602, %v783
  %v815 = vsub.f32 %v605, %v783
  %v816 = vsub.f32 %v610, %v783
  %v817 = vsub.f32 %v613, %v783
  %v818 = vsub.f32 %v618, %v783
  %v819 = vsub.f32 %v621, %v783
  %v820 = vsub.f32 %v626, %v783
  %v821 = vsub.f32 %v629, %v783
  %v822 = vsub.f32 %v634, %v783
  %v823 = vsub.f32 %v637, %v783
  %v824 = vsub.f32 %v642, %v783
  %v825 = vsub.f32 %v645, %v783
  %v826 = vsub.f32 %v650, %v783
  %v827 = vsub.f32 %v653, %v783
  %v828 = vsub.f32 %v658, %v783
  %v829 = vsub.f32 %v661, %v783
  %v830 = vsub.f32 %v666, %v783
  %v831 = vsub.f32 %v669, %v783
  %v832 = vsub.f32 %v674, %v783
  %v833 = vmul.f32 %v784, %v784
  %v834 = vmul.f32 %v785, %v785
  %v835 = vmul.f32 %v786, %v786
  %v836 = vmul.f32 %v787, %v787
  %v837 = vmul.f32 %v788, %v788
  %v838 = vmul.f32 %v789, %v789
  %v839 = vmul.f32 %v790, %v790
  %v840 = vmul.f32 %v791, %v791
  %v841 = vmul.f32 %v792, %v792
  %v842 = vmul.f32 %v793, %v793
  %v843 = vmul.f32 %v794, %v794
  %v844 = vmul.f32 %v795, %v795
  %v845 = vmul.f32 %v796, %v796
  %v846 = vmul.f32 %v797, %v797
  %v847 = vmul.f32 %v798, %v798
  %v848 = vmul.f32 %v799, %v799
  %v849 = vmul.f32 %v800, %v800
  %v850 = vmul.f32 %v801, %v801
  %v851 = vmul.f32 %v802, %v802
  %v852 = vmul.f32 %v803, %v803
  %v853 = vmul.f32 %v804, %v804
  %v854 = vmul.f32 %v805, %v805
  %v855 = vmul.f32 %v806, %v806
  %v856 = vmul.f32 %v807, %v807
  %v857 = vmul.f32 %v808, %v808
  %v858 = vmul.f32 %v809, %v809
  %v859 = vmul.f32 %v810, %v810
  %v860 = vmul.f32 %v811, %v811
  %v861 = vmul.f32 %v812, %v812
  %v862 = vmul.f32 %v813, %v813
  %v863 = vmul.f32 %v814, %v814
  %v864 = vmul.f32 %v815, %v815
  %v865 = vmul.f32 %v816, %v816
  %v866 = vmul.f32 %v817, %v817
  %v867 = vmul.f32 %v818, %v818
  %v868 = vmul.f32 %v819, %v819
  %v869 = vmul.f32 %v820, %v820
  %v870 = vmul.f32 %v821, %v821
  %v871 = vmul.f32 %v822, %v822
  %v872 = vmul.f32 %v823, %v823
  %v873 = vmul.f32 %v824, %v824
  %v874 = vmul.f32 %v825, %v825
  %v875 = vmul.f32 %v826, %v826
  %v876 = vmul.f32 %v827, %v827
  %v877 = vmul.f32 %v828, %v828
  %v878 = vmul.f32 %v829, %v829
  %v879 = vmul.f32 %v830, %v830
  %v880 = vmul.f32 %v831, %v831
  %v881 = vmul.f32 %v832, %v832
  %v882 = vsel %vm679, %v833, 0.0
  %v883 = vsel %vm679, %v834, 0.0
  %v884 = vadd.f32 %v882, %v883
  %v885 = vsel %vm679, %v835, 0.0
  %v886 = vadd.f32 %v884, %v885
  %v887 = vsel %vm679, %v836, 0.0
  %v888 = vadd.f32 %v886, %v887
  %v889 = vsel %vm679, %v837, 0.0
  %v890 = vadd.f32 %v888, %v889
  %v891 = vsel %vm679, %v838, 0.0
  %v892 = vadd.f32 %v890, %v891
  %v893 = vsel %vm679, %v839, 0.0
  %v894 = vadd.f32 %v892, %v893
  %v895 = vsel %vm679, %v840, 0.0
  %v896 = vadd.f32 %v894, %v895
  %v897 = vsel %vm679, %v841, 0.0
  %v898 = vadd.f32 %v896, %v897
  %v899 = vsel %vm679, %v842, 0.0
  %v900 = vadd.f32 %v898, %v899
  %v901 = vsel %vm679, %v843, 0.0
  %v902 = vadd.f32 %v900, %v901
  %v903 = vsel %vm679, %v844, 0.0
  %v904 = vadd.f32 %v902, %v903
  %v905 = vsel %vm679, %v845, 0.0
  %v906 = vadd.f32 %v904, %v905
  %v907 = vsel %vm679, %v846, 0.0
  %v908 = vadd.f32 %v906, %v907
  %v909 = vsel %vm679, %v847, 0.0
  %v910 = vadd.f32 %v908, %v909
  %v911 = vsel %vm679, %v848, 0.0
  %v912 = vadd.f32 %v910, %v911
  %v913 = vsel %vm679, %v849, 0.0
  %v914 = vadd.f32 %v912, %v913
  %v915 = vsel %vm679, %v850, 0.0
  %v916 = vadd.f32 %v914, %v915
  %v917 = vsel %vm679, %v851, 0.0
  %v918 = vadd.f32 %v916, %v917
  %v919 = vsel %vm679, %v852, 0.0
  %v920 = vadd.f32 %v918, %v919
  %v921 = vsel %vm679, %v853, 0.0
  %v922 = vadd.f32 %v920, %v921
  %v923 = vsel %vm679, %v854, 0.0
  %v924 = vadd.f32 %v922, %v923
  %v925 = vsel %vm679, %v855, 0.0
  %v926 = vadd.f32 %v924, %v925
  %v927 = vsel %vm679, %v856, 0.0
  %v928 = vadd.f32 %v926, %v927
  %v929 = vsel %vm679, %v857, 0.0
  %v930 = vadd.f32 %v928, %v929
  %v931 = vsel %vm679, %v858, 0.0
  %v932 = vadd.f32 %v930, %v931
  %v933 = vsel %vm679, %v859, 0.0
  %v934 = vadd.f32 %v932, %v933
  %v935 = vsel %vm679, %v860, 0.0
  %v936 = vadd.f32 %v934, %v935
  %v937 = vsel %vm679, %v861, 0.0
  %v938 = vadd.f32 %v936, %v937
  %v939 = vsel %vm679, %v862, 0.0
  %v940 = vadd.f32 %v938, %v939
  %v941 = vsel %vm679, %v863, 0.0
  %v942 = vadd.f32 %v940, %v941
  %v943 = vsel %vm679, %v864, 0.0
  %v944 = vadd.f32 %v942, %v943
  %v945 = vsel %vm679, %v865, 0.0
  %v946 = vadd.f32 %v944, %v945
  %v947 = vsel %vm679, %v866, 0.0
  %v948 = vadd.f32 %v946, %v947
  %v949 = vsel %vm679, %v867, 0.0
  %v950 = vadd.f32 %v948, %v949
  %v951 = vsel %vm679, %v868, 0.0
  %v952 = vadd.f32 %v950, %v951
  %v953 = vsel %vm679, %v869, 0.0
  %v954 = vadd.f32 %v952, %v953
  %v955 = vsel %vm679, %v870, 0.0
  %v956 = vadd.f32 %v954, %v955
  %v957 = vsel %vm679, %v871, 0.0
  %v958 = vadd.f32 %v956, %v957
  %v959 = vsel %vm679, %v872, 0.0
  %v960 = vadd.f32 %v958, %v959
  %v961 = vsel %vm679, %v873, 0.0
  %v962 = vadd.f32 %v960, %v961
  %v963 = vsel %vm679, %v874, 0.0
  %v964 = vadd.f32 %v962, %v963
  %v965 = vsel %vm679, %v875, 0.0
  %v966 = vadd.f32 %v964, %v965
  %v967 = vsel %vm679, %v876, 0.0
  %v968 = vadd.f32 %v966, %v967
  %v969 = vsel %vm679, %v877, 0.0
  %v970 = vadd.f32 %v968, %v969
  %v971 = vsel %vm679, %v878, 0.0
  %v972 = vadd.f32 %v970, %v971
  %v973 = vsel %vm679, %v879, 0.0
  %v974 = vadd.f32 %v972, %v973
  %v975 = vsel %vm679, %v880, 0.0
  %v976 = vadd.f32 %v974, %v975
  %v977 = vsel %vm679, %v881, 0.0
  %v978 = vadd.f32 %v976, %v977
  %v979 = vrot.slane %v978, 4
  %v980 = vadd.f32 %v978, %v979
  %v981 = vrot.slane %v980, 2
  %v982 = vadd.f32 %v980, %v981
  %v983 = vrot.slane %v982, 1
  %v984 = vadd.f32 %v982, %v983
  %v985 = vmul.f32 %v984, 0.0025510204
  %v986 = vld [vmem:[%s3] sm:$0x1]
  %v987 = vadd.f32 %v985, 1e-05
  %v988 = vrsqrt.pop %v987
  %v989 = vmul.f32 %v784, %v988
  %v990 = vmul.f32 %v785, %v988
  %v991 = vmul.f32 %v786, %v988
  %v992 = vmul.f32 %v787, %v988
  %v993 = vmul.f32 %v788, %v988
  %v994 = vmul.f32 %v789, %v988
  %v995 = vmul.f32 %v790, %v988
  %v996 = vmul.f32 %v791, %v988
  %v997 = vmul.f32 %v792, %v988
  %v998 = vmul.f32 %v793, %v988
  %v999 = vmul.f32 %v794, %v988
  %v1000 = vmul.f32 %v795, %v988
  %v1001 = vmul.f32 %v796, %v988
  %v1002 = vmul.f32 %v797, %v988
  %v1003 = vmul.f32 %v798, %v988
  %v1004 = vmul.f32 %v799, %v988
  %v1005 = vmul.f32 %v800, %v988
  %v1006 = vmul.f32 %v801, %v988
  %v1007 = vmul.f32 %v802, %v988
  %v1008 = vmul.f32 %v803, %v988
  %v1009 = vmul.f32 %v804, %v988
  %v1010 = vmul.f32 %v805, %v988
  %v1011 = vmul.f32 %v806, %v988
  %v1012 = vmul.f32 %v807, %v988
  %v1013 = vmul.f32 %v808, %v988
  %v1014 = vmul.f32 %v809, %v988
  %v1015 = vmul.f32 %v810, %v988
  %v1016 = vmul.f32 %v811, %v988
  %v1017 = vmul.f32 %v812, %v988
  %v1018 = vmul.f32 %v813, %v988
  %v1019 = vmul.f32 %v814, %v988
  %v1020 = vmul.f32 %v815, %v988
  %v1021 = vmul.f32 %v816, %v988
  %v1022 = vmul.f32 %v817, %v988
  %v1023 = vmul.f32 %v818, %v988
  %v1024 = vmul.f32 %v819, %v988
  %v1025 = vmul.f32 %v820, %v988
  %v1026 = vmul.f32 %v821, %v988
  %v1027 = vmul.f32 %v822, %v988
  %v1028 = vmul.f32 %v823, %v988
  %v1029 = vmul.f32 %v824, %v988
  %v1030 = vmul.f32 %v825, %v988
  %v1031 = vmul.f32 %v826, %v988
  %v1032 = vmul.f32 %v827, %v988
  %v1033 = vmul.f32 %v828, %v988
  %v1034 = vmul.f32 %v829, %v988
  %v1035 = vmul.f32 %v830, %v988
  %v1036 = vmul.f32 %v831, %v988
  %v1037 = vmul.f32 %v832, %v988
  %v1039 = vlaneseq
  %v1040 = vshrl.u32 %v1039, 7
  %v1041 = vsub.s32 0, %v1040
  %v1042 = vrot.slane %v986, %v1041
  %v1044 = vmul.f32 %v1042, %v989
  %v1045 = vmul.f32 %v1042, %v990
  %v1046 = vmul.f32 %v1042, %v991
  %v1047 = vmul.f32 %v1042, %v992
  %v1048 = vmul.f32 %v1042, %v993
  %v1049 = vmul.f32 %v1042, %v994
  %v1050 = vmul.f32 %v1042, %v995
  %v1051 = vmul.f32 %v1042, %v996
  %v1052 = vmul.f32 %v1042, %v997
  %v1053 = vmul.f32 %v1042, %v998
  %v1054 = vmul.f32 %v1042, %v999
  %v1055 = vmul.f32 %v1042, %v1000
  %v1056 = vmul.f32 %v1042, %v1001
  %v1057 = vmul.f32 %v1042, %v1002
  %v1058 = vmul.f32 %v1042, %v1003
  %v1059 = vmul.f32 %v1042, %v1004
  %v1060 = vmul.f32 %v1042, %v1005
  %v1061 = vmul.f32 %v1042, %v1006
  %v1062 = vmul.f32 %v1042, %v1007
  %v1063 = vmul.f32 %v1042, %v1008
  %v1064 = vmul.f32 %v1042, %v1009
  %v1065 = vmul.f32 %v1042, %v1010
  %v1066 = vmul.f32 %v1042, %v1011
  %v1067 = vmul.f32 %v1042, %v1012
  %v1068 = vmul.f32 %v1042, %v1013
  %v1069 = vmul.f32 %v1042, %v1014
  %v1070 = vmul.f32 %v1042, %v1015
  %v1071 = vmul.f32 %v1042, %v1016
  %v1072 = vmul.f32 %v1042, %v1017
  %v1073 = vmul.f32 %v1042, %v1018
  %v1074 = vmul.f32 %v1042, %v1019
  %v1075 = vmul.f32 %v1042, %v1020
  %v1076 = vmul.f32 %v1042, %v1021
  %v1077 = vmul.f32 %v1042, %v1022
  %v1078 = vmul.f32 %v1042, %v1023
  %v1079 = vmul.f32 %v1042, %v1024
  %v1080 = vmul.f32 %v1042, %v1025
  %v1081 = vmul.f32 %v1042, %v1026
  %v1082 = vmul.f32 %v1042, %v1027
  %v1083 = vmul.f32 %v1042, %v1028
  %v1084 = vmul.f32 %v1042, %v1029
  %v1085 = vmul.f32 %v1042, %v1030
  %v1086 = vmul.f32 %v1042, %v1031
  %v1087 = vmul.f32 %v1042, %v1032
  %v1088 = vmul.f32 %v1042, %v1033
  %v1089 = vmul.f32 %v1042, %v1034
  %v1090 = vmul.f32 %v1042, %v1035
  %v1091 = vmul.f32 %v1042, %v1036
  %v1092 = vmul.f32 %v1042, %v1037
  %v1093 = vld [vmem:[%s4] sm:$0x1]
  %v1095 = vlaneseq
  %v1096 = vshrl.u32 %v1095, 7
  %v1097 = vsub.s32 0, %v1096
  %v1098 = vrot.slane %v1093, %v1097
  %v1100 = vadd.f32 %v1044, %v1098
  %v1101 = vadd.f32 %v1045, %v1098
  %v1102 = vadd.f32 %v1046, %v1098
  %v1103 = vadd.f32 %v1047, %v1098
  %v1104 = vadd.f32 %v1048, %v1098
  %v1105 = vadd.f32 %v1049, %v1098
  %v1106 = vadd.f32 %v1050, %v1098
  %v1107 = vadd.f32 %v1051, %v1098
  %v1108 = vadd.f32 %v1052, %v1098
  %v1109 = vadd.f32 %v1053, %v1098
  %v1110 = vadd.f32 %v1054, %v1098
  %v1111 = vadd.f32 %v1055, %v1098
  %v1112 = vadd.f32 %v1056, %v1098
  %v1113 = vadd.f32 %v1057, %v1098
  %v1114 = vadd.f32 %v1058, %v1098
  %v1115 = vadd.f32 %v1059, %v1098
  %v1116 = vadd.f32 %v1060, %v1098
  %v1117 = vadd.f32 %v1061, %v1098
  %v1118 = vadd.f32 %v1062, %v1098
  %v1119 = vadd.f32 %v1063, %v1098
  %v1120 = vadd.f32 %v1064, %v1098
  %v1121 = vadd.f32 %v1065, %v1098
  %v1122 = vadd.f32 %v1066, %v1098
  %v1123 = vadd.f32 %v1067, %v1098
  %v1124 = vadd.f32 %v1068, %v1098
  %v1125 = vadd.f32 %v1069, %v1098
  %v1126 = vadd.f32 %v1070, %v1098
  %v1127 = vadd.f32 %v1071, %v1098
  %v1128 = vadd.f32 %v1072, %v1098
  %v1129 = vadd.f32 %v1073, %v1098
  %v1130 = vadd.f32 %v1074, %v1098
  %v1131 = vadd.f32 %v1075, %v1098
  %v1132 = vadd.f32 %v1076, %v1098
  %v1133 = vadd.f32 %v1077, %v1098
  %v1134 = vadd.f32 %v1078, %v1098
  %v1135 = vadd.f32 %v1079, %v1098
  %v1136 = vadd.f32 %v1080, %v1098
  %v1137 = vadd.f32 %v1081, %v1098
  %v1138 = vadd.f32 %v1082, %v1098
  %v1139 = vadd.f32 %v1083, %v1098
  %v1140 = vadd.f32 %v1084, %v1098
  %v1141 = vadd.f32 %v1085, %v1098
  %v1142 = vadd.f32 %v1086, %v1098
  %v1143 = vadd.f32 %v1087, %v1098
  %v1144 = vadd.f32 %v1088, %v1098
  %v1145 = vadd.f32 %v1089, %v1098
  %v1146 = vadd.f32 %v1090, %v1098
  %v1147 = vadd.f32 %v1091, %v1098
  %v1148 = vadd.f32 %v1092, %v1098
  %v1149 = vmax.f32 %v1100, 0.0
  %v1150 = vmax.f32 %v1101, 0.0
  %v1151 = vmax.f32 %v1102, 0.0
  %v1152 = vmax.f32 %v1103, 0.0
  %v1153 = vmax.f32 %v1104, 0.0
  %v1154 = vmax.f32 %v1105, 0.0
  %v1155 = vmax.f32 %v1106, 0.0
  %v1156 = vmax.f32 %v1107, 0.0
  %v1157 = vmax.f32 %v1108, 0.0
  %v1158 = vmax.f32 %v1109, 0.0
  %v1159 = vmax.f32 %v1110, 0.0
  %v1160 = vmax.f32 %v1111, 0.0
  %v1161 = vmax.f32 %v1112, 0.0
  %v1162 = vmax.f32 %v1113, 0.0
  %v1163 = vmax.f32 %v1114, 0.0
  %v1164 = vmax.f32 %v1115, 0.0
  %v1165 = vmax.f32 %v1116, 0.0
  %v1166 = vmax.f32 %v1117, 0.0
  %v1167 = vmax.f32 %v1118, 0.0
  %v1168 = vmax.f32 %v1119, 0.0
  %v1169 = vmax.f32 %v1120, 0.0
  %v1170 = vmax.f32 %v1121, 0.0
  %v1171 = vmax.f32 %v1122, 0.0
  %v1172 = vmax.f32 %v1123, 0.0
  %v1173 = vmax.f32 %v1124, 0.0
  %v1174 = vmax.f32 %v1125, 0.0
  %v1175 = vmax.f32 %v1126, 0.0
  %v1176 = vmax.f32 %v1127, 0.0
  %v1177 = vmax.f32 %v1128, 0.0
  %v1178 = vmax.f32 %v1129, 0.0
  %v1179 = vmax.f32 %v1130, 0.0
  %v1180 = vmax.f32 %v1131, 0.0
  %v1181 = vmax.f32 %v1132, 0.0
  %v1182 = vmax.f32 %v1133, 0.0
  %v1183 = vmax.f32 %v1134, 0.0
  %v1184 = vmax.f32 %v1135, 0.0
  %v1185 = vmax.f32 %v1136, 0.0
  %v1186 = vmax.f32 %v1137, 0.0
  %v1187 = vmax.f32 %v1138, 0.0
  %v1188 = vmax.f32 %v1139, 0.0
  %v1189 = vmax.f32 %v1140, 0.0
  %v1190 = vmax.f32 %v1141, 0.0
  %v1191 = vmax.f32 %v1142, 0.0
  %v1192 = vmax.f32 %v1143, 0.0
  %v1193 = vmax.f32 %v1144, 0.0
  %v1194 = vmax.f32 %v1145, 0.0
  %v1195 = vmax.f32 %v1146, 0.0
  %v1196 = vmax.f32 %v1147, 0.0
  %v1197 = vmax.f32 %v1148, 0.0
  %1198 = vst.msk [vmem:[%s5] sm:$0xff] %vm679, %v1149
  %1199 = vst.msk [vmem:[%s5 + $0x8] sm:$0xff] %vm679, %v1150
  %1200 = vst.msk [vmem:[%s5 + $0x10] sm:$0xff] %vm679, %v1151
  %1201 = vst.msk [vmem:[%s5 + $0x18] sm:$0xff] %vm679, %v1152
  %1202 = vst.msk [vmem:[%s5 + $0x20] sm:$0xff] %vm679, %v1153
  %1203 = vst.msk [vmem:[%s5 + $0x28] sm:$0xff] %vm679, %v1154
  %1204 = vst.msk [vmem:[%s5 + $0x30] sm:$0xff] %vm679, %v1155
  %1205 = vst.msk [vmem:[%s5 + $0x38] sm:$0xff] %vm679, %v1156
  %1206 = vst.msk [vmem:[%s5 + $0x40] sm:$0xff] %vm679, %v1157
  %1207 = vst.msk [vmem:[%s5 + $0x48] sm:$0xff] %vm679, %v1158
  %1208 = vst.msk [vmem:[%s5 + $0x50] sm:$0xff] %vm679, %v1159
  %1209 = vst.msk [vmem:[%s5 + $0x58] sm:$0xff] %vm679, %v1160
  %1210 = vst.msk [vmem:[%s5 + $0x60] sm:$0xff] %vm679, %v1161
  %1211 = vst.msk [vmem:[%s5 + $0x68] sm:$0xff] %vm679, %v1162
  %1212 = vst.msk [vmem:[%s5 + $0x70] sm:$0xff] %vm679, %v1163
  %1213 = vst.msk [vmem:[%s5 + $0x78] sm:$0xff] %vm679, %v1164
  %1214 = vst.msk [vmem:[%s5 + $0x80] sm:$0xff] %vm679, %v1165
  %1215 = vst.msk [vmem:[%s5 + $0x88] sm:$0xff] %vm679, %v1166
  %1216 = vst.msk [vmem:[%s5 + $0x90] sm:$0xff] %vm679, %v1167
  %1217 = vst.msk [vmem:[%s5 + $0x98] sm:$0xff] %vm679, %v1168
  %1218 = vst.msk [vmem:[%s5 + $0xa0] sm:$0xff] %vm679, %v1169
  %1219 = vst.msk [vmem:[%s5 + $0xa8] sm:$0xff] %vm679, %v1170
  %1220 = vst.msk [vmem:[%s5 + $0xb0] sm:$0xff] %vm679, %v1171
  %1221 = vst.msk [vmem:[%s5 + $0xb8] sm:$0xff] %vm679, %v1172
  %1222 = vst.msk [vmem:[%s5 + $0xc0] sm:$0xff] %vm679, %v1173
  %1223 = vst.msk [vmem:[%s5 + $0xc8] sm:$0xff] %vm679, %v1174
  %1224 = vst.msk [vmem:[%s5 + $0xd0] sm:$0xff] %vm679, %v1175
  %1225 = vst.msk [vmem:[%s5 + $0xd8] sm:$0xff] %vm679, %v1176
  %1226 = vst.msk [vmem:[%s5 + $0xe0] sm:$0xff] %vm679, %v1177
  %1227 = vst.msk [vmem:[%s5 + $0xe8] sm:$0xff] %vm679, %v1178
  %1228 = vst.msk [vmem:[%s5 + $0xf0] sm:$0xff] %vm679, %v1179
  %1229 = vst.msk [vmem:[%s5 + $0xf8] sm:$0xff] %vm679, %v1180
  %1230 = vst.msk [vmem:[%s5 + $0x100] sm:$0xff] %vm679, %v1181
  %1231 = vst.msk [vmem:[%s5 + $0x108] sm:$0xff] %vm679, %v1182
  %1232 = vst.msk [vmem:[%s5 + $0x110] sm:$0xff] %vm679, %v1183
  %1233 = vst.msk [vmem:[%s5 + $0x118] sm:$0xff] %vm679, %v1184
  %1234 = vst.msk [vmem:[%s5 + $0x120] sm:$0xff] %vm679, %v1185
  %1235 = vst.msk [vmem:[%s5 + $0x128] sm:$0xff] %vm679, %v1186
  %1236 = vst.msk [vmem:[%s5 + $0x130] sm:$0xff] %vm679, %v1187
  %1237 = vst.msk [vmem:[%s5 + $0x138] sm:$0xff] %vm679, %v1188
  %1238 = vst.msk [vmem:[%s5 + $0x140] sm:$0xff] %vm679, %v1189
  %1239 = vst.msk [vmem:[%s5 + $0x148] sm:$0xff] %vm679, %v1190
  %1240 = vst.msk [vmem:[%s5 + $0x150] sm:$0xff] %vm679, %v1191
  %1241 = vst.msk [vmem:[%s5 + $0x158] sm:$0xff] %vm679, %v1192
  %1242 = vst.msk [vmem:[%s5 + $0x160] sm:$0xff] %vm679, %v1193
  %1243 = vst.msk [vmem:[%s5 + $0x168] sm:$0xff] %vm679, %v1194
  %1244 = vst.msk [vmem:[%s5 + $0x170] sm:$0xff] %vm679, %v1195
  %1245 = vst.msk [vmem:[%s5 + $0x178] sm:$0xff] %vm679, %v1196
  %1246 = vst.msk [vmem:[%s5 + $0x180] sm:$0xff] %vm679, %v1197
  // Predicated region
  $region22: #{vae_forward.10} parent=0 // pred_check
    _
  $region23: #{vae_forward.10} parent=0 // pred_check_branch
    %1248 = sbr.rel (0) target = $region25
  $region24: #{vae_forward.10} parent=0 // pred_region
    _
  $region25: #{vae_forward.10} parent=0 // pred_fallthru
    _
  // Predicated region
  $region26: #{vae_forward.10} parent=0 // pred_check
    _
  $region27: #{vae_forward.10} parent=0 // pred_check_branch
    %1250 = sbr.rel (0) target = $region29
  $region28: #{vae_forward.10} parent=0 // pred_region
    _
  $region29: #{vae_forward.10} parent=0 // pred_fallthru
    _

// kernel: vae_forward.11
$region0: #{vae_forward.11}
  #allocation0 [shape = 'u32[]', space=smem, size = 0x4, offset = 0x4, fixed_abs, tag = 'smem constant byte address 0x4 - core index']
  #allocation1 [shape = 'u32[144,128]{1,0:T(1,128)}', space=vmem, size = 0x12000, scoped, tag = 'internal scratch']
  %s0 = inlined_call_operand.vmem [shape: bf16[1568,72], index: 0, kind: input, shape index: {}]
  %s1 = inlined_call_operand.vmem [shape: bf16[72,3], index: 1, kind: input, shape index: {}]
  %s2 = inlined_call_operand.vmem [shape: f32[1,3], index: 2, kind: input, shape index: {}]
  %s3 = inlined_call_operand.vmem [shape: f32[1568,3], index: 3, kind: output, shape index: {}]
  %s4 = sld [smem:[#allocation0]]
  $region45: #{vae_forward.11} parent=0
    _
  %s6 = ssub.s32 1, %s4
  %s7 = scalar_select 0, %s6, %s4
  loop: start=0, step=1, limit=4
  $region2: #{vae_forward.11} parent=0 // loop_pre_header
    _
  $region3: #{vae_forward.11} parent=0 // loop_header
    %s9 = sphi 0, %s13
    %p10 = scmp.ge.s32.totalorder %s9, 4
    %s19 = sphi 0, %s21
    %s22 = sphi 0, %s19
    %s23 = sphi 0, %s22
    %s39 = sphi 0, %s23
    %s43 = sphi 0, %s43
    %s45 = sphi 0, %s43
    %s46 = sphi 0, %s45
    %s60 = sphi 0, %s46
    %s64 = sphi 0, %s64
    %s66 = sphi 0, %s64
    %s67 = sphi 0, %s66
    %s81 = sphi 0, %s67
    %s87 = sphi 0, %s89
    %s90 = sphi 0, %s87
    %s91 = sphi 0, %s90
    %s107 = sphi 0, %s91
  $region4: #{vae_forward.11} parent=0 // loop_header_branch
    %12 = sbr.rel (%p10) target = $region8
  $region5: #{vae_forward.11} parent=0 // loop_body
    %s14 = ssub.s32 %s9, 1
    %s15 = ssub.s32 %s9, 2
    %s16 = sadd.s32 %s9, 1
    %s17 = ssub.s32 %s9, %s16
    %p18 = scmp.eq.s32.totalorder %s17, 0
    %s20 = sadd.s32 %s19, 1
    %s21 = scalar_select %p18, %s19, %s20
    %p24 = pneg %p18
    %p25 = scmp.eq.s32.totalorder %s9, 1
    %p26 = por %p24, %p25
    %p27 = scmp.ne.s32.totalorder %s19, %s22
    %p28 = scmp.eq.s32.totalorder %s9, 0
    %p29 = por %p27, %p28
    %p30 = scmp.ne.s32.totalorder %s19, %s22
    %p31 = scmp.eq.s32.totalorder %s14, 1
    %p32 = por %p30, %p31
    %p33 = scmp.ne.s32.totalorder %s22, %s23
    %p34 = scmp.eq.s32.totalorder %s14, 0
    %p35 = por %p33, %p34
    %p36 = scmp.ne.s32.totalorder %s22, %s23
    %p37 = scmp.eq.s32.totalorder %s15, 1
    %p38 = por %p36, %p37
    %p40 = scmp.ne.s32.totalorder %s23, %s39
    %p41 = scmp.eq.s32.totalorder %s15, 0
    %p42 = por %p40, %p41
    %s44 = sadd.s32 %s43, 1
    %p47 = scmp.eq.s32.totalorder %s9, 1
    %p48 = scmp.ne.s32.totalorder %s43, %s45
    %p49 = scmp.eq.s32.totalorder %s9, 0
    %p50 = por %p48, %p49
    %p51 = scmp.ne.s32.totalorder %s43, %s45
    %p52 = scmp.eq.s32.totalorder %s14, 1
    %p53 = por %p51, %p52
    %p54 = scmp.ne.s32.totalorder %s45, %s46
    %p55 = scmp.eq.s32.totalorder %s14, 0
    %p56 = por %p54, %p55
    %p57 = scmp.ne.s32.totalorder %s45, %s46
    %p58 = scmp.eq.s32.totalorder %s15, 1
    %p59 = por %p57, %p58
    %p61 = scmp.ne.s32.totalorder %s46, %s60
    %p62 = scmp.eq.s32.totalorder %s15, 0
    %p63 = por %p61, %p62
    %s65 = sadd.s32 %s64, 1
    %p68 = scmp.eq.s32.totalorder %s9, 1
    %p69 = scmp.ne.s32.totalorder %s64, %s66
    %p70 = scmp.eq.s32.totalorder %s9, 0
    %p71 = por %p69, %p70
    %p72 = scmp.ne.s32.totalorder %s64, %s66
    %p73 = scmp.eq.s32.totalorder %s14, 1
    %p74 = por %p72, %p73
    %p75 = scmp.ne.s32.totalorder %s66, %s67
    %p76 = scmp.eq.s32.totalorder %s14, 0
    %p77 = por %p75, %p76
    %p78 = scmp.ne.s32.totalorder %s66, %s67
    %p79 = scmp.eq.s32.totalorder %s15, 1
    %p80 = por %p78, %p79
    %p82 = scmp.ne.s32.totalorder %s67, %s81
    %p83 = scmp.eq.s32.totalorder %s15, 0
    %p84 = por %p82, %p83
    %s85 = ssub.s32 %s9, %s16
    %p86 = scmp.eq.s32.totalorder %s85, 0
    %s88 = sadd.s32 %s87, 1
    %s89 = scalar_select %p86, %s87, %s88
    %p92 = pneg %p86
    %p93 = scmp.eq.s32.totalorder %s9, 1
    %p94 = por %p92, %p93
    %p95 = scmp.ne.s32.totalorder %s87, %s90
    %p96 = scmp.eq.s32.totalorder %s9, 0
    %p97 = por %p95, %p96
    %p98 = scmp.ne.s32.totalorder %s87, %s90
    %p99 = scmp.eq.s32.totalorder %s14, 1
    %p100 = por %p98, %p99
    %p101 = scmp.ne.s32.totalorder %s90, %s91
    %p102 = scmp.eq.s32.totalorder %s14, 0
    %p103 = por %p101, %p102
    %p104 = scmp.ne.s32.totalorder %s90, %s91
    %p105 = scmp.eq.s32.totalorder %s15, 1
    %p106 = por %p104, %p105
    %p108 = scmp.ne.s32.totalorder %s91, %s107
    %p109 = scmp.eq.s32.totalorder %s15, 0
    %p110 = por %p108, %p109
    %p111 = scmp.le.s32.totalorder 1, %s9
    %p112 = scmp.lt.s32.totalorder %s9, 3
    %p113 = pnand %p111, %p112
    %p114 = pneg %p113
    // Predicated region
    $region9: #{vae_forward.11} parent=5 // pred_check
      _
    $region10: #{vae_forward.11} parent=5 // pred_check_branch
      %116 = sbr.rel (%p113) target = $region12
    $region11: #{vae_forward.11} parent=5 // pred_region
      %s117 = ssub.s32 %s9, 1
      // Predicated region
      $region13: #{vae_forward.11} parent=11 // pred_check
        %p118 = pneg %p56
      $region14: #{vae_forward.11} parent=11 // pred_check_branch
        %120 = sbr.rel (%p118) target = $region16
      $region15: #{vae_forward.11} parent=11 // pred_region
        _
      $region16: #{vae_forward.11} parent=11 // pred_fallthru
        _
      // Predicated region
      $region17: #{vae_forward.11} parent=11 // pred_check
        %p121 = pneg %p77
      $region18: #{vae_forward.11} parent=11 // pred_check_branch
        %123 = sbr.rel (%p121) target = $region20
      $region19: #{vae_forward.11} parent=11 // pred_region
        _
      $region20: #{vae_forward.11} parent=11 // pred_fallthru
        _
    $region12: #{vae_forward.11} parent=5 // pred_fallthru
      _
    %p124 = scmp.lt.s32.totalorder %s9, 2
    // Predicated region
    $region21: #{vae_forward.11} parent=5 // pred_check
      %p125 = pneg %p124
    $region22: #{vae_forward.11} parent=5 // pred_check_branch
      %127 = sbr.rel (%p125) target = $region24
    $region23: #{vae_forward.11} parent=5 // pred_region
      // Predicated region
      $region25: #{vae_forward.11} parent=23 // pred_check
        %p128 = pneg %p29
      $region26: #{vae_forward.11} parent=23 // pred_check_branch
        %130 = sbr.rel (%p128) target = $region28
      $region27: #{vae_forward.11} parent=23 // pred_region
        %s131 = smul.u32 98, %s9
        %p132 = scmp.lt.s32.totalorder %s131, 195
        %s133 = scalar_select %p132, %s131, 195
        %s134 = smul.addr %s133, 4
        %s135 = scalar_lea.vmem %s0, %s134
        %s136 = smul.u32 98, %s9
      $region28: #{vae_forward.11} parent=23 // pred_fallthru
        _
    $region24: #{vae_forward.11} parent=5 // pred_fallthru
      _
    %p137 = scmp.le.s32.totalorder 1, %s9
    %p138 = scmp.lt.s32.totalorder %s9, 3
    %p139 = pnand %p137, %p138
    %p140 = pneg %p139
    // Predicated region
    $region29: #{vae_forward.11} parent=5 // pred_check
      _
    $region30: #{vae_forward.11} parent=5 // pred_check_branch
      %142 = sbr.rel (%p139) target = $region32
    $region31: #{vae_forward.11} parent=5 // pred_region
      %s143 = ssub.s32 %s9, 1
      %s144 = smul.u32 98, %s14
      %p145 = scmp.lt.s32.totalorder %s144, 195
      %s146 = scalar_select %p145, %s144, 195
      %s147 = smul.addr %s146, 4
      %s148 = scalar_lea.vmem %s0, %s147
      %p149 = pneg %p35
      %p150 = pneg %p32
      %p151 = pneg %p56
      %p152 = pneg %p53
      %p153 = pneg %p77
      %p154 = pneg %p74
      %p155 = pneg %p103
      %p156 = pneg %p100
      %s157 = smul.u32 98, %s14
      %p158 = scmp.lt.s32.totalorder %s157, 195
      %s159 = scalar_select %p158, %s157, 195
      %s160 = smul.addr %s159, 8
      %s161 = scalar_lea.vmem %s3, %s160
      %s162 = smul.u32 98, %s14
      %p163 = scmp.lt.s32.totalorder %s162, 195
      %s164 = scalar_select %p163, %s162, 195
      %s165 = smul.addr %s164, 4
      %s166 = scalar_lea.vmem %s0, %s165
      %s167 = smul.u32 98, %s14
      %s168 = smul.u32 98, %s14
      %p169 = scmp.lt.s32.totalorder %s168, 195
      %s170 = scalar_select %p169, %s168, 195
      %s171 = smul.addr %s170, 8
      %s172 = scalar_lea.vmem %s3, %s171
      %s173 = smul.u32 98, %s14
      %v175 = vld [vmem:[%s166] sm:$0xf]
      %v176 = vld [vmem:[%s166 + $0x4] sm:$0xf]
      %v177 = vld [vmem:[%s166 + $0x8] sm:$0xf]
      %v178 = vld [vmem:[%s166 + $0xc] sm:$0xf]
      %v179 = vld [vmem:[%s166 + $0x10] sm:$0xf]
      %v180 = vld [vmem:[%s166 + $0x14] sm:$0xf]
      %v181 = vld [vmem:[%s166 + $0x18] sm:$0xf]
      %v182 = vld [vmem:[%s166 + $0x1c] sm:$0xf]
      %v183 = vld [vmem:[%s166 + $0x20] sm:$0xf]
      %v184 = vld [vmem:[%s166 + $0x24] sm:$0xf]
      %v185 = vld [vmem:[%s166 + $0x28] sm:$0xf]
      %v186 = vld [vmem:[%s166 + $0x2c] sm:$0xf]
      %v187 = vld [vmem:[%s166 + $0x30] sm:$0xf]
      %v188 = vld [vmem:[%s166 + $0x34] sm:$0xf]
      %v189 = vld [vmem:[%s166 + $0x38] sm:$0xf]
      %v190 = vld [vmem:[%s166 + $0x3c] sm:$0xf]
      %v191 = vld [vmem:[%s166 + $0x40] sm:$0xf]
      %v192 = vld [vmem:[%s166 + $0x44] sm:$0xf]
      %v193 = vld [vmem:[%s166 + $0x48] sm:$0xf]
      %v194 = vld [vmem:[%s166 + $0x4c] sm:$0xf]
      %v195 = vld [vmem:[%s166 + $0x50] sm:$0xf]
      %v196 = vld [vmem:[%s166 + $0x54] sm:$0xf]
      %v197 = vld [vmem:[%s166 + $0x58] sm:$0xf]
      %v198 = vld [vmem:[%s166 + $0x5c] sm:$0xf]
      %v199 = vld [vmem:[%s166 + $0x60] sm:$0xf]
      %v200 = vld [vmem:[%s166 + $0x64] sm:$0xf]
      %v201 = vld [vmem:[%s166 + $0x68] sm:$0xf]
      %v202 = vld [vmem:[%s166 + $0x6c] sm:$0xf]
      %v203 = vld [vmem:[%s166 + $0x70] sm:$0xf]
      %v204 = vld [vmem:[%s166 + $0x74] sm:$0xf]
      %v205 = vld [vmem:[%s166 + $0x78] sm:$0xf]
      %v206 = vld [vmem:[%s166 + $0x7c] sm:$0xf]
      %v207 = vld [vmem:[%s166 + $0x80] sm:$0xf]
      %v208 = vld [vmem:[%s166 + $0x84] sm:$0xf]
      %v209 = vld [vmem:[%s166 + $0x88] sm:$0xf]
      %v210 = vld [vmem:[%s166 + $0x8c] sm:$0xf]
      %v211 = vld [vmem:[%s166 + $0x90] sm:$0xf]
      %v212 = vld [vmem:[%s166 + $0x94] sm:$0xf]
      %v213 = vld [vmem:[%s166 + $0x98] sm:$0xf]
      %v214 = vld [vmem:[%s166 + $0x9c] sm:$0xf]
      %v215 = vld [vmem:[%s166 + $0xa0] sm:$0xf]
      %v216 = vld [vmem:[%s166 + $0xa4] sm:$0xf]
      %v217 = vld [vmem:[%s166 + $0xa8] sm:$0xf]
      %v218 = vld [vmem:[%s166 + $0xac] sm:$0xf]
      %v219 = vld [vmem:[%s166 + $0xb0] sm:$0xf]
      %v220 = vld [vmem:[%s166 + $0xb4] sm:$0xf]
      %v221 = vld [vmem:[%s166 + $0xb8] sm:$0xf]
      %v222 = vld [vmem:[%s166 + $0xbc] sm:$0xf]
      %v223 = vld [vmem:[%s166 + $0xc0] sm:$0xf]
      %v224 = vld [vmem:[%s166 + $0xc4] sm:$0xf]
      %v225 = vld [vmem:[%s166 + $0xc8] sm:$0xf]
      %v226 = vld [vmem:[%s166 + $0xcc] sm:$0xf]
      %v227 = vld [vmem:[%s166 + $0xd0] sm:$0xf]
      %v228 = vld [vmem:[%s166 + $0xd4] sm:$0xf]
      %v229 = vld [vmem:[%s166 + $0xd8] sm:$0xf]
      %v230 = vld [vmem:[%s166 + $0xdc] sm:$0xf]
      %v231 = vld [vmem:[%s166 + $0xe0] sm:$0xf]
      %v232 = vld [vmem:[%s166 + $0xe4] sm:$0xf]
      %v233 = vld [vmem:[%s166 + $0xe8] sm:$0xf]
      %v234 = vld [vmem:[%s166 + $0xec] sm:$0xf]
      %v235 = vld [vmem:[%s166 + $0xf0] sm:$0xf]
      %v236 = vld [vmem:[%s166 + $0xf4] sm:$0xf]
      %v237 = vld [vmem:[%s166 + $0xf8] sm:$0xf]
      %v238 = vld [vmem:[%s166 + $0xfc] sm:$0xf]
      %v239 = vld [vmem:[%s166 + $0x100] sm:$0xf]
      %v240 = vld [vmem:[%s166 + $0x104] sm:$0xf]
      %v241 = vld [vmem:[%s166 + $0x108] sm:$0xf]
      %v242 = vld [vmem:[%s166 + $0x10c] sm:$0xf]
      %v243 = vld [vmem:[%s166 + $0x110] sm:$0xf]
      %v244 = vld [vmem:[%s166 + $0x114] sm:$0xf]
      %v245 = vld [vmem:[%s166 + $0x118] sm:$0xf]
      %v246 = vld [vmem:[%s166 + $0x11c] sm:$0xf]
      %v247 = vld [vmem:[%s166 + $0x120] sm:$0xf]
      %v248 = vld [vmem:[%s166 + $0x124] sm:$0xf]
      %v249 = vld [vmem:[%s166 + $0x128] sm:$0xf]
      %v250 = vld [vmem:[%s166 + $0x12c] sm:$0xf]
      %v251 = vld [vmem:[%s166 + $0x130] sm:$0xf]
      %v252 = vld [vmem:[%s166 + $0x134] sm:$0xf]
      %v253 = vld [vmem:[%s166 + $0x138] sm:$0xf]
      %v254 = vld [vmem:[%s166 + $0x13c] sm:$0xf]
      %v255 = vld [vmem:[%s166 + $0x140] sm:$0xf]
      %v256 = vld [vmem:[%s166 + $0x144] sm:$0xf]
      %v257 = vld [vmem:[%s166 + $0x148] sm:$0xf]
      %v258 = vld [vmem:[%s166 + $0x14c] sm:$0xf]
      %v259 = vld [vmem:[%s166 + $0x150] sm:$0xf]
      %v260 = vld [vmem:[%s166 + $0x154] sm:$0xf]
      %v261 = vld [vmem:[%s166 + $0x158] sm:$0xf]
      %v262 = vld [vmem:[%s166 + $0x15c] sm:$0xf]
      %v263 = vld [vmem:[%s166 + $0x160] sm:$0xf]
      %v264 = vld [vmem:[%s166 + $0x164] sm:$0xf]
      %v265 = vld [vmem:[%s166 + $0x168] sm:$0xf]
      %v266 = vld [vmem:[%s166 + $0x16c] sm:$0xf]
      %v267 = vld [vmem:[%s166 + $0x170] sm:$0xf]
      %v268 = vld [vmem:[%s166 + $0x174] sm:$0xf]
      %v269 = vld [vmem:[%s166 + $0x178] sm:$0xf]
      %v270 = vld [vmem:[%s166 + $0x17c] sm:$0xf]
      %v271 = vld [vmem:[%s166 + $0x180] sm:$0xf]
      %v272 = vld [vmem:[%s166 + $0x184] sm:$0xf]
      %v273 = vld [vmem:[%s1] sm:$0xf]
      %v274 = vld [vmem:[%s1 + $0x4] sm:$0xf]
      %v275 = vld [vmem:[%s1 + $0x8] sm:$0xf]
      %v276 = vld [vmem:[%s1 + $0xc] sm:$0xf]
      %v277 = vld [vmem:[%s1 + $0x10] sm:$0xf]
      %v278 = vld [vmem:[%s1 + $0x14] sm:$0xf]
      %v279 = vld [vmem:[%s1 + $0x18] sm:$0xf]
      %v280 = vld [vmem:[%s1 + $0x1c] sm:$0xf]
      %v281 = vld [vmem:[%s1 + $0x20] sm:$0xf]
      %v282 = vld [vmem:[%s2] sm:$0x1]
      %v284 = vlaneseq
      %v285 = vshrl.u32 %v284, 7
      %v286 = vsub.s32 0, %v285
      %v287 = vrot.slane %v282, %v286
      %v387 = vunpack.c.l.b16 %v175
      %v388 = vunpack.c.l.b16 %v176
      %v389 = vunpack.c.l.b16 %v177
      %v390 = vunpack.c.l.b16 %v178
      %v391 = vunpack.c.l.b16 %v179
      %v392 = vunpack.c.l.b16 %v180
      %v393 = vunpack.c.l.b16 %v181
      %v394 = vunpack.c.l.b16 %v182
      %v395 = vunpack.c.l.b16 %v183
      %v396 = vunpack.c.l.b16 %v184
      %v397 = vunpack.c.l.b16 %v185
      %v398 = vunpack.c.l.b16 %v186
      %v399 = vunpack.c.l.b16 %v187
      %v400 = vunpack.c.l.b16 %v188
      %v401 = vunpack.c.l.b16 %v189
      %v402 = vunpack.c.l.b16 %v190
      %v403 = vunpack.c.l.b16 %v191
      %v404 = vunpack.c.l.b16 %v192
      %v405 = vunpack.c.l.b16 %v193
      %v406 = vunpack.c.l.b16 %v194
      %v407 = vunpack.c.l.b16 %v195
      %v408 = vunpack.c.l.b16 %v196
      %v409 = vunpack.c.l.b16 %v197
      %v410 = vunpack.c.l.b16 %v198
      %v411 = vunpack.c.l.b16 %v199
      %v412 = vunpack.c.l.b16 %v200
      %v413 = vunpack.c.l.b16 %v201
      %v414 = vunpack.c.l.b16 %v202
      %v415 = vunpack.c.l.b16 %v203
      %v416 = vunpack.c.l.b16 %v204
      %v417 = vunpack.c.l.b16 %v205
      %v418 = vunpack.c.l.b16 %v206
      %v419 = vunpack.c.l.b16 %v207
      %v420 = vunpack.c.l.b16 %v208
      %v421 = vunpack.c.l.b16 %v209
      %v422 = vunpack.c.l.b16 %v210
      %v423 = vunpack.c.l.b16 %v211
      %v424 = vunpack.c.l.b16 %v212
      %v425 = vunpack.c.l.b16 %v213
      %v426 = vunpack.c.l.b16 %v214
      %v427 = vunpack.c.l.b16 %v215
      %v428 = vunpack.c.l.b16 %v216
      %v429 = vunpack.c.l.b16 %v217
      %v430 = vunpack.c.l.b16 %v218
      %v431 = vunpack.c.l.b16 %v219
      %v432 = vunpack.c.l.b16 %v220
      %v433 = vunpack.c.l.b16 %v221
      %v434 = vunpack.c.l.b16 %v222
      %v435 = vunpack.c.l.b16 %v223
      %v436 = vunpack.c.l.b16 %v224
      %v437 = vunpack.c.l.b16 %v225
      %v438 = vunpack.c.l.b16 %v226
      %v439 = vunpack.c.l.b16 %v227
      %v440 = vunpack.c.l.b16 %v228
      %v441 = vunpack.c.l.b16 %v229
      %v442 = vunpack.c.l.b16 %v230
      %v443 = vunpack.c.l.b16 %v231
      %v444 = vunpack.c.l.b16 %v232
      %v445 = vunpack.c.l.b16 %v233
      %v446 = vunpack.c.l.b16 %v234
      %v447 = vunpack.c.l.b16 %v235
      %v448 = vunpack.c.l.b16 %v236
      %v449 = vunpack.c.l.b16 %v237
      %v450 = vunpack.c.l.b16 %v238
      %v451 = vunpack.c.l.b16 %v239
      %v452 = vunpack.c.l.b16 %v240
      %v453 = vunpack.c.l.b16 %v241
      %v454 = vunpack.c.l.b16 %v242
      %v455 = vunpack.c.l.b16 %v243
      %v456 = vunpack.c.l.b16 %v244
      %v457 = vunpack.c.l.b16 %v245
      %v458 = vunpack.c.l.b16 %v246
      %v459 = vunpack.c.l.b16 %v247
      %v460 = vunpack.c.l.b16 %v248
      %v461 = vunpack.c.l.b16 %v249
      %v462 = vunpack.c.l.b16 %v250
      %v463 = vunpack.c.l.b16 %v251
      %v464 = vunpack.c.l.b16 %v252
      %v465 = vunpack.c.l.b16 %v253
      %v466 = vunpack.c.l.b16 %v254
      %v467 = vunpack.c.l.b16 %v255
      %v468 = vunpack.c.l.b16 %v256
      %v469 = vunpack.c.l.b16 %v257
      %v470 = vunpack.c.l.b16 %v258
      %v471 = vunpack.c.l.b16 %v259
      %v472 = vunpack.c.l.b16 %v260
      %v473 = vunpack.c.l.b16 %v261
      %v474 = vunpack.c.l.b16 %v262
      %v475 = vunpack.c.l.b16 %v263
      %v476 = vunpack.c.l.b16 %v264
      %v477 = vunpack.c.l.b16 %v265
      %v478 = vunpack.c.l.b16 %v266
      %v479 = vunpack.c.l.b16 %v267
      %v480 = vunpack.c.l.b16 %v268
      %v481 = vunpack.c.l.b16 %v269
      %v482 = vunpack.c.l.b16 %v270
      %v483 = vunpack.c.l.b16 %v271
      %v484 = vunpack.c.l.b16 %v272
      %v485 = vpack.c.b16 %v388, %v387
      %v486 = vpack.c.b16 %v390, %v389
      %v487 = vpack.c.b16 %v392, %v391
      %v488 = vpack.c.b16 %v394, %v393
      %v489 = vpack.c.b16 %v396, %v395
      %v490 = vpack.c.b16 %v398, %v397
      %v491 = vpack.c.b16 %v400, %v399
      %v492 = vpack.c.b16 %v402, %v401
      %v493 = vpack.c.b16 %v404, %v403
      %v494 = vpack.c.b16 %v406, %v405
      %v495 = vpack.c.b16 %v408, %v407
      %v496 = vpack.c.b16 %v410, %v409
      %v497 = vpack.c.b16 %v412, %v411
      %v498 = vpack.c.b16 %v414, %v413
      %v499 = vpack.c.b16 %v416, %v415
      %v500 = vpack.c.b16 %v418, %v417
      %v501 = vpack.c.b16 %v420, %v419
      %v502 = vpack.c.b16 %v422, %v421
      %v503 = vpack.c.b16 %v424, %v423
      %v504 = vpack.c.b16 %v426, %v425
      %v505 = vpack.c.b16 %v428, %v427
      %v506 = vpack.c.b16 %v430, %v429
      %v507 = vpack.c.b16 %v432, %v431
      %v508 = vpack.c.b16 %v434, %v433
      %v509 = vpack.c.b16 %v436, %v435
      %v510 = vpack.c.b16 %v438, %v437
      %v511 = vpack.c.b16 %v440, %v439
      %v512 = vpack.c.b16 %v442, %v441
      %v513 = vpack.c.b16 %v444, %v443
      %v514 = vpack.c.b16 %v446, %v445
      %v515 = vpack.c.b16 %v448, %v447
      %v516 = vpack.c.b16 %v450, %v449
      %v517 = vpack.c.b16 %v452, %v451
      %v518 = vpack.c.b16 %v454, %v453
      %v519 = vpack.c.b16 %v456, %v455
      %v520 = vpack.c.b16 %v458, %v457
      %v521 = vpack.c.b16 %v460, %v459
      %v522 = vpack.c.b16 %v462, %v461
      %v523 = vpack.c.b16 %v464, %v463
      %v524 = vpack.c.b16 %v466, %v465
      %v525 = vpack.c.b16 %v468, %v467
      %v526 = vpack.c.b16 %v470, %v469
      %v527 = vpack.c.b16 %v472, %v471
      %v528 = vpack.c.b16 %v474, %v473
      %v529 = vpack.c.b16 %v476, %v475
      %v530 = vpack.c.b16 %v478, %v477
      %v531 = vpack.c.b16 %v480, %v479
      %v532 = vpack.c.b16 %v482, %v481
      %v533 = vpack.c.b16 %v484, %v483
      %v543 = vunpack.c.l.b16 %v273
      %v544 = vunpack.c.l.b16 %v274
      %v545 = vunpack.c.l.b16 %v275
      %v546 = vunpack.c.l.b16 %v276
      %v547 = vunpack.c.l.b16 %v277
      %v548 = vunpack.c.l.b16 %v278
      %v549 = vunpack.c.l.b16 %v279
      %v550 = vunpack.c.l.b16 %v280
      %v551 = vunpack.c.l.b16 %v281
      %v552 = vpack.c.b16 %v544, %v543
      %v553 = vpack.c.b16 %v546, %v545
      %v554 = vpack.c.b16 %v548, %v547
      %v555 = vpack.c.b16 %v550, %v549
      %v556 = vpack.c.b16 %v551, %v551
      %vm561 = vcmask 588800
      %v563 = vsel %vm561, %v485, 0
      %v566 = vsel %vm561, %v486, 0
      %v569 = vsel %vm561, %v487, 0
      %v572 = vsel %vm561, %v488, 0
      %v575 = vsel %vm561, %v489, 0
      %v578 = vsel %vm561, %v490, 0
      %v581 = vsel %vm561, %v491, 0
      %v584 = vsel %vm561, %v492, 0
      %v587 = vsel %vm561, %v493, 0
      %v590 = vsel %vm561, %v494, 0
      %v593 = vsel %vm561, %v495, 0
      %v596 = vsel %vm561, %v496, 0
      %v599 = vsel %vm561, %v497, 0
      %v602 = vsel %vm561, %v498, 0
      %v605 = vsel %vm561, %v499, 0
      %v608 = vsel %vm561, %v500, 0
      %v611 = vsel %vm561, %v501, 0
      %v614 = vsel %vm561, %v502, 0
      %v617 = vsel %vm561, %v503, 0
      %v620 = vsel %vm561, %v504, 0
      %v623 = vsel %vm561, %v505, 0
      %v626 = vsel %vm561, %v506, 0
      %v629 = vsel %vm561, %v507, 0
      %v632 = vsel %vm561, %v508, 0
      %v635 = vsel %vm561, %v509, 0
      %v638 = vsel %vm561, %v510, 0
      %v641 = vsel %vm561, %v511, 0
      %v644 = vsel %vm561, %v512, 0
      %v647 = vsel %vm561, %v513, 0
      %v650 = vsel %vm561, %v514, 0
      %v653 = vsel %vm561, %v515, 0
      %v656 = vsel %vm561, %v516, 0
      %v659 = vsel %vm561, %v517, 0
      %v662 = vsel %vm561, %v518, 0
      %v665 = vsel %vm561, %v519, 0
      %v668 = vsel %vm561, %v520, 0
      %v671 = vsel %vm561, %v521, 0
      %v674 = vsel %vm561, %v522, 0
      %v677 = vsel %vm561, %v523, 0
      %v680 = vsel %vm561, %v524, 0
      %v683 = vsel %vm561, %v525, 0
      %v686 = vsel %vm561, %v526, 0
      %v689 = vsel %vm561, %v527, 0
      %v692 = vsel %vm561, %v528, 0
      %v695 = vsel %vm561, %v529, 0
      %v698 = vsel %vm561, %v530, 0
      %v701 = vsel %vm561, %v531, 0
      %v704 = vsel %vm561, %v532, 0
      %v707 = vsel %vm561, %v533, 0
      %vm709 = vcmask 1043456
      %v711 = vsel %vm709, %v556, 0
      %713 = vmatprep.subr.bf16.mxu0 0
      %714 = vmatpush1.bf16.msra.mxu0 %v552
      %715 = vmatprep.subr.bf16.mxu0 0
      %716 = vmatpush1.bf16.msra.mxu0 %v553
      %717 = vmatprep.subr.bf16.mxu0 0
      %718 = vmatpush1.bf16.msra.mxu0 %v554
      %719 = vmatprep.subr.bf16.mxu0 0
      %720 = vmatpush1.bf16.msra.mxu0 %v555
      %721 = vmatprep.subr.bf16.mxu0 0
      %722 = vmatpush1.bf16.msra.mxu0 %v711
      %723 = vmatprep.subr.bf16.mxu0 0
      %724 = vmatpush1.bf16.msra.mxu0 0
      %725 = vmatprep.subr.bf16.mxu0 0
      %726 = vmatpush1.bf16.msra.mxu0 0
      %727 = vmatprep.subr.bf16.mxu0 0
      %728 = vmatpush1.bf16.msra.mxu0 0
      %729 = vmatprep.subr.bf16.mxu0 0
      %730 = vmatpush1.bf16.msra.mxu0 0
      %731 = vmatprep.subr.bf16.mxu0 0
      %732 = vmatpush1.bf16.msra.mxu0 0
      %733 = vmatprep.subr.bf16.mxu0 0
      %734 = vmatpush1.bf16.msra.mxu0 0
      %735 = vmatprep.subr.bf16.mxu0 0
      %736 = vmatpush1.bf16.msra.mxu0 0
      %737 = vmatprep.subr.bf16.mxu0 0
      %738 = vmatpush1.bf16.msra.mxu0 0
      %739 = vmatprep.subr.bf16.mxu0 0
      %740 = vmatpush1.bf16.msra.mxu0 0
      %741 = vmatprep.subr.bf16.mxu0 0
      %742 = vmatpush1.bf16.msra.mxu0 0
      %743 = vmatprep.subr.bf16.mxu0 0
      %744 = vmatpush1.bf16.msra.mxu0 0
      %745 = vmatprep.mubr.bf16.mxu0 0
      %746 = vmatmul.mubr.bf16.gmra.mrb[0].mxu0 %v563
      %v747 = vpop.f32.mrb[0].mxu0
      %v748 = vadd.f32 %v287, %v747
      %v749 = vpop.f32.mrb[0].mxu0
      %v750 = vpop.f32.mrb[0].mxu0
      %v751 = vadd.f32 %v287, %v750
      %v752 = vpop.f32.mrb[0].mxu0
      %753 = vmatprep.mubr.bf16.mxu0 0
      %754 = vmatmul.mubr.bf16.gmra.mrb[0].mxu0 %v566
      %v755 = vpop.f32.mrb[0].mxu0
      %v756 = vadd.f32 %v287, %v755
      %v757 = vpop.f32.mrb[0].mxu0
      %v758 = vpop.f32.mrb[0].mxu0
      %v759 = vadd.f32 %v287, %v758
      %v760 = vpop.f32.mrb[0].mxu0
      %761 = vmatprep.mubr.bf16.mxu0 0
      %762 = vmatmul.mubr.bf16.gmra.mrb[0].mxu0 %v569
      %v763 = vpop.f32.mrb[0].mxu0
      %v764 = vadd.f32 %v287, %v763
      %v765 = vpop.f32.mrb[0].mxu0
      %v766 = vpop.f32.mrb[0].mxu0
      %v767 = vadd.f32 %v287, %v766
      %v768 = vpop.f32.mrb[0].mxu0
      %769 = vmatprep.mubr.bf16.mxu0 0
      %770 = vmatmul.mubr.bf16.gmra.mrb[0].mxu0 %v572
      %v771 = vpop.f32.mrb[0].mxu0
      %v772 = vadd.f32 %v287, %v771
      %v773 = vpop.f32.mrb[0].mxu0
      %v774 = vpop.f32.mrb[0].mxu0
      %v775 = vadd.f32 %v287, %v774
      %v776 = vpop.f32.mrb[0].mxu0
      %777 = vmatprep.mubr.bf16.mxu0 0
      %778 = vmatmul.mubr.bf16.gmra.mrb[0].mxu0 %v575
      %v779 = vpop.f32.mrb[0].mxu0
      %v780 = vadd.f32 %v287, %v779
      %v781 = vpop.f32.mrb[0].mxu0
      %v782 = vpop.f32.mrb[0].mxu0
      %v783 = vadd.f32 %v287, %v782
      %v784 = vpop.f32.mrb[0].mxu0
      %785 = vmatprep.mubr.bf16.mxu0 0
      %786 = vmatmul.mubr.bf16.gmra.mrb[0].mxu0 %v578
      %v787 = vpop.f32.mrb[0].mxu0
      %v788 = vadd.f32 %v287, %v787
      %v789 = vpop.f32.mrb[0].mxu0
      %v790 = vpop.f32.mrb[0].mxu0
      %v791 = vadd.f32 %v287, %v790
      %v792 = vpop.f32.mrb[0].mxu0
      %793 = vmatprep.mubr.bf16.mxu0 0
      %794 = vmatmul.mubr.bf16.gmra.mrb[0].mxu0 %v581
      %v795 = vpop.f32.mrb[0].mxu0
      %v796 = vadd.f32 %v287, %v795
      %v797 = vpop.f32.mrb[0].mxu0
      %v798 = vpop.f32.mrb[0].mxu0
      %v799 = vadd.f32 %v287, %v798
      %v800 = vpop.f32.mrb[0].mxu0
      %801 = vmatprep.mubr.bf16.mxu0 0
      %802 = vmatmul.mubr.bf16.gmra.mrb[0].mxu0 %v584
      %v803 = vpop.f32.mrb[0].mxu0
      %v804 = vadd.f32 %v287, %v803
      %v805 = vpop.f32.mrb[0].mxu0
      %v806 = vpop.f32.mrb[0].mxu0
      %v807 = vadd.f32 %v287, %v806
      %v808 = vpop.f32.mrb[0].mxu0
      %809 = vmatprep.mubr.bf16.mxu0 0
      %810 = vmatmul.mubr.bf16.gmra.mrb[0].mxu0 %v587
      %v811 = vpop.f32.mrb[0].mxu0
      %v812 = vadd.f32 %v287, %v811
      %v813 = vpop.f32.mrb[0].mxu0
      %v814 = vpop.f32.mrb[0].mxu0
      %v815 = vadd.f32 %v287, %v814
      %v816 = vpop.f32.mrb[0].mxu0
      %817 = vmatprep.mubr.bf16.mxu0 0
      %818 = vmatmul.mubr.bf16.gmra.mrb[0].mxu0 %v590
      %v819 = vpop.f32.mrb[0].mxu0
      %v820 = vadd.f32 %v287, %v819
      %v821 = vpop.f32.mrb[0].mxu0
      %v822 = vpop.f32.mrb[0].mxu0
      %v823 = vadd.f32 %v287, %v822
      %v824 = vpop.f32.mrb[0].mxu0
      %825 = vmatprep.mubr.bf16.mxu0 0
      %826 = vmatmul.mubr.bf16.gmra.mrb[0].mxu0 %v593
      %v827 = vpop.f32.mrb[0].mxu0
      %v828 = vadd.f32 %v287, %v827
      %v829 = vpop.f32.mrb[0].mxu0
      %v830 = vpop.f32.mrb[0].mxu0
      %v831 = vadd.f32 %v287, %v830
      %v832 = vpop.f32.mrb[0].mxu0
      %833 = vmatprep.mubr.bf16.mxu0 0
      %834 = vmatmul.mubr.bf16.gmra.mrb[0].mxu0 %v596
      %v835 = vpop.f32.mrb[0].mxu0
      %v836 = vadd.f32 %v287, %v835
      %v837 = vpop.f32.mrb[0].mxu0
      %v838 = vpop.f32.mrb[0].mxu0
      %v839 = vadd.f32 %v287, %v838
      %v840 = vpop.f32.mrb[0].mxu0
      %841 = vmatprep.mubr.bf16.mxu0 0
      %842 = vmatmul.mubr.bf16.gmra.mrb[0].mxu0 %v599
      %v843 = vpop.f32.mrb[0].mxu0
      %v844 = vadd.f32 %v287, %v843
      %v845 = vpop.f32.mrb[0].mxu0
      %v846 = vpop.f32.mrb[0].mxu0
      %v847 = vadd.f32 %v287, %v846
      %v848 = vpop.f32.mrb[0].mxu0
      %849 = vmatprep.mubr.bf16.mxu0 0
      %850 = vmatmul.mubr.bf16.gmra.mrb[0].mxu0 %v602
      %v851 = vpop.f32.mrb[0].mxu0
      %v852 = vadd.f32 %v287, %v851
      %v853 = vpop.f32.mrb[0].mxu0
      %v854 = vpop.f32.mrb[0].mxu0
      %v855 = vadd.f32 %v287, %v854
      %v856 = vpop.f32.mrb[0].mxu0
      %857 = vmatprep.mubr.bf16.mxu0 0
      %858 = vmatmul.mubr.bf16.gmra.mrb[0].mxu0 %v605
      %v859 = vpop.f32.mrb[0].mxu0
      %v860 = vadd.f32 %v287, %v859
      %v861 = vpop.f32.mrb[0].mxu0
      %v862 = vpop.f32.mrb[0].mxu0
      %v863 = vadd.f32 %v287, %v862
      %v864 = vpop.f32.mrb[0].mxu0
      %865 = vmatprep.mubr.bf16.mxu0 0
      %866 = vmatmul.mubr.bf16.gmra.mrb[0].mxu0 %v608
      %v867 = vpop.f32.mrb[0].mxu0
      %v868 = vadd.f32 %v287, %v867
      %v869 = vpop.f32.mrb[0].mxu0
      %v870 = vpop.f32.mrb[0].mxu0
      %v871 = vadd.f32 %v287, %v870
      %v872 = vpop.f32.mrb[0].mxu0
      %873 = vmatprep.mubr.bf16.mxu0 0
      %874 = vmatmul.mubr.bf16.gmra.mrb[0].mxu0 %v611
      %v875 = vpop.f32.mrb[0].mxu0
      %v876 = vadd.f32 %v287, %v875
      %v877 = vpop.f32.mrb[0].mxu0
      %v878 = vpop.f32.mrb[0].mxu0
      %v879 = vadd.f32 %v287, %v878
      %v880 = vpop.f32.mrb[0].mxu0
      %881 = vmatprep.mubr.bf16.mxu0 0
      %882 = vmatmul.mubr.bf16.gmra.mrb[0].mxu0 %v614
      %v883 = vpop.f32.mrb[0].mxu0
      %v884 = vadd.f32 %v287, %v883
      %v885 = vpop.f32.mrb[0].mxu0
      %v886 = vpop.f32.mrb[0].mxu0
      %v887 = vadd.f32 %v287, %v886
      %v888 = vpop.f32.mrb[0].mxu0
      %889 = vmatprep.mubr.bf16.mxu0 0
      %890 = vmatmul.mubr.bf16.gmra.mrb[0].mxu0 %v617
      %v891 = vpop.f32.mrb[0].mxu0
      %v892 = vadd.f32 %v287, %v891
      %v893 = vpop.f32.mrb[0].mxu0
      %v894 = vpop.f32.mrb[0].mxu0
      %v895 = vadd.f32 %v287, %v894
      %v896 = vpop.f32.mrb[0].mxu0
      %897 = vmatprep.mubr.bf16.mxu0 0
      %898 = vmatmul.mubr.bf16.gmra.mrb[0].mxu0 %v620
      %v899 = vpop.f32.mrb[0].mxu0
      %v900 = vadd.f32 %v287, %v899
      %v901 = vpop.f32.mrb[0].mxu0
      %v902 = vpop.f32.mrb[0].mxu0
      %v903 = vadd.f32 %v287, %v902
      %v904 = vpop.f32.mrb[0].mxu0
      %905 = vmatprep.mubr.bf16.mxu0 0
      %906 = vmatmul.mubr.bf16.gmra.mrb[0].mxu0 %v623
      %v907 = vpop.f32.mrb[0].mxu0
      %v908 = vadd.f32 %v287, %v907
      %v909 = vpop.f32.mrb[0].mxu0
      %v910 = vpop.f32.mrb[0].mxu0
      %v911 = vadd.f32 %v287, %v910
      %v912 = vpop.f32.mrb[0].mxu0
      %913 = vmatprep.mubr.bf16.mxu0 0
      %914 = vmatmul.mubr.bf16.gmra.mrb[0].mxu0 %v626
      %v915 = vpop.f32.mrb[0].mxu0
      %v916 = vadd.f32 %v287, %v915
      %v917 = vpop.f32.mrb[0].mxu0
      %v918 = vpop.f32.mrb[0].mxu0
      %v919 = vadd.f32 %v287, %v918
      %v920 = vpop.f32.mrb[0].mxu0
      %921 = vmatprep.mubr.bf16.mxu0 0
      %922 = vmatmul.mubr.bf16.gmra.mrb[0].mxu0 %v629
      %v923 = vpop.f32.mrb[0].mxu0
      %v924 = vadd.f32 %v287, %v923
      %v925 = vpop.f32.mrb[0].mxu0
      %v926 = vpop.f32.mrb[0].mxu0
      %v927 = vadd.f32 %v287, %v926
      %v928 = vpop.f32.mrb[0].mxu0
      %929 = vmatprep.mubr.bf16.mxu0 0
      %930 = vmatmul.mubr.bf16.gmra.mrb[0].mxu0 %v632
      %v931 = vpop.f32.mrb[0].mxu0
      %v932 = vadd.f32 %v287, %v931
      %v933 = vpop.f32.mrb[0].mxu0
      %v934 = vpop.f32.mrb[0].mxu0
      %v935 = vadd.f32 %v287, %v934
      %v936 = vpop.f32.mrb[0].mxu0
      %937 = vmatprep.mubr.bf16.mxu0 0
      %938 = vmatmul.mubr.bf16.gmra.mrb[0].mxu0 %v635
      %v939 = vpop.f32.mrb[0].mxu0
      %v940 = vadd.f32 %v287, %v939
      %v941 = vpop.f32.mrb[0].mxu0
      %v942 = vpop.f32.mrb[0].mxu0
      %v943 = vadd.f32 %v287, %v942
      %v944 = vpop.f32.mrb[0].mxu0
      %945 = vmatprep.mubr.bf16.mxu0 0
      %946 = vmatmul.mubr.bf16.gmra.mrb[0].mxu0 %v638
      %v947 = vpop.f32.mrb[0].mxu0
      %v948 = vadd.f32 %v287, %v947
      %v949 = vpop.f32.mrb[0].mxu0
      %v950 = vpop.f32.mrb[0].mxu0
      %v951 = vadd.f32 %v287, %v950
      %v952 = vpop.f32.mrb[0].mxu0
      %953 = vmatprep.mubr.bf16.mxu0 0
      %954 = vmatmul.mubr.bf16.gmra.mrb[0].mxu0 %v641
      %v955 = vpop.f32.mrb[0].mxu0
      %v956 = vadd.f32 %v287, %v955
      %v957 = vpop.f32.mrb[0].mxu0
      %v958 = vpop.f32.mrb[0].mxu0
      %v959 = vadd.f32 %v287, %v958
      %v960 = vpop.f32.mrb[0].mxu0
      %961 = vmatprep.mubr.bf16.mxu0 0
      %962 = vmatmul.mubr.bf16.gmra.mrb[0].mxu0 %v644
      %v963 = vpop.f32.mrb[0].mxu0
      %v964 = vadd.f32 %v287, %v963
      %v965 = vpop.f32.mrb[0].mxu0
      %v966 = vpop.f32.mrb[0].mxu0
      %v967 = vadd.f32 %v287, %v966
      %v968 = vpop.f32.mrb[0].mxu0
      %969 = vmatprep.mubr.bf16.mxu0 0
      %970 = vmatmul.mubr.bf16.gmra.mrb[0].mxu0 %v647
      %v971 = vpop.f32.mrb[0].mxu0
      %v972 = vadd.f32 %v287, %v971
      %v973 = vpop.f32.mrb[0].mxu0
      %v974 = vpop.f32.mrb[0].mxu0
      %v975 = vadd.f32 %v287, %v974
      %v976 = vpop.f32.mrb[0].mxu0
      %977 = vmatprep.mubr.bf16.mxu0 0
      %978 = vmatmul.mubr.bf16.gmra.mrb[0].mxu0 %v650
      %v979 = vpop.f32.mrb[0].mxu0
      %v980 = vadd.f32 %v287, %v979
      %v981 = vpop.f32.mrb[0].mxu0
      %v982 = vpop.f32.mrb[0].mxu0
      %v983 = vadd.f32 %v287, %v982
      %v984 = vpop.f32.mrb[0].mxu0
      %985 = vmatprep.mubr.bf16.mxu0 0
      %986 = vmatmul.mubr.bf16.gmra.mrb[0].mxu0 %v653
      %v987 = vpop.f32.mrb[0].mxu0
      %v988 = vadd.f32 %v287, %v987
      %v989 = vpop.f32.mrb[0].mxu0
      %v990 = vpop.f32.mrb[0].mxu0
      %v991 = vadd.f32 %v287, %v990
      %v992 = vpop.f32.mrb[0].mxu0
      %993 = vmatprep.mubr.bf16.mxu0 0
      %994 = vmatmul.mubr.bf16.gmra.mrb[0].mxu0 %v656
      %v995 = vpop.f32.mrb[0].mxu0
      %v996 = vadd.f32 %v287, %v995
      %v997 = vpop.f32.mrb[0].mxu0
      %v998 = vpop.f32.mrb[0].mxu0
      %v999 = vadd.f32 %v287, %v998
      %v1000 = vpop.f32.mrb[0].mxu0
      %1001 = vmatprep.mubr.bf16.mxu0 0
      %1002 = vmatmul.mubr.bf16.gmra.mrb[0].mxu0 %v659
      %v1003 = vpop.f32.mrb[0].mxu0
      %v1004 = vadd.f32 %v287, %v1003
      %v1005 = vpop.f32.mrb[0].mxu0
      %v1006 = vpop.f32.mrb[0].mxu0
      %v1007 = vadd.f32 %v287, %v1006
      %v1008 = vpop.f32.mrb[0].mxu0
      %1009 = vmatprep.mubr.bf16.mxu0 0
      %1010 = vmatmul.mubr.bf16.gmra.mrb[0].mxu0 %v662
      %v1011 = vpop.f32.mrb[0].mxu0
      %v1012 = vadd.f32 %v287, %v1011
      %v1013 = vpop.f32.mrb[0].mxu0
      %v1014 = vpop.f32.mrb[0].mxu0
      %v1015 = vadd.f32 %v287, %v1014
      %v1016 = vpop.f32.mrb[0].mxu0
      %1017 = vmatprep.mubr.bf16.mxu0 0
      %1018 = vmatmul.mubr.bf16.gmra.mrb[0].mxu0 %v665
      %v1019 = vpop.f32.mrb[0].mxu0
      %v1020 = vadd.f32 %v287, %v1019
      %v1021 = vpop.f32.mrb[0].mxu0
      %v1022 = vpop.f32.mrb[0].mxu0
      %v1023 = vadd.f32 %v287, %v1022
      %v1024 = vpop.f32.mrb[0].mxu0
      %1025 = vmatprep.mubr.bf16.mxu0 0
      %1026 = vmatmul.mubr.bf16.gmra.mrb[0].mxu0 %v668
      %v1027 = vpop.f32.mrb[0].mxu0
      %v1028 = vadd.f32 %v287, %v1027
      %v1029 = vpop.f32.mrb[0].mxu0
      %v1030 = vpop.f32.mrb[0].mxu0
      %v1031 = vadd.f32 %v287, %v1030
      %v1032 = vpop.f32.mrb[0].mxu0
      %1033 = vmatprep.mubr.bf16.mxu0 0
      %1034 = vmatmul.mubr.bf16.gmra.mrb[0].mxu0 %v671
      %v1035 = vpop.f32.mrb[0].mxu0
      %v1036 = vadd.f32 %v287, %v1035
      %v1037 = vpop.f32.mrb[0].mxu0
      %v1038 = vpop.f32.mrb[0].mxu0
      %v1039 = vadd.f32 %v287, %v1038
      %v1040 = vpop.f32.mrb[0].mxu0
      %1041 = vmatprep.mubr.bf16.mxu0 0
      %1042 = vmatmul.mubr.bf16.gmra.mrb[0].mxu0 %v674
      %v1043 = vpop.f32.mrb[0].mxu0
      %v1044 = vadd.f32 %v287, %v1043
      %v1045 = vpop.f32.mrb[0].mxu0
      %v1046 = vpop.f32.mrb[0].mxu0
      %v1047 = vadd.f32 %v287, %v1046
      %v1048 = vpop.f32.mrb[0].mxu0
      %1049 = vmatprep.mubr.bf16.mxu0 0
      %1050 = vmatmul.mubr.bf16.gmra.mrb[0].mxu0 %v677
      %v1051 = vpop.f32.mrb[0].mxu0
      %v1052 = vadd.f32 %v287, %v1051
      %v1053 = vpop.f32.mrb[0].mxu0
      %v1054 = vpop.f32.mrb[0].mxu0
      %v1055 = vadd.f32 %v287, %v1054
      %v1056 = vpop.f32.mrb[0].mxu0
      %1057 = vmatprep.mubr.bf16.mxu0 0
      %1058 = vmatmul.mubr.bf16.gmra.mrb[0].mxu0 %v680
      %v1059 = vpop.f32.mrb[0].mxu0
      %v1060 = vadd.f32 %v287, %v1059
      %v1061 = vpop.f32.mrb[0].mxu0
      %v1062 = vpop.f32.mrb[0].mxu0
      %v1063 = vadd.f32 %v287, %v1062
      %v1064 = vpop.f32.mrb[0].mxu0
      %1065 = vmatprep.mubr.bf16.mxu0 0
      %1066 = vmatmul.mubr.bf16.gmra.mrb[0].mxu0 %v683
      %v1067 = vpop.f32.mrb[0].mxu0
      %v1068 = vadd.f32 %v287, %v1067
      %v1069 = vpop.f32.mrb[0].mxu0
      %v1070 = vpop.f32.mrb[0].mxu0
      %v1071 = vadd.f32 %v287, %v1070
      %v1072 = vpop.f32.mrb[0].mxu0
      %1073 = vmatprep.mubr.bf16.mxu0 0
      %1074 = vmatmul.mubr.bf16.gmra.mrb[0].mxu0 %v686
      %v1075 = vpop.f32.mrb[0].mxu0
      %v1076 = vadd.f32 %v287, %v1075
      %v1077 = vpop.f32.mrb[0].mxu0
      %v1078 = vpop.f32.mrb[0].mxu0
      %v1079 = vadd.f32 %v287, %v1078
      %v1080 = vpop.f32.mrb[0].mxu0
      %1081 = vmatprep.mubr.bf16.mxu0 0
      %1082 = vmatmul.mubr.bf16.gmra.mrb[0].mxu0 %v689
      %v1083 = vpop.f32.mrb[0].mxu0
      %v1084 = vadd.f32 %v287, %v1083
      %v1085 = vpop.f32.mrb[0].mxu0
      %v1086 = vpop.f32.mrb[0].mxu0
      %v1087 = vadd.f32 %v287, %v1086
      %v1088 = vpop.f32.mrb[0].mxu0
      %1089 = vmatprep.mubr.bf16.mxu0 0
      %1090 = vmatmul.mubr.bf16.gmra.mrb[0].mxu0 %v692
      %v1091 = vpop.f32.mrb[0].mxu0
      %v1092 = vadd.f32 %v287, %v1091
      %v1093 = vpop.f32.mrb[0].mxu0
      %v1094 = vpop.f32.mrb[0].mxu0
      %v1095 = vadd.f32 %v287, %v1094
      %v1096 = vpop.f32.mrb[0].mxu0
      %1097 = vmatprep.mubr.bf16.mxu0 0
      %1098 = vmatmul.mubr.bf16.gmra.mrb[0].mxu0 %v695
      %v1099 = vpop.f32.mrb[0].mxu0
      %v1100 = vadd.f32 %v287, %v1099
      %v1101 = vpop.f32.mrb[0].mxu0
      %v1102 = vpop.f32.mrb[0].mxu0
      %v1103 = vadd.f32 %v287, %v1102
      %v1104 = vpop.f32.mrb[0].mxu0
      %1105 = vmatprep.mubr.bf16.mxu0 0
      %1106 = vmatmul.mubr.bf16.gmra.mrb[0].mxu0 %v698
      %v1107 = vpop.f32.mrb[0].mxu0
      %v1108 = vadd.f32 %v287, %v1107
      %v1109 = vpop.f32.mrb[0].mxu0
      %v1110 = vpop.f32.mrb[0].mxu0
      %v1111 = vadd.f32 %v287, %v1110
      %v1112 = vpop.f32.mrb[0].mxu0
      %1113 = vmatprep.mubr.bf16.mxu0 0
      %1114 = vmatmul.mubr.bf16.gmra.mrb[0].mxu0 %v701
      %v1115 = vpop.f32.mrb[0].mxu0
      %v1116 = vadd.f32 %v287, %v1115
      %v1117 = vpop.f32.mrb[0].mxu0
      %v1118 = vpop.f32.mrb[0].mxu0
      %v1119 = vadd.f32 %v287, %v1118
      %v1120 = vpop.f32.mrb[0].mxu0
      %1121 = vmatprep.mubr.bf16.mxu0 0
      %1122 = vmatmul.mubr.bf16.gmra.mrb[0].mxu0 %v704
      %v1123 = vpop.f32.mrb[0].mxu0
      %v1124 = vadd.f32 %v287, %v1123
      %v1125 = vpop.f32.mrb[0].mxu0
      %v1126 = vpop.f32.mrb[0].mxu0
      %v1127 = vadd.f32 %v287, %v1126
      %v1128 = vpop.f32.mrb[0].mxu0
      %1129 = vmatprep.mubr.bf16.mxu0 0
      %1130 = vmatmul.mubr.bf16.gmra.mrb[0].mxu0 %v707
      %v1131 = vpop.f32.mrb[0].mxu0
      %v1132 = vadd.f32 %v287, %v1131
      %v1133 = vpop.f32.mrb[0].mxu0
      %v1134 = vpop.f32.mrb[0].mxu0
      %v1135 = vadd.f32 %v287, %v1134
      %v1136 = vpop.f32.mrb[0].mxu0
      %1137 = vdwg.mxu0
      %v1138 = vsub.f32 0.0, %v748
      %v1139 = vsub.f32 0.0, %v751
      %v1140 = vsub.f32 0.0, %v756
      %v1141 = vsub.f32 0.0, %v759
      %v1142 = vsub.f32 0.0, %v764
      %v1143 = vsub.f32 0.0, %v767
      %v1144 = vsub.f32 0.0, %v772
      %v1145 = vsub.f32 0.0, %v775
      %v1146 = vsub.f32 0.0, %v780
      %v1147 = vsub.f32 0.0, %v783
      %v1148 = vsub.f32 0.0, %v788
      %v1149 = vsub.f32 0.0, %v791
      %v1150 = vsub.f32 0.0, %v796
      %v1151 = vsub.f32 0.0, %v799
      %v1152 = vsub.f32 0.0, %v804
      %v1153 = vsub.f32 0.0, %v807
      %v1154 = vsub.f32 0.0, %v812
      %v1155 = vsub.f32 0.0, %v815
      %v1156 = vsub.f32 0.0, %v820
      %v1157 = vsub.f32 0.0, %v823
      %v1158 = vsub.f32 0.0, %v828
      %v1159 = vsub.f32 0.0, %v831
      %v1160 = vsub.f32 0.0, %v836
      %v1161 = vsub.f32 0.0, %v839
      %v1162 = vsub.f32 0.0, %v844
      %v1163 = vsub.f32 0.0, %v847
      %v1164 = vsub.f32 0.0, %v852
      %v1165 = vsub.f32 0.0, %v855
      %v1166 = vsub.f32 0.0, %v860
      %v1167 = vsub.f32 0.0, %v863
      %v1168 = vsub.f32 0.0, %v868
      %v1169 = vsub.f32 0.0, %v871
      %v1170 = vsub.f32 0.0, %v876
      %v1171 = vsub.f32 0.0, %v879
      %v1172 = vsub.f32 0.0, %v884
      %v1173 = vsub.f32 0.0, %v887
      %v1174 = vsub.f32 0.0, %v892
      %v1175 = vsub.f32 0.0, %v895
      %v1176 = vsub.f32 0.0, %v900
      %v1177 = vsub.f32 0.0, %v903
      %v1178 = vsub.f32 0.0, %v908
      %v1179 = vsub.f32 0.0, %v911
      %v1180 = vsub.f32 0.0, %v916
      %v1181 = vsub.f32 0.0, %v919
      %v1182 = vsub.f32 0.0, %v924
      %v1183 = vsub.f32 0.0, %v927
      %v1184 = vsub.f32 0.0, %v932
      %v1185 = vsub.f32 0.0, %v935
      %v1186 = vsub.f32 0.0, %v940
      %v1187 = vsub.f32 0.0, %v943
      %v1188 = vsub.f32 0.0, %v948
      %v1189 = vsub.f32 0.0, %v951
      %v1190 = vsub.f32 0.0, %v956
      %v1191 = vsub.f32 0.0, %v959
      %v1192 = vsub.f32 0.0, %v964
      %v1193 = vsub.f32 0.0, %v967
      %v1194 = vsub.f32 0.0, %v972
      %v1195 = vsub.f32 0.0, %v975
      %v1196 = vsub.f32 0.0, %v980
      %v1197 = vsub.f32 0.0, %v983
      %v1198 = vsub.f32 0.0, %v988
      %v1199 = vsub.f32 0.0, %v991
      %v1200 = vsub.f32 0.0, %v996
      %v1201 = vsub.f32 0.0, %v999
      %v1202 = vsub.f32 0.0, %v1004
      %v1203 = vsub.f32 0.0, %v1007
      %v1204 = vsub.f32 0.0, %v1012
      %v1205 = vsub.f32 0.0, %v1015
      %v1206 = vsub.f32 0.0, %v1020
      %v1207 = vsub.f32 0.0, %v1023
      %v1208 = vsub.f32 0.0, %v1028
      %v1209 = vsub.f32 0.0, %v1031
      %v1210 = vsub.f32 0.0, %v1036
      %v1211 = vsub.f32 0.0, %v1039
      %v1212 = vsub.f32 0.0, %v1044
      %v1213 = vsub.f32 0.0, %v1047
      %v1214 = vsub.f32 0.0, %v1052
      %v1215 = vsub.f32 0.0, %v1055
      %v1216 = vsub.f32 0.0, %v1060
      %v1217 = vsub.f32 0.0, %v1063
      %v1218 = vsub.f32 0.0, %v1068
      %v1219 = vsub.f32 0.0, %v1071
      %v1220 = vsub.f32 0.0, %v1076
      %v1221 = vsub.f32 0.0, %v1079
      %v1222 = vsub.f32 0.0, %v1084
      %v1223 = vsub.f32 0.0, %v1087
      %v1224 = vsub.f32 0.0, %v1092
      %v1225 = vsub.f32 0.0, %v1095
      %v1226 = vsub.f32 0.0, %v1100
      %v1227 = vsub.f32 0.0, %v1103
      %v1228 = vsub.f32 0.0, %v1108
      %v1229 = vsub.f32 0.0, %v1111
      %v1230 = vsub.f32 0.0, %v1116
      %v1231 = vsub.f32 0.0, %v1119
      %v1232 = vsub.f32 0.0, %v1124
      %v1233 = vsub.f32 0.0, %v1127
      %v1234 = vsub.f32 0.0, %v1132
      %v1235 = vsub.f32 0.0, %v1135
      %v1236 = vmul.f32 %v1138, 1.442695
      %v1237 = vpow.pop %v1236
      %v1238 = vmul.f32 %v1139, 1.442695
      %v1239 = vpow.pop %v1238
      %v1240 = vmul.f32 %v1140, 1.442695
      %v1241 = vpow.pop %v1240
      %v1242 = vmul.f32 %v1141, 1.442695
      %v1243 = vpow.pop %v1242
      %v1244 = vmul.f32 %v1142, 1.442695
      %v1245 = vpow.pop %v1244
      %v1246 = vmul.f32 %v1143, 1.442695
      %v1247 = vpow.pop %v1246
      %v1248 = vmul.f32 %v1144, 1.442695
      %v1249 = vpow.pop %v1248
      %v1250 = vmul.f32 %v1145, 1.442695
      %v1251 = vpow.pop %v1250
      %v1252 = vmul.f32 %v1146, 1.442695
      %v1253 = vpow.pop %v1252
      %v1254 = vmul.f32 %v1147, 1.442695
      %v1255 = vpow.pop %v1254
      %v1256 = vmul.f32 %v1148, 1.442695
      %v1257 = vpow.pop %v1256
      %v1258 = vmul.f32 %v1149, 1.442695
      %v1259 = vpow.pop %v1258
      %v1260 = vmul.f32 %v1150, 1.442695
      %v1261 = vpow.pop %v1260
      %v1262 = vmul.f32 %v1151, 1.442695
      %v1263 = vpow.pop %v1262
      %v1264 = vmul.f32 %v1152, 1.442695
      %v1265 = vpow.pop %v1264
      %v1266 = vmul.f32 %v1153, 1.442695
      %v1267 = vpow.pop %v1266
      %v1268 = vmul.f32 %v1154, 1.442695
      %v1269 = vpow.pop %v1268
      %v1270 = vmul.f32 %v1155, 1.442695
      %v1271 = vpow.pop %v1270
      %v1272 = vmul.f32 %v1156, 1.442695
      %v1273 = vpow.pop %v1272
      %v1274 = vmul.f32 %v1157, 1.442695
      %v1275 = vpow.pop %v1274
      %v1276 = vmul.f32 %v1158, 1.442695
      %v1277 = vpow.pop %v1276
      %v1278 = vmul.f32 %v1159, 1.442695
      %v1279 = vpow.pop %v1278
      %v1280 = vmul.f32 %v1160, 1.442695
      %v1281 = vpow.pop %v1280
      %v1282 = vmul.f32 %v1161, 1.442695
      %v1283 = vpow.pop %v1282
      %v1284 = vmul.f32 %v1162, 1.442695
      %v1285 = vpow.pop %v1284
      %v1286 = vmul.f32 %v1163, 1.442695
      %v1287 = vpow.pop %v1286
      %v1288 = vmul.f32 %v1164, 1.442695
      %v1289 = vpow.pop %v1288
      %v1290 = vmul.f32 %v1165, 1.442695
      %v1291 = vpow.pop %v1290
      %v1292 = vmul.f32 %v1166, 1.442695
      %v1293 = vpow.pop %v1292
      %v1294 = vmul.f32 %v1167, 1.442695
      %v1295 = vpow.pop %v1294
      %v1296 = vmul.f32 %v1168, 1.442695
      %v1297 = vpow.pop %v1296
      %v1298 = vmul.f32 %v1169, 1.442695
      %v1299 = vpow.pop %v1298
      %v1300 = vmul.f32 %v1170, 1.442695
      %v1301 = vpow.pop %v1300
      %v1302 = vmul.f32 %v1171, 1.442695
      %v1303 = vpow.pop %v1302
      %v1304 = vmul.f32 %v1172, 1.442695
      %v1305 = vpow.pop %v1304
      %v1306 = vmul.f32 %v1173, 1.442695
      %v1307 = vpow.pop %v1306
      %v1308 = vmul.f32 %v1174, 1.442695
      %v1309 = vpow.pop %v1308
      %v1310 = vmul.f32 %v1175, 1.442695
      %v1311 = vpow.pop %v1310
      %v1312 = vmul.f32 %v1176, 1.442695
      %v1313 = vpow.pop %v1312
      %v1314 = vmul.f32 %v1177, 1.442695
      %v1315 = vpow.pop %v1314
      %v1316 = vmul.f32 %v1178, 1.442695
      %v1317 = vpow.pop %v1316
      %v1318 = vmul.f32 %v1179, 1.442695
      %v1319 = vpow.pop %v1318
      %v1320 = vmul.f32 %v1180, 1.442695
      %v1321 = vpow.pop %v1320
      %v1322 = vmul.f32 %v1181, 1.442695
      %v1323 = vpow.pop %v1322
      %v1324 = vmul.f32 %v1182, 1.442695
      %v1325 = vpow.pop %v1324
      %v1326 = vmul.f32 %v1183, 1.442695
      %v1327 = vpow.pop %v1326
      %v1328 = vmul.f32 %v1184, 1.442695
      %v1329 = vpow.pop %v1328
      %v1330 = vmul.f32 %v1185, 1.442695
      %v1331 = vpow.pop %v1330
      %v1332 = vmul.f32 %v1186, 1.442695
      %v1333 = vpow.pop %v1332
      %v1334 = vmul.f32 %v1187, 1.442695
      %v1335 = vpow.pop %v1334
      %v1336 = vmul.f32 %v1188, 1.442695
      %v1337 = vpow.pop %v1336
      %v1338 = vmul.f32 %v1189, 1.442695
      %v1339 = vpow.pop %v1338
      %v1340 = vmul.f32 %v1190, 1.442695
      %v1341 = vpow.pop %v1340
      %v1342 = vmul.f32 %v1191, 1.442695
      %v1343 = vpow.pop %v1342
      %v1344 = vmul.f32 %v1192, 1.442695
      %v1345 = vpow.pop %v1344
      %v1346 = vmul.f32 %v1193, 1.442695
      %v1347 = vpow.pop %v1346
      %v1348 = vmul.f32 %v1194, 1.442695
      %v1349 = vpow.pop %v1348
      %v1350 = vmul.f32 %v1195, 1.442695
      %v1351 = vpow.pop %v1350
      %v1352 = vmul.f32 %v1196, 1.442695
      %v1353 = vpow.pop %v1352
      %v1354 = vmul.f32 %v1197, 1.442695
      %v1355 = vpow.pop %v1354
      %v1356 = vmul.f32 %v1198, 1.442695
      %v1357 = vpow.pop %v1356
      %v1358 = vmul.f32 %v1199, 1.442695
      %v1359 = vpow.pop %v1358
      %v1360 = vmul.f32 %v1200, 1.442695
      %v1361 = vpow.pop %v1360
      %v1362 = vmul.f32 %v1201, 1.442695
      %v1363 = vpow.pop %v1362
      %v1364 = vmul.f32 %v1202, 1.442695
      %v1365 = vpow.pop %v1364
      %v1366 = vmul.f32 %v1203, 1.442695
      %v1367 = vpow.pop %v1366
      %v1368 = vmul.f32 %v1204, 1.442695
      %v1369 = vpow.pop %v1368
      %v1370 = vmul.f32 %v1205, 1.442695
      %v1371 = vpow.pop %v1370
      %v1372 = vmul.f32 %v1206, 1.442695
      %v1373 = vpow.pop %v1372
      %v1374 = vmul.f32 %v1207, 1.442695
      %v1375 = vpow.pop %v1374
      %v1376 = vmul.f32 %v1208, 1.442695
      %v1377 = vpow.pop %v1376
      %v1378 = vmul.f32 %v1209, 1.442695
      %v1379 = vpow.pop %v1378
      %v1380 = vmul.f32 %v1210, 1.442695
      %v1381 = vpow.pop %v1380
      %v1382 = vmul.f32 %v1211, 1.442695
      %v1383 = vpow.pop %v1382
      %v1384 = vmul.f32 %v1212, 1.442695
      %v1385 = vpow.pop %v1384
      %v1386 = vmul.f32 %v1213, 1.442695
      %v1387 = vpow.pop %v1386
      %v1388 = vmul.f32 %v1214, 1.442695
      %v1389 = vpow.pop %v1388
      %v1390 = vmul.f32 %v1215, 1.442695
      %v1391 = vpow.pop %v1390
      %v1392 = vmul.f32 %v1216, 1.442695
      %v1393 = vpow.pop %v1392
      %v1394 = vmul.f32 %v1217, 1.442695
      %v1395 = vpow.pop %v1394
      %v1396 = vmul.f32 %v1218, 1.442695
      %v1397 = vpow.pop %v1396
      %v1398 = vmul.f32 %v1219, 1.442695
      %v1399 = vpow.pop %v1398
      %v1400 = vmul.f32 %v1220, 1.442695
      %v1401 = vpow.pop %v1400
      %v1402 = vmul.f32 %v1221, 1.442695
      %v1403 = vpow.pop %v1402
      %v1404 = vmul.f32 %v1222, 1.442695
      %v1405 = vpow.pop %v1404
      %v1406 = vmul.f32 %v1223, 1.442695
      %v1407 = vpow.pop %v1406
      %v1408 = vmul.f32 %v1224, 1.442695
      %v1409 = vpow.pop %v1408
      %v1410 = vmul.f32 %v1225, 1.442695
      %v1411 = vpow.pop %v1410
      %v1412 = vmul.f32 %v1226, 1.442695
      %v1413 = vpow.pop %v1412
      %v1414 = vmul.f32 %v1227, 1.442695
      %v1415 = vpow.pop %v1414
      %v1416 = vmul.f32 %v1228, 1.442695
      %v1417 = vpow.pop %v1416
      %v1418 = vmul.f32 %v1229, 1.442695
      %v1419 = vpow.pop %v1418
      %v1420 = vmul.f32 %v1230, 1.442695
      %v1421 = vpow.pop %v1420
      %v1422 = vmul.f32 %v1231, 1.442695
      %v1423 = vpow.pop %v1422
      %v1424 = vmul.f32 %v1232, 1.442695
      %v1425 = vpow.pop %v1424
      %v1426 = vmul.f32 %v1233, 1.442695
      %v1427 = vpow.pop %v1426
      %v1428 = vmul.f32 %v1234, 1.442695
      %v1429 = vpow.pop %v1428
      %v1430 = vmul.f32 %v1235, 1.442695
      %v1431 = vpow.pop %v1430
      %v1432 = vadd.f32 %v1237, 1.0
      %v1433 = vadd.f32 %v1239, 1.0
      %v1434 = vadd.f32 %v1241, 1.0
      %v1435 = vadd.f32 %v1243, 1.0
      %v1436 = vadd.f32 %v1245, 1.0
      %v1437 = vadd.f32 %v1247, 1.0
      %v1438 = vadd.f32 %v1249, 1.0
      %v1439 = vadd.f32 %v1251, 1.0
      %v1440 = vadd.f32 %v1253, 1.0
      %v1441 = vadd.f32 %v1255, 1.0
      %v1442 = vadd.f32 %v1257, 1.0
      %v1443 = vadd.f32 %v1259, 1.0
      %v1444 = vadd.f32 %v1261, 1.0
      %v1445 = vadd.f32 %v1263, 1.0
      %v1446 = vadd.f32 %v1265, 1.0
      %v1447 = vadd.f32 %v1267, 1.0
      %v1448 = vadd.f32 %v1269, 1.0
      %v1449 = vadd.f32 %v1271, 1.0
      %v1450 = vadd.f32 %v1273, 1.0
      %v1451 = vadd.f32 %v1275, 1.0
      %v1452 = vadd.f32 %v1277, 1.0
      %v1453 = vadd.f32 %v1279, 1.0
      %v1454 = vadd.f32 %v1281, 1.0
      %v1455 = vadd.f32 %v1283, 1.0
      %v1456 = vadd.f32 %v1285, 1.0
      %v1457 = vadd.f32 %v1287, 1.0
      %v1458 = vadd.f32 %v1289, 1.0
      %v1459 = vadd.f32 %v1291, 1.0
      %v1460 = vadd.f32 %v1293, 1.0
      %v1461 = vadd.f32 %v1295, 1.0
      %v1462 = vadd.f32 %v1297, 1.0
      %v1463 = vadd.f32 %v1299, 1.0
      %v1464 = vadd.f32 %v1301, 1.0
      %v1465 = vadd.f32 %v1303, 1.0
      %v1466 = vadd.f32 %v1305, 1.0
      %v1467 = vadd.f32 %v1307, 1.0
      %v1468 = vadd.f32 %v1309, 1.0
      %v1469 = vadd.f32 %v1311, 1.0
      %v1470 = vadd.f32 %v1313, 1.0
      %v1471 = vadd.f32 %v1315, 1.0
      %v1472 = vadd.f32 %v1317, 1.0
      %v1473 = vadd.f32 %v1319, 1.0
      %v1474 = vadd.f32 %v1321, 1.0
      %v1475 = vadd.f32 %v1323, 1.0
      %v1476 = vadd.f32 %v1325, 1.0
      %v1477 = vadd.f32 %v1327, 1.0
      %v1478 = vadd.f32 %v1329, 1.0
      %v1479 = vadd.f32 %v1331, 1.0
      %v1480 = vadd.f32 %v1333, 1.0
      %v1481 = vadd.f32 %v1335, 1.0
      %v1482 = vadd.f32 %v1337, 1.0
      %v1483 = vadd.f32 %v1339, 1.0
      %v1484 = vadd.f32 %v1341, 1.0
      %v1485 = vadd.f32 %v1343, 1.0
      %v1486 = vadd.f32 %v1345, 1.0
      %v1487 = vadd.f32 %v1347, 1.0
      %v1488 = vadd.f32 %v1349, 1.0
      %v1489 = vadd.f32 %v1351, 1.0
      %v1490 = vadd.f32 %v1353, 1.0
      %v1491 = vadd.f32 %v1355, 1.0
      %v1492 = vadd.f32 %v1357, 1.0
      %v1493 = vadd.f32 %v1359, 1.0
      %v1494 = vadd.f32 %v1361, 1.0
      %v1495 = vadd.f32 %v1363, 1.0
      %v1496 = vadd.f32 %v1365, 1.0
      %v1497 = vadd.f32 %v1367, 1.0
      %v1498 = vadd.f32 %v1369, 1.0
      %v1499 = vadd.f32 %v1371, 1.0
      %v1500 = vadd.f32 %v1373, 1.0
      %v1501 = vadd.f32 %v1375, 1.0
      %v1502 = vadd.f32 %v1377, 1.0
      %v1503 = vadd.f32 %v1379, 1.0
      %v1504 = vadd.f32 %v1381, 1.0
      %v1505 = vadd.f32 %v1383, 1.0
      %v1506 = vadd.f32 %v1385, 1.0
      %v1507 = vadd.f32 %v1387, 1.0
      %v1508 = vadd.f32 %v1389, 1.0
      %v1509 = vadd.f32 %v1391, 1.0
      %v1510 = vadd.f32 %v1393, 1.0
      %v1511 = vadd.f32 %v1395, 1.0
      %v1512 = vadd.f32 %v1397, 1.0
      %v1513 = vadd.f32 %v1399, 1.0
      %v1514 = vadd.f32 %v1401, 1.0
      %v1515 = vadd.f32 %v1403, 1.0
      %v1516 = vadd.f32 %v1405, 1.0
      %v1517 = vadd.f32 %v1407, 1.0
      %v1518 = vadd.f32 %v1409, 1.0
      %v1519 = vadd.f32 %v1411, 1.0
      %v1520 = vadd.f32 %v1413, 1.0
      %v1521 = vadd.f32 %v1415, 1.0
      %v1522 = vadd.f32 %v1417, 1.0
      %v1523 = vadd.f32 %v1419, 1.0
      %v1524 = vadd.f32 %v1421, 1.0
      %v1525 = vadd.f32 %v1423, 1.0
      %v1526 = vadd.f32 %v1425, 1.0
      %v1527 = vadd.f32 %v1427, 1.0
      %v1528 = vadd.f32 %v1429, 1.0
      %v1529 = vadd.f32 %v1431, 1.0
      %v1530 = vrcp.pop %v1432
      %v1531 = vmul.f32 1.0, %v1530
      %v1532 = vrcp.pop %v1433
      %v1533 = vmul.f32 1.0, %v1532
      %v1534 = vrcp.pop %v1434
      %v1535 = vmul.f32 1.0, %v1534
      %v1536 = vrcp.pop %v1435
      %v1537 = vmul.f32 1.0, %v1536
      %v1538 = vrcp.pop %v1436
      %v1539 = vmul.f32 1.0, %v1538
      %v1540 = vrcp.pop %v1437
      %v1541 = vmul.f32 1.0, %v1540
      %v1542 = vrcp.pop %v1438
      %v1543 = vmul.f32 1.0, %v1542
      %v1544 = vrcp.pop %v1439
      %v1545 = vmul.f32 1.0, %v1544
      %v1546 = vrcp.pop %v1440
      %v1547 = vmul.f32 1.0, %v1546
      %v1548 = vrcp.pop %v1441
      %v1549 = vmul.f32 1.0, %v1548
      %v1550 = vrcp.pop %v1442
      %v1551 = vmul.f32 1.0, %v1550
      %v1552 = vrcp.pop %v1443
      %v1553 = vmul.f32 1.0, %v1552
      %v1554 = vrcp.pop %v1444
      %v1555 = vmul.f32 1.0, %v1554
      %v1556 = vrcp.pop %v1445
      %v1557 = vmul.f32 1.0, %v1556
      %v1558 = vrcp.pop %v1446
      %v1559 = vmul.f32 1.0, %v1558
      %v1560 = vrcp.pop %v1447
      %v1561 = vmul.f32 1.0, %v1560
      %v1562 = vrcp.pop %v1448
      %v1563 = vmul.f32 1.0, %v1562
      %v1564 = vrcp.pop %v1449
      %v1565 = vmul.f32 1.0, %v1564
      %v1566 = vrcp.pop %v1450
      %v1567 = vmul.f32 1.0, %v1566
      %v1568 = vrcp.pop %v1451
      %v1569 = vmul.f32 1.0, %v1568
      %v1570 = vrcp.pop %v1452
      %v1571 = vmul.f32 1.0, %v1570
      %v1572 = vrcp.pop %v1453
      %v1573 = vmul.f32 1.0, %v1572
      %v1574 = vrcp.pop %v1454
      %v1575 = vmul.f32 1.0, %v1574
      %v1576 = vrcp.pop %v1455
      %v1577 = vmul.f32 1.0, %v1576
      %v1578 = vrcp.pop %v1456
      %v1579 = vmul.f32 1.0, %v1578
      %v1580 = vrcp.pop %v1457
      %v1581 = vmul.f32 1.0, %v1580
      %v1582 = vrcp.pop %v1458
      %v1583 = vmul.f32 1.0, %v1582
      %v1584 = vrcp.pop %v1459
      %v1585 = vmul.f32 1.0, %v1584
      %v1586 = vrcp.pop %v1460
      %v1587 = vmul.f32 1.0, %v1586
      %v1588 = vrcp.pop %v1461
      %v1589 = vmul.f32 1.0, %v1588
      %v1590 = vrcp.pop %v1462
      %v1591 = vmul.f32 1.0, %v1590
      %v1592 = vrcp.pop %v1463
      %v1593 = vmul.f32 1.0, %v1592
      %v1594 = vrcp.pop %v1464
      %v1595 = vmul.f32 1.0, %v1594
      %v1596 = vrcp.pop %v1465
      %v1597 = vmul.f32 1.0, %v1596
      %v1598 = vrcp.pop %v1466
      %v1599 = vmul.f32 1.0, %v1598
      %v1600 = vrcp.pop %v1467
      %v1601 = vmul.f32 1.0, %v1600
      %v1602 = vrcp.pop %v1468
      %v1603 = vmul.f32 1.0, %v1602
      %v1604 = vrcp.pop %v1469
      %v1605 = vmul.f32 1.0, %v1604
      %v1606 = vrcp.pop %v1470
      %v1607 = vmul.f32 1.0, %v1606
      %v1608 = vrcp.pop %v1471
      %v1609 = vmul.f32 1.0, %v1608
      %v1610 = vrcp.pop %v1472
      %v1611 = vmul.f32 1.0, %v1610
      %v1612 = vrcp.pop %v1473
      %v1613 = vmul.f32 1.0, %v1612
      %v1614 = vrcp.pop %v1474
      %v1615 = vmul.f32 1.0, %v1614
      %v1616 = vrcp.pop %v1475
      %v1617 = vmul.f32 1.0, %v1616
      %v1618 = vrcp.pop %v1476
      %v1619 = vmul.f32 1.0, %v1618
      %v1620 = vrcp.pop %v1477
      %v1621 = vmul.f32 1.0, %v1620
      %v1622 = vrcp.pop %v1478
      %v1623 = vmul.f32 1.0, %v1622
      %v1624 = vrcp.pop %v1479
      %v1625 = vmul.f32 1.0, %v1624
      %v1626 = vrcp.pop %v1480
      %v1627 = vmul.f32 1.0, %v1626
      %v1628 = vrcp.pop %v1481
      %v1629 = vmul.f32 1.0, %v1628
      %v1630 = vrcp.pop %v1482
      %v1631 = vmul.f32 1.0, %v1630
      %v1632 = vrcp.pop %v1483
      %v1633 = vmul.f32 1.0, %v1632
      %v1634 = vrcp.pop %v1484
      %v1635 = vmul.f32 1.0, %v1634
      %v1636 = vrcp.pop %v1485
      %v1637 = vmul.f32 1.0, %v1636
      %v1638 = vrcp.pop %v1486
      %v1639 = vmul.f32 1.0, %v1638
      %v1640 = vrcp.pop %v1487
      %v1641 = vmul.f32 1.0, %v1640
      %v1642 = vrcp.pop %v1488
      %v1643 = vmul.f32 1.0, %v1642
      %v1644 = vrcp.pop %v1489
      %v1645 = vmul.f32 1.0, %v1644
      %v1646 = vrcp.pop %v1490
      %v1647 = vmul.f32 1.0, %v1646
      %v1648 = vrcp.pop %v1491
      %v1649 = vmul.f32 1.0, %v1648
      %v1650 = vrcp.pop %v1492
      %v1651 = vmul.f32 1.0, %v1650
      %v1652 = vrcp.pop %v1493
      %v1653 = vmul.f32 1.0, %v1652
      %v1654 = vrcp.pop %v1494
      %v1655 = vmul.f32 1.0, %v1654
      %v1656 = vrcp.pop %v1495
      %v1657 = vmul.f32 1.0, %v1656
      %v1658 = vrcp.pop %v1496
      %v1659 = vmul.f32 1.0, %v1658
      %v1660 = vrcp.pop %v1497
      %v1661 = vmul.f32 1.0, %v1660
      %v1662 = vrcp.pop %v1498
      %v1663 = vmul.f32 1.0, %v1662
      %v1664 = vrcp.pop %v1499
      %v1665 = vmul.f32 1.0, %v1664
      %v1666 = vrcp.pop %v1500
      %v1667 = vmul.f32 1.0, %v1666
      %v1668 = vrcp.pop %v1501
      %v1669 = vmul.f32 1.0, %v1668
      %v1670 = vrcp.pop %v1502
      %v1671 = vmul.f32 1.0, %v1670
      %v1672 = vrcp.pop %v1503
      %v1673 = vmul.f32 1.0, %v1672
      %v1674 = vrcp.pop %v1504
      %v1675 = vmul.f32 1.0, %v1674
      %v1676 = vrcp.pop %v1505
      %v1677 = vmul.f32 1.0, %v1676
      %v1678 = vrcp.pop %v1506
      %v1679 = vmul.f32 1.0, %v1678
      %v1680 = vrcp.pop %v1507
      %v1681 = vmul.f32 1.0, %v1680
      %v1682 = vrcp.pop %v1508
      %v1683 = vmul.f32 1.0, %v1682
      %v1684 = vrcp.pop %v1509
      %v1685 = vmul.f32 1.0, %v1684
      %v1686 = vrcp.pop %v1510
      %v1687 = vmul.f32 1.0, %v1686
      %v1688 = vrcp.pop %v1511
      %v1689 = vmul.f32 1.0, %v1688
      %v1690 = vrcp.pop %v1512
      %v1691 = vmul.f32 1.0, %v1690
      %v1692 = vrcp.pop %v1513
      %v1693 = vmul.f32 1.0, %v1692
      %v1694 = vrcp.pop %v1514
      %v1695 = vmul.f32 1.0, %v1694
      %v1696 = vrcp.pop %v1515
      %v1697 = vmul.f32 1.0, %v1696
      %v1698 = vrcp.pop %v1516
      %v1699 = vmul.f32 1.0, %v1698
      %v1700 = vrcp.pop %v1517
      %v1701 = vmul.f32 1.0, %v1700
      %v1702 = vrcp.pop %v1518
      %v1703 = vmul.f32 1.0, %v1702
      %v1704 = vrcp.pop %v1519
      %v1705 = vmul.f32 1.0, %v1704
      %v1706 = vrcp.pop %v1520
      %v1707 = vmul.f32 1.0, %v1706
      %v1708 = vrcp.pop %v1521
      %v1709 = vmul.f32 1.0, %v1708
      %v1710 = vrcp.pop %v1522
      %v1711 = vmul.f32 1.0, %v1710
      %v1712 = vrcp.pop %v1523
      %v1713 = vmul.f32 1.0, %v1712
      %v1714 = vrcp.pop %v1524
      %v1715 = vmul.f32 1.0, %v1714
      %v1716 = vrcp.pop %v1525
      %v1717 = vmul.f32 1.0, %v1716
      %v1718 = vrcp.pop %v1526
      %v1719 = vmul.f32 1.0, %v1718
      %v1720 = vrcp.pop %v1527
      %v1721 = vmul.f32 1.0, %v1720
      %v1722 = vrcp.pop %v1528
      %v1723 = vmul.f32 1.0, %v1722
      %v1724 = vrcp.pop %v1529
      %v1725 = vmul.f32 1.0, %v1724
      %vm1726 = vcmask 23552
      %1727 = vst.msk [vmem:[%s172] sm:$0xff] %vm1726, %v1531
      %1728 = vst.msk [vmem:[%s172 + $0x8] sm:$0xff] %vm1726, %v1533
      %1729 = vst.msk [vmem:[%s172 + $0x10] sm:$0xff] %vm1726, %v1535
      %1730 = vst.msk [vmem:[%s172 + $0x18] sm:$0xff] %vm1726, %v1537
      %1731 = vst.msk [vmem:[%s172 + $0x20] sm:$0xff] %vm1726, %v1539
      %1732 = vst.msk [vmem:[%s172 + $0x28] sm:$0xff] %vm1726, %v1541
      %1733 = vst.msk [vmem:[%s172 + $0x30] sm:$0xff] %vm1726, %v1543
      %1734 = vst.msk [vmem:[%s172 + $0x38] sm:$0xff] %vm1726, %v1545
      %1735 = vst.msk [vmem:[%s172 + $0x40] sm:$0xff] %vm1726, %v1547
      %1736 = vst.msk [vmem:[%s172 + $0x48] sm:$0xff] %vm1726, %v1549
      %1737 = vst.msk [vmem:[%s172 + $0x50] sm:$0xff] %vm1726, %v1551
      %1738 = vst.msk [vmem:[%s172 + $0x58] sm:$0xff] %vm1726, %v1553
      %1739 = vst.msk [vmem:[%s172 + $0x60] sm:$0xff] %vm1726, %v1555
      %1740 = vst.msk [vmem:[%s172 + $0x68] sm:$0xff] %vm1726, %v1557
      %1741 = vst.msk [vmem:[%s172 + $0x70] sm:$0xff] %vm1726, %v1559
      %1742 = vst.msk [vmem:[%s172 + $0x78] sm:$0xff] %vm1726, %v1561
      %1743 = vst.msk [vmem:[%s172 + $0x80] sm:$0xff] %vm1726, %v1563
      %1744 = vst.msk [vmem:[%s172 + $0x88] sm:$0xff] %vm1726, %v1565
      %1745 = vst.msk [vmem:[%s172 + $0x90] sm:$0xff] %vm1726, %v1567
      %1746 = vst.msk [vmem:[%s172 + $0x98] sm:$0xff] %vm1726, %v1569
      %1747 = vst.msk [vmem:[%s172 + $0xa0] sm:$0xff] %vm1726, %v1571
      %1748 = vst.msk [vmem:[%s172 + $0xa8] sm:$0xff] %vm1726, %v1573
      %1749 = vst.msk [vmem:[%s172 + $0xb0] sm:$0xff] %vm1726, %v1575
      %1750 = vst.msk [vmem:[%s172 + $0xb8] sm:$0xff] %vm1726, %v1577
      %1751 = vst.msk [vmem:[%s172 + $0xc0] sm:$0xff] %vm1726, %v1579
      %1752 = vst.msk [vmem:[%s172 + $0xc8] sm:$0xff] %vm1726, %v1581
      %1753 = vst.msk [vmem:[%s172 + $0xd0] sm:$0xff] %vm1726, %v1583
      %1754 = vst.msk [vmem:[%s172 + $0xd8] sm:$0xff] %vm1726, %v1585
      %1755 = vst.msk [vmem:[%s172 + $0xe0] sm:$0xff] %vm1726, %v1587
      %1756 = vst.msk [vmem:[%s172 + $0xe8] sm:$0xff] %vm1726, %v1589
      %1757 = vst.msk [vmem:[%s172 + $0xf0] sm:$0xff] %vm1726, %v1591
      %1758 = vst.msk [vmem:[%s172 + $0xf8] sm:$0xff] %vm1726, %v1593
      %1759 = vst.msk [vmem:[%s172 + $0x100] sm:$0xff] %vm1726, %v1595
      %1760 = vst.msk [vmem:[%s172 + $0x108] sm:$0xff] %vm1726, %v1597
      %1761 = vst.msk [vmem:[%s172 + $0x110] sm:$0xff] %vm1726, %v1599
      %1762 = vst.msk [vmem:[%s172 + $0x118] sm:$0xff] %vm1726, %v1601
      %1763 = vst.msk [vmem:[%s172 + $0x120] sm:$0xff] %vm1726, %v1603
      %1764 = vst.msk [vmem:[%s172 + $0x128] sm:$0xff] %vm1726, %v1605
      %1765 = vst.msk [vmem:[%s172 + $0x130] sm:$0xff] %vm1726, %v1607
      %1766 = vst.msk [vmem:[%s172 + $0x138] sm:$0xff] %vm1726, %v1609
      %1767 = vst.msk [vmem:[%s172 + $0x140] sm:$0xff] %vm1726, %v1611
      %1768 = vst.msk [vmem:[%s172 + $0x148] sm:$0xff] %vm1726, %v1613
      %1769 = vst.msk [vmem:[%s172 + $0x150] sm:$0xff] %vm1726, %v1615
      %1770 = vst.msk [vmem:[%s172 + $0x158] sm:$0xff] %vm1726, %v1617
      %1771 = vst.msk [vmem:[%s172 + $0x160] sm:$0xff] %vm1726, %v1619
      %1772 = vst.msk [vmem:[%s172 + $0x168] sm:$0xff] %vm1726, %v1621
      %1773 = vst.msk [vmem:[%s172 + $0x170] sm:$0xff] %vm1726, %v1623
      %1774 = vst.msk [vmem:[%s172 + $0x178] sm:$0xff] %vm1726, %v1625
      %1775 = vst.msk [vmem:[%s172 + $0x180] sm:$0xff] %vm1726, %v1627
      %1776 = vst.msk [vmem:[%s172 + $0x188] sm:$0xff] %vm1726, %v1629
      %1777 = vst.msk [vmem:[%s172 + $0x190] sm:$0xff] %vm1726, %v1631
      %1778 = vst.msk [vmem:[%s172 + $0x198] sm:$0xff] %vm1726, %v1633
      %1779 = vst.msk [vmem:[%s172 + $0x1a0] sm:$0xff] %vm1726, %v1635
      %1780 = vst.msk [vmem:[%s172 + $0x1a8] sm:$0xff] %vm1726, %v1637
      %1781 = vst.msk [vmem:[%s172 + $0x1b0] sm:$0xff] %vm1726, %v1639
      %1782 = vst.msk [vmem:[%s172 + $0x1b8] sm:$0xff] %vm1726, %v1641
      %1783 = vst.msk [vmem:[%s172 + $0x1c0] sm:$0xff] %vm1726, %v1643
      %1784 = vst.msk [vmem:[%s172 + $0x1c8] sm:$0xff] %vm1726, %v1645
      %1785 = vst.msk [vmem:[%s172 + $0x1d0] sm:$0xff] %vm1726, %v1647
      %1786 = vst.msk [vmem:[%s172 + $0x1d8] sm:$0xff] %vm1726, %v1649
      %1787 = vst.msk [vmem:[%s172 + $0x1e0] sm:$0xff] %vm1726, %v1651
      %1788 = vst.msk [vmem:[%s172 + $0x1e8] sm:$0xff] %vm1726, %v1653
      %1789 = vst.msk [vmem:[%s172 + $0x1f0] sm:$0xff] %vm1726, %v1655
      %1790 = vst.msk [vmem:[%s172 + $0x1f8] sm:$0xff] %vm1726, %v1657
      %1791 = vst.msk [vmem:[%s172 + $0x200] sm:$0xff] %vm1726, %v1659
      %1792 = vst.msk [vmem:[%s172 + $0x208] sm:$0xff] %vm1726, %v1661
      %1793 = vst.msk [vmem:[%s172 + $0x210] sm:$0xff] %vm1726, %v1663
      %1794 = vst.msk [vmem:[%s172 + $0x218] sm:$0xff] %vm1726, %v1665
      %1795 = vst.msk [vmem:[%s172 + $0x220] sm:$0xff] %vm1726, %v1667
      %1796 = vst.msk [vmem:[%s172 + $0x228] sm:$0xff] %vm1726, %v1669
      %1797 = vst.msk [vmem:[%s172 + $0x230] sm:$0xff] %vm1726, %v1671
      %1798 = vst.msk [vmem:[%s172 + $0x238] sm:$0xff] %vm1726, %v1673
      %1799 = vst.msk [vmem:[%s172 + $0x240] sm:$0xff] %vm1726, %v1675
      %1800 = vst.msk [vmem:[%s172 + $0x248] sm:$0xff] %vm1726, %v1677
      %1801 = vst.msk [vmem:[%s172 + $0x250] sm:$0xff] %vm1726, %v1679
      %1802 = vst.msk [vmem:[%s172 + $0x258] sm:$0xff] %vm1726, %v1681
      %1803 = vst.msk [vmem:[%s172 + $0x260] sm:$0xff] %vm1726, %v1683
      %1804 = vst.msk [vmem:[%s172 + $0x268] sm:$0xff] %vm1726, %v1685
      %1805 = vst.msk [vmem:[%s172 + $0x270] sm:$0xff] %vm1726, %v1687
      %1806 = vst.msk [vmem:[%s172 + $0x278] sm:$0xff] %vm1726, %v1689
      %1807 = vst.msk [vmem:[%s172 + $0x280] sm:$0xff] %vm1726, %v1691
      %1808 = vst.msk [vmem:[%s172 + $0x288] sm:$0xff] %vm1726, %v1693
      %1809 = vst.msk [vmem:[%s172 + $0x290] sm:$0xff] %vm1726, %v1695
      %1810 = vst.msk [vmem:[%s172 + $0x298] sm:$0xff] %vm1726, %v1697
      %1811 = vst.msk [vmem:[%s172 + $0x2a0] sm:$0xff] %vm1726, %v1699
      %1812 = vst.msk [vmem:[%s172 + $0x2a8] sm:$0xff] %vm1726, %v1701
      %1813 = vst.msk [vmem:[%s172 + $0x2b0] sm:$0xff] %vm1726, %v1703
      %1814 = vst.msk [vmem:[%s172 + $0x2b8] sm:$0xff] %vm1726, %v1705
      %1815 = vst.msk [vmem:[%s172 + $0x2c0] sm:$0xff] %vm1726, %v1707
      %1816 = vst.msk [vmem:[%s172 + $0x2c8] sm:$0xff] %vm1726, %v1709
      %1817 = vst.msk [vmem:[%s172 + $0x2d0] sm:$0xff] %vm1726, %v1711
      %1818 = vst.msk [vmem:[%s172 + $0x2d8] sm:$0xff] %vm1726, %v1713
      %1819 = vst.msk [vmem:[%s172 + $0x2e0] sm:$0xff] %vm1726, %v1715
      %1820 = vst.msk [vmem:[%s172 + $0x2e8] sm:$0xff] %vm1726, %v1717
      %1821 = vst.msk [vmem:[%s172 + $0x2f0] sm:$0xff] %vm1726, %v1719
      %1822 = vst.msk [vmem:[%s172 + $0x2f8] sm:$0xff] %vm1726, %v1721
      %1823 = vst.msk [vmem:[%s172 + $0x300] sm:$0xff] %vm1726, %v1723
      %1824 = vst.msk [vmem:[%s172 + $0x308] sm:$0xff] %vm1726, %v1725
      %s1825 = smul.u32 98, %s14
      %p1826 = scmp.lt.s32.totalorder %s1825, 195
      %s1827 = scalar_select %p1826, %s1825, 195
      %s1828 = smul.addr %s1827, 8
      %s1829 = scalar_lea.vmem %s3, %s1828
      // Predicated region
      $region33: #{vae_forward.11} parent=31 // pred_check
        %p1830 = pneg %p100
      $region34: #{vae_forward.11} parent=31 // pred_check_branch
        %1832 = sbr.rel (%p1830) target = $region36
      $region35: #{vae_forward.11} parent=31 // pred_region
        %s1833 = smul.u32 98, %s14
      $region36: #{vae_forward.11} parent=31 // pred_fallthru
        _
    $region32: #{vae_forward.11} parent=5 // pred_fallthru
      _
    %p1834 = scmp.le.s32.totalorder 2, %s9
    // Predicated region
    $region37: #{vae_forward.11} parent=5 // pred_check
      %p1835 = pneg %p1834
    $region38: #{vae_forward.11} parent=5 // pred_check_branch
      %1837 = sbr.rel (%p1835) target = $region40
    $region39: #{vae_forward.11} parent=5 // pred_region
      %s1838 = ssub.s32 %s9, 2
      // Predicated region
      $region41: #{vae_forward.11} parent=39 // pred_check
        %p1839 = pneg %p106
      $region42: #{vae_forward.11} parent=39 // pred_check_branch
        %1841 = sbr.rel (%p1839) target = $region44
      $region43: #{vae_forward.11} parent=39 // pred_region
        %s1842 = smul.u32 98, %s15
        %p1843 = scmp.lt.s32.totalorder %s1842, 195
        %s1844 = scalar_select %p1843, %s1842, 195
        %s1845 = smul.addr %s1844, 8
        %s1846 = scalar_lea.vmem %s3, %s1845
      $region44: #{vae_forward.11} parent=39 // pred_fallthru
        _
    $region40: #{vae_forward.11} parent=5 // pred_fallthru
      _
  $region6: #{vae_forward.11} parent=0 // loop_footer
    %s13 = sadd.s32 1, %s9
  $region7: #{vae_forward.11} parent=0 // loop_footer_branch
    %8 = sbr.rel target = $region3
  $region8: #{vae_forward.11} parent=0 // loop_exit
    _

</llo_original>
